<compile_context>
chip_gen: v7x
topology: tpu7x:2x2x1
jax: 0.10.0
libtpu: 0.0.40
codegen_flags: <defaults>
</compile_context>

<pallas_src>
import functools
import math

import jax
import jax.numpy as jnp
from jax.experimental import pallas as pl
from jax.experimental.pallas import tpu as pltpu  # noqa: F401  (kept for parity)

OBS_DIM = 66          # hard-coded in the torch forward (self.obs_dim = 66)
EMBED_DIM = 32        # config['transformer']['embed_dim']
HIDDEN = 32           # config['transformer']['hidden_size']
NUM_BLOCKS = 2
NUM_HEADS = 2
HEAD_DIM = EMBED_DIM // NUM_HEADS
ACTION_SIZE = 12
MAX_SEQ = 64
GTRXL_BIAS = 2.0      # GRU-gate bias (GTrXL paper default > 0)
LN_EPS = 1e-5


# ----------------------------- fused Pallas kernel -------------------------

def _fused_forward_kernel(x_ref, mask_ref, fc_w_ref, fc_b_ref, pos_ref,
                          ln_ref, wqkv_ref, wo_ref, bo_ref, wmlp_ref, bmlp_ref,
                          g1_yw_ref, g1_xw_ref, g1_ug_ref,
                          g2_yw_ref, g2_xw_ref, g2_ug_ref,
                          pi_w1_ref, pi_b1_ref, pi_w2_ref, pi_b2_ref,
                          o_ref, *, B, S):
    E = EMBED_DIM
    HD = HEAD_DIM

    def dot(a, b):
        return jnp.dot(a, b, preferred_element_type=jnp.float32)

    def layernorm(x, g, b):
        mu = jnp.mean(x, axis=-1, keepdims=True)
        var = jnp.mean(jnp.square(x - mu), axis=-1, keepdims=True)
        return (x - mu) * jax.lax.rsqrt(var + LN_EPS) * g + b

    def gru_gate(x, y, w_y, w_x, w_ug):
        # GTrXL GRU gate: x = residual stream, y = new candidate output.
        yw = dot(y, w_y)                       # (N, 3E) = y @ [wr | wz | wg]
        xw = dot(x, w_x)                       # (N, 2E) = x @ [ur | uz]
        r = jax.nn.sigmoid(yw[:, :E] + xw[:, :E])
        z = jax.nn.sigmoid(yw[:, E:2 * E] + xw[:, E:2 * E] - GTRXL_BIAS)
        g = jnp.tanh(yw[:, 2 * E:] + dot(r * x, w_ug))
        return (1.0 - z) * x + z * g

    # fc: Linear(66, E) + learned positional embedding
    h = dot(x_ref[...], fc_w_ref[...]) + fc_b_ref[...]          # (B*S, E)
    pos = pos_ref[...]                                          # (S, E)
    pos_full = jnp.concatenate([pos] * B, axis=0) if B > 1 else pos
    h = h + pos_full

    # additive key-mask bias over the sequence: (B, S)
    mask_bias = jnp.where(mask_ref[...] == 0,
                          jnp.float32(-1e20), jnp.float32(0.0))

    scale = 1.0 / math.sqrt(HD)
    for blk in range(NUM_BLOCKS):
        lnp = ln_ref[blk]                                       # (4, E)
        ln1_g, ln1_b = lnp[0:1, :], lnp[1:2, :]
        ln2_g, ln2_b = lnp[2:3, :], lnp[3:4, :]

        # ---- attention sub-layer (pre-LN), fused QKV projection -----------
        hn = layernorm(h, ln1_g, ln1_b)
        qkv = dot(hn, wqkv_ref[blk])                            # (B*S, 3E)

        rows = []
        for b in range(B):
            r0 = b * S
            mb = mask_bias[b:b + 1, :]                          # (1, S) keys
            heads = []
            for hh in range(NUM_HEADS):
                c0 = hh * HD
                q = qkv[r0:r0 + S, c0:c0 + HD]                  # (S, HD)
                k = qkv[r0:r0 + S, E + c0:E + c0 + HD]
                v = qkv[r0:r0 + S, 2 * E + c0:2 * E + c0 + HD]
                energy = jax.lax.dot_general(
                    q, k, (((1,), (1,)), ((), ())),
                    preferred_element_type=jnp.float32) * scale  # (S, S)
                energy = energy + mb
                energy = energy - jnp.max(energy, axis=-1, keepdims=True)
                p = jnp.exp(energy)
                p = p * pl.reciprocal(jnp.sum(p, axis=-1, keepdims=True),
                                      approx=True)
                heads.append(dot(p, v))                          # (S, HD)
            rows.append(jnp.concatenate(heads, axis=-1))         # (S, E)
        attn = jnp.concatenate(rows, axis=0) if B > 1 else rows[0]  # (B*S, E)

        # out projection + ReLU (before gating, GTrXL), then GRU gate 1
        a = jnp.maximum(dot(attn, wo_ref[blk]) + bo_ref[blk], 0.0)
        h = gru_gate(h, a, g1_yw_ref[blk], g1_xw_ref[blk], g1_ug_ref[blk])

        # ---- position-wise MLP sub-layer (pre-LN), GRU gate 2 --------------
        hn2 = layernorm(h, ln2_g, ln2_b)
        m = jnp.maximum(dot(hn2, wmlp_ref[blk]) + bmlp_ref[blk], 0.0)
        h = gru_gate(h, m, g2_yw_ref[blk], g2_xw_ref[blk], g2_ug_ref[blk])

    # ---- policy head on the LAST timestep only (Tanh->Linear->Tanh->Linear)
    if B > 1:
        last = jnp.concatenate(
            [h[b * S + S - 1: b * S + S, :] for b in range(B)], axis=0)  # (B, E)
    else:
        last = h[S - 1:S, :]
    p1 = dot(jnp.tanh(last), pi_w1_ref[...]) + pi_b1_ref[...]
    logits = dot(jnp.tanh(p1), pi_w2_ref[...]) + pi_b2_ref[...]
    o_ref[...] = logits


# ------------------------------ model glue ---------------------------------

def ppo_transformer_forward(params, states, memory=None, memory_mask=None,
                            memory_indices=None):
    # states: (batch, seq * 66) -> policy logits of the last timestep: (batch, action)
    B = states.shape[0]
    S = states.shape[1] // OBS_DIM
    x = states.reshape(B * S, OBS_DIM)

    if memory_mask is None:
        memory_mask = jnp.ones((B, S), dtype=jnp.int32)
    memory_mask = memory_mask.astype(jnp.int32)

    pos = jax.lax.slice(params["pos"], (0, 0), (S, EMBED_DIM))   # (S, E)

    kern = functools.partial(_fused_forward_kernel, B=B, S=S)
    # Single invocation (grid=()): all operands are whole-array VMEM blocks,
    # only the (B, ACTION_SIZE) logits are written back to HBM.
    return pl.pallas_call(
        kern,
        out_shape=jax.ShapeDtypeStruct((B, ACTION_SIZE), jnp.float32),
    )(x, memory_mask,
      params["fc_w"], params["fc_b"], pos,
      params["ln"], params["wqkv"], params["wo"], params["bo"],
      params["w_mlp"], params["b_mlp"],
      params["g1_yw"], params["g1_xw"], params["g1_ug"],
      params["g2_yw"], params["g2_xw"], params["g2_ug"],
      params["pi_w1"], params["pi_b1"], params["pi_w2"], params["pi_b2"])


# ------------------------------ parameters ---------------------------------

def init_params(key):
    E = EMBED_DIM

    def dense(k, d_in, d_out, scale=None):
        if scale is None:
            scale = 1.0 / math.sqrt(d_in)
        return scale * jax.random.normal(k, (d_in, d_out), jnp.float32)

    keys = iter(jax.random.split(key, 64))

    def stack(make):
        return jnp.stack([make() for _ in range(NUM_BLOCKS)], axis=0)

    ln_one = jnp.stack([jnp.ones((E,), jnp.float32),    # ln1 gamma
                        jnp.zeros((E,), jnp.float32),   # ln1 beta
                        jnp.ones((E,), jnp.float32),    # ln2 gamma
                        jnp.zeros((E,), jnp.float32)])  # ln2 beta

    params = {
        "fc_w": dense(next(keys), OBS_DIM, E),
        "fc_b": jnp.zeros((1, E), jnp.float32),
        "pos": 0.02 * jax.random.normal(next(keys), (MAX_SEQ, E), jnp.float32),
        "pi_w1": dense(next(keys), E, HIDDEN),
        "pi_b1": jnp.zeros((1, HIDDEN), jnp.float32),
        "pi_w2": 0.01 * jax.random.normal(next(keys), (HIDDEN, ACTION_SIZE),
                                          jnp.float32),
        "pi_b2": jnp.zeros((1, ACTION_SIZE), jnp.float32),
        # per-block params stacked on a leading NUM_BLOCKS axis
        "ln": jnp.tile(ln_one[None], (NUM_BLOCKS, 1, 1)),          # (NB, 4, E)
        "wqkv": stack(lambda: dense(next(keys), E, 3 * E)),        # [wq|wk|wv]
        "wo": stack(lambda: dense(next(keys), E, E)),
        "bo": jnp.zeros((NUM_BLOCKS, 1, E), jnp.float32),
        "w_mlp": stack(lambda: dense(next(keys), E, E)),
        "b_mlp": jnp.zeros((NUM_BLOCKS, 1, E), jnp.float32),
        # GRU gates: packed as [wr|wz|wg], [ur|uz], ug
        "g1_yw": stack(lambda: dense(next(keys), E, 3 * E)),
        "g1_xw": stack(lambda: dense(next(keys), E, 2 * E)),
        "g1_ug": stack(lambda: dense(next(keys), E, E)),
        "g2_yw": stack(lambda: dense(next(keys), E, 3 * E)),
        "g2_xw": stack(lambda: dense(next(keys), E, 2 * E)),
        "g2_ug": stack(lambda: dense(next(keys), E, E)),
    }
    return params


if __name__ == "__main__":
    key = jax.random.PRNGKey(0)
    pkey, skey = jax.random.split(key)
    params = init_params(pkey)

    B, S = 2, 8                               # batch=2, seq=8 -> states (2, 528)
    states = jax.random.normal(skey, (B, S * OBS_DIM), jnp.float32)

    policy = jax.jit(ppo_transformer_forward)(params, states)
    jax.block_until_ready(policy)
    assert policy.shape == (B, ACTION_SIZE)
    assert policy.dtype == jnp.float32
    assert bool(jnp.all(jnp.isfinite(policy)))
    print("KERNEL_OK")
</pallas_src>

<mosaic_0001>
module attributes {stable_mosaic.version = 11 : i64} {
  func.func @_fused_forward_kernel(%arg0: memref<16x66xf32, #tpu.memory_space<vmem>>, %arg1: memref<2x8xi32, #tpu.memory_space<vmem>>, %arg2: memref<66x32xf32, #tpu.memory_space<vmem>>, %arg3: memref<1x32xf32, #tpu.memory_space<vmem>>, %arg4: memref<8x32xf32, #tpu.memory_space<vmem>>, %arg5: memref<2x4x32xf32, #tpu.memory_space<vmem>>, %arg6: memref<2x32x96xf32, #tpu.memory_space<vmem>>, %arg7: memref<2x32x32xf32, #tpu.memory_space<vmem>>, %arg8: memref<2x1x32xf32, #tpu.memory_space<vmem>>, %arg9: memref<2x32x32xf32, #tpu.memory_space<vmem>>, %arg10: memref<2x1x32xf32, #tpu.memory_space<vmem>>, %arg11: memref<2x32x96xf32, #tpu.memory_space<vmem>>, %arg12: memref<2x32x64xf32, #tpu.memory_space<vmem>>, %arg13: memref<2x32x32xf32, #tpu.memory_space<vmem>>, %arg14: memref<2x32x96xf32, #tpu.memory_space<vmem>>, %arg15: memref<2x32x64xf32, #tpu.memory_space<vmem>>, %arg16: memref<2x32x32xf32, #tpu.memory_space<vmem>>, %arg17: memref<32x32xf32, #tpu.memory_space<vmem>>, %arg18: memref<1x32xf32, #tpu.memory_space<vmem>>, %arg19: memref<32x12xf32, #tpu.memory_space<vmem>>, %arg20: memref<1x12xf32, #tpu.memory_space<vmem>>, %arg21: memref<2x12xf32, #tpu.memory_space<vmem>>) attributes {dimension_semantics = [], scalar_prefetch = 0 : i64, scratch_operands = 0 : i64, tpu.core_type = #tpu.core_type<tc>} {
    %c0 = arith.constant 0 : index
    %c0_0 = arith.constant 0 : index
    %0 = vector.load %arg0[%c0, %c0_0] : memref<16x66xf32, #tpu.memory_space<vmem>>, vector<16x66xf32>
    %c0_1 = arith.constant 0 : index
    %c0_2 = arith.constant 0 : index
    %1 = vector.load %arg2[%c0_1, %c0_2] : memref<66x32xf32, #tpu.memory_space<vmem>>, vector<66x32xf32>
    %cst = arith.constant dense<0.000000e+00> : vector<16x32xf32>
    %2 = tpu.matmul %0, %1, %cst {dimension_numbers = #tpu.dot_dimension_numbers<[1], [0], [0], [1], [0, 0, 1, 1], [], []>} : vector<16x66xf32>, vector<66x32xf32>, vector<16x32xf32> -> vector<16x32xf32>
    %c0_3 = arith.constant 0 : index
    %c0_4 = arith.constant 0 : index
    %3 = vector.load %arg3[%c0_3, %c0_4] : memref<1x32xf32, #tpu.memory_space<vmem>>, vector<1x32xf32>
    %4 = vector.broadcast %3 : vector<1x32xf32> to vector<16x32xf32>
    %5 = arith.addf %2, %4 : vector<16x32xf32>
    %c0_5 = arith.constant 0 : index
    %c0_6 = arith.constant 0 : index
    %6 = vector.load %arg4[%c0_5, %c0_6] : memref<8x32xf32, #tpu.memory_space<vmem>>, vector<8x32xf32>
    %7 = tpu.concatenate %6, %6 in 0 : vector<8x32xf32>, vector<8x32xf32> -> vector<16x32xf32>
    %8 = arith.addf %5, %7 : vector<16x32xf32>
    %c0_7 = arith.constant 0 : index
    %c0_8 = arith.constant 0 : index
    %9 = vector.load %arg1[%c0_7, %c0_8] : memref<2x8xi32, #tpu.memory_space<vmem>>, vector<2x8xi32>
    %c0_i32 = arith.constant 0 : i32
    %10 = vector.broadcast %c0_i32 : i32 to vector<2x8xi32>
    %11 = arith.cmpi eq, %9, %10 : vector<2x8xi32>
    %cst_9 = arith.constant -1.000000e+20 : f32
    %cst_10 = arith.constant 0.000000e+00 : f32
    %12 = vector.broadcast %cst_9 : f32 to vector<2x8xf32>
    %13 = vector.broadcast %cst_10 : f32 to vector<2x8xf32>
    %14 = arith.select %11, %12, %13 : vector<2x8xi1>, vector<2x8xf32>
    %c0_11 = arith.constant 0 : index
    %c0_12 = arith.constant 0 : index
    %c0_13 = arith.constant 0 : index
    %15 = vector.load %arg5[%c0_11, %c0_12, %c0_13] : memref<2x4x32xf32, #tpu.memory_space<vmem>>, vector<1x4x32xf32>
    %16 = vector.shape_cast %15 : vector<1x4x32xf32> to vector<4x32xf32>
    %17 = vector.extract_strided_slice %16 {offsets = [0, 0], sizes = [1, 32], strides = [1, 1]} : vector<4x32xf32> to vector<1x32xf32>
    %18 = vector.extract_strided_slice %16 {offsets = [1, 0], sizes = [1, 32], strides = [1, 1]} : vector<4x32xf32> to vector<1x32xf32>
    %19 = vector.extract_strided_slice %16 {offsets = [2, 0], sizes = [1, 32], strides = [1, 1]} : vector<4x32xf32> to vector<1x32xf32>
    %20 = vector.extract_strided_slice %16 {offsets = [3, 0], sizes = [1, 32], strides = [1, 1]} : vector<4x32xf32> to vector<1x32xf32>
    %cst_14 = arith.constant dense<0.000000e+00> : vector<16xf32>
    %21 = vector.multi_reduction <add>, %8, %cst_14 [1] : vector<16x32xf32> to vector<16xf32>
    %22 = vector.shape_cast %21 : vector<16xf32> to vector<16x1xf32>
    %cst_15 = arith.constant 3.200000e+01 : f32
    %23 = vector.broadcast %cst_15 : f32 to vector<16x1xf32>
    %24 = arith.divf %22, %23 : vector<16x1xf32>
    %25 = vector.broadcast %24 : vector<16x1xf32> to vector<16x32xf32>
    %26 = arith.subf %8, %25 : vector<16x32xf32>
    %27 = arith.mulf %26, %26 : vector<16x32xf32>
    %cst_16 = arith.constant dense<0.000000e+00> : vector<16xf32>
    %28 = vector.multi_reduction <add>, %27, %cst_16 [1] : vector<16x32xf32> to vector<16xf32>
    %29 = vector.shape_cast %28 : vector<16xf32> to vector<16x1xf32>
    %cst_17 = arith.constant 3.200000e+01 : f32
    %30 = vector.broadcast %cst_17 : f32 to vector<16x1xf32>
    %31 = arith.divf %29, %30 : vector<16x1xf32>
    %32 = vector.broadcast %24 : vector<16x1xf32> to vector<16x32xf32>
    %33 = arith.subf %8, %32 : vector<16x32xf32>
    %cst_18 = arith.constant 9.99999974E-6 : f32
    %34 = vector.broadcast %cst_18 : f32 to vector<16x1xf32>
    %35 = arith.addf %31, %34 : vector<16x1xf32>
    %36 = math.rsqrt %35 : vector<16x1xf32>
    %37 = vector.broadcast %36 : vector<16x1xf32> to vector<16x32xf32>
    %38 = arith.mulf %33, %37 : vector<16x32xf32>
    %39 = vector.broadcast %17 : vector<1x32xf32> to vector<16x32xf32>
    %40 = arith.mulf %38, %39 : vector<16x32xf32>
    %41 = vector.broadcast %18 : vector<1x32xf32> to vector<16x32xf32>
    %42 = arith.addf %40, %41 : vector<16x32xf32>
    %c0_19 = arith.constant 0 : index
    %c0_20 = arith.constant 0 : index
    %c0_21 = arith.constant 0 : index
    %43 = vector.load %arg6[%c0_19, %c0_20, %c0_21] : memref<2x32x96xf32, #tpu.memory_space<vmem>>, vector<1x32x96xf32>
    %44 = vector.shape_cast %43 : vector<1x32x96xf32> to vector<32x96xf32>
    %cst_22 = arith.constant dense<0.000000e+00> : vector<16x96xf32>
    %45 = tpu.matmul %42, %44, %cst_22 {dimension_numbers = #tpu.dot_dimension_numbers<[1], [0], [0], [1], [0, 0, 1, 1], [], []>} : vector<16x32xf32>, vector<32x96xf32>, vector<16x96xf32> -> vector<16x96xf32>
    %46 = vector.extract_strided_slice %14 {offsets = [0, 0], sizes = [1, 8], strides = [1, 1]} : vector<2x8xf32> to vector<1x8xf32>
    %47 = vector.extract_strided_slice %45 {offsets = [0, 0], sizes = [8, 16], strides = [1, 1]} : vector<16x96xf32> to vector<8x16xf32>
    %48 = vector.extract_strided_slice %45 {offsets = [0, 32], sizes = [8, 16], strides = [1, 1]} : vector<16x96xf32> to vector<8x16xf32>
    %49 = vector.extract_strided_slice %45 {offsets = [0, 64], sizes = [8, 16], strides = [1, 1]} : vector<16x96xf32> to vector<8x16xf32>
    %cst_23 = arith.constant dense<0.000000e+00> : vector<8x8xf32>
    %50 = tpu.matmul %47, %48, %cst_23 {dimension_numbers = #tpu.dot_dimension_numbers<[1], [1], [0], [0], [0, 0, 1, 0], [], []>} : vector<8x16xf32>, vector<8x16xf32>, vector<8x8xf32> -> vector<8x8xf32>
    %cst_24 = arith.constant 2.500000e-01 : f32
    %51 = vector.broadcast %cst_24 : f32 to vector<8x8xf32>
    %52 = arith.mulf %50, %51 : vector<8x8xf32>
    %53 = vector.broadcast %46 : vector<1x8xf32> to vector<8x8xf32>
    %54 = arith.addf %52, %53 : vector<8x8xf32>
    %cst_25 = arith.constant dense<0xFF800000> : vector<8xf32>
    %55 = vector.multi_reduction <maximumf>, %54, %cst_25 [1] : vector<8x8xf32> to vector<8xf32>
    %56 = vector.shape_cast %55 : vector<8xf32> to vector<8x1xf32>
    %57 = vector.broadcast %56 : vector<8x1xf32> to vector<8x8xf32>
    %58 = arith.subf %54, %57 : vector<8x8xf32>
    %59 = math.exp %58 : vector<8x8xf32>
    %cst_26 = arith.constant dense<0.000000e+00> : vector<8xf32>
    %60 = vector.multi_reduction <add>, %59, %cst_26 [1] : vector<8x8xf32> to vector<8xf32>
    %61 = vector.shape_cast %60 : vector<8xf32> to vector<8x1xf32>
    %62 = tpu.reciprocal %61 {approx = true} : vector<8x1xf32> -> vector<8x1xf32>
    %63 = vector.broadcast %62 : vector<8x1xf32> to vector<8x8xf32>
    %64 = arith.mulf %59, %63 : vector<8x8xf32>
    %cst_27 = arith.constant dense<0.000000e+00> : vector<8x16xf32>
    %65 = tpu.matmul %64, %49, %cst_27 {dimension_numbers = #tpu.dot_dimension_numbers<[1], [0], [0], [1], [0, 0, 1, 1], [], []>} : vector<8x8xf32>, vector<8x16xf32>, vector<8x16xf32> -> vector<8x16xf32>
    %66 = vector.extract_strided_slice %45 {offsets = [0, 16], sizes = [8, 16], strides = [1, 1]} : vector<16x96xf32> to vector<8x16xf32>
    %67 = vector.extract_strided_slice %45 {offsets = [0, 48], sizes = [8, 16], strides = [1, 1]} : vector<16x96xf32> to vector<8x16xf32>
    %68 = vector.extract_strided_slice %45 {offsets = [0, 80], sizes = [8, 16], strides = [1, 1]} : vector<16x96xf32> to vector<8x16xf32>
    %cst_28 = arith.constant dense<0.000000e+00> : vector<8x8xf32>
    %69 = tpu.matmul %66, %67, %cst_28 {dimension_numbers = #tpu.dot_dimension_numbers<[1], [1], [0], [0], [0, 0, 1, 0], [], []>} : vector<8x16xf32>, vector<8x16xf32>, vector<8x8xf32> -> vector<8x8xf32>
    %cst_29 = arith.constant 2.500000e-01 : f32
    %70 = vector.broadcast %cst_29 : f32 to vector<8x8xf32>
    %71 = arith.mulf %69, %70 : vector<8x8xf32>
    %72 = vector.broadcast %46 : vector<1x8xf32> to vector<8x8xf32>
    %73 = arith.addf %71, %72 : vector<8x8xf32>
    %cst_30 = arith.constant dense<0xFF800000> : vector<8xf32>
    %74 = vector.multi_reduction <maximumf>, %73, %cst_30 [1] : vector<8x8xf32> to vector<8xf32>
    %75 = vector.shape_cast %74 : vector<8xf32> to vector<8x1xf32>
    %76 = vector.broadcast %75 : vector<8x1xf32> to vector<8x8xf32>
    %77 = arith.subf %73, %76 : vector<8x8xf32>
    %78 = math.exp %77 : vector<8x8xf32>
    %cst_31 = arith.constant dense<0.000000e+00> : vector<8xf32>
    %79 = vector.multi_reduction <add>, %78, %cst_31 [1] : vector<8x8xf32> to vector<8xf32>
    %80 = vector.shape_cast %79 : vector<8xf32> to vector<8x1xf32>
    %81 = tpu.reciprocal %80 {approx = true} : vector<8x1xf32> -> vector<8x1xf32>
    %82 = vector.broadcast %81 : vector<8x1xf32> to vector<8x8xf32>
    %83 = arith.mulf %78, %82 : vector<8x8xf32>
    %cst_32 = arith.constant dense<0.000000e+00> : vector<8x16xf32>
    %84 = tpu.matmul %83, %68, %cst_32 {dimension_numbers = #tpu.dot_dimension_numbers<[1], [0], [0], [1], [0, 0, 1, 1], [], []>} : vector<8x8xf32>, vector<8x16xf32>, vector<8x16xf32> -> vector<8x16xf32>
    %85 = tpu.concatenate %65, %84 in 1 : vector<8x16xf32>, vector<8x16xf32> -> vector<8x32xf32>
    %86 = vector.extract_strided_slice %14 {offsets = [1, 0], sizes = [1, 8], strides = [1, 1]} : vector<2x8xf32> to vector<1x8xf32>
    %87 = vector.extract_strided_slice %45 {offsets = [8, 0], sizes = [8, 16], strides = [1, 1]} : vector<16x96xf32> to vector<8x16xf32>
    %88 = vector.extract_strided_slice %45 {offsets = [8, 32], sizes = [8, 16], strides = [1, 1]} : vector<16x96xf32> to vector<8x16xf32>
    %89 = vector.extract_strided_slice %45 {offsets = [8, 64], sizes = [8, 16], strides = [1, 1]} : vector<16x96xf32> to vector<8x16xf32>
    %cst_33 = arith.constant dense<0.000000e+00> : vector<8x8xf32>
    %90 = tpu.matmul %87, %88, %cst_33 {dimension_numbers = #tpu.dot_dimension_numbers<[1], [1], [0], [0], [0, 0, 1, 0], [], []>} : vector<8x16xf32>, vector<8x16xf32>, vector<8x8xf32> -> vector<8x8xf32>
    %cst_34 = arith.constant 2.500000e-01 : f32
    %91 = vector.broadcast %cst_34 : f32 to vector<8x8xf32>
    %92 = arith.mulf %90, %91 : vector<8x8xf32>
    %93 = vector.broadcast %86 : vector<1x8xf32> to vector<8x8xf32>
    %94 = arith.addf %92, %93 : vector<8x8xf32>
    %cst_35 = arith.constant dense<0xFF800000> : vector<8xf32>
    %95 = vector.multi_reduction <maximumf>, %94, %cst_35 [1] : vector<8x8xf32> to vector<8xf32>
    %96 = vector.shape_cast %95 : vector<8xf32> to vector<8x1xf32>
    %97 = vector.broadcast %96 : vector<8x1xf32> to vector<8x8xf32>
    %98 = arith.subf %94, %97 : vector<8x8xf32>
    %99 = math.exp %98 : vector<8x8xf32>
    %cst_36 = arith.constant dense<0.000000e+00> : vector<8xf32>
    %100 = vector.multi_reduction <add>, %99, %cst_36 [1] : vector<8x8xf32> to vector<8xf32>
    %101 = vector.shape_cast %100 : vector<8xf32> to vector<8x1xf32>
    %102 = tpu.reciprocal %101 {approx = true} : vector<8x1xf32> -> vector<8x1xf32>
    %103 = vector.broadcast %102 : vector<8x1xf32> to vector<8x8xf32>
    %104 = arith.mulf %99, %103 : vector<8x8xf32>
    %cst_37 = arith.constant dense<0.000000e+00> : vector<8x16xf32>
    %105 = tpu.matmul %104, %89, %cst_37 {dimension_numbers = #tpu.dot_dimension_numbers<[1], [0], [0], [1], [0, 0, 1, 1], [], []>} : vector<8x8xf32>, vector<8x16xf32>, vector<8x16xf32> -> vector<8x16xf32>
    %106 = vector.extract_strided_slice %45 {offsets = [8, 16], sizes = [8, 16], strides = [1, 1]} : vector<16x96xf32> to vector<8x16xf32>
    %107 = vector.extract_strided_slice %45 {offsets = [8, 48], sizes = [8, 16], strides = [1, 1]} : vector<16x96xf32> to vector<8x16xf32>
    %108 = vector.extract_strided_slice %45 {offsets = [8, 80], sizes = [8, 16], strides = [1, 1]} : vector<16x96xf32> to vector<8x16xf32>
    %cst_38 = arith.constant dense<0.000000e+00> : vector<8x8xf32>
    %109 = tpu.matmul %106, %107, %cst_38 {dimension_numbers = #tpu.dot_dimension_numbers<[1], [1], [0], [0], [0, 0, 1, 0], [], []>} : vector<8x16xf32>, vector<8x16xf32>, vector<8x8xf32> -> vector<8x8xf32>
    %cst_39 = arith.constant 2.500000e-01 : f32
    %110 = vector.broadcast %cst_39 : f32 to vector<8x8xf32>
    %111 = arith.mulf %109, %110 : vector<8x8xf32>
    %112 = vector.broadcast %86 : vector<1x8xf32> to vector<8x8xf32>
    %113 = arith.addf %111, %112 : vector<8x8xf32>
    %cst_40 = arith.constant dense<0xFF800000> : vector<8xf32>
    %114 = vector.multi_reduction <maximumf>, %113, %cst_40 [1] : vector<8x8xf32> to vector<8xf32>
    %115 = vector.shape_cast %114 : vector<8xf32> to vector<8x1xf32>
    %116 = vector.broadcast %115 : vector<8x1xf32> to vector<8x8xf32>
    %117 = arith.subf %113, %116 : vector<8x8xf32>
    %118 = math.exp %117 : vector<8x8xf32>
    %cst_41 = arith.constant dense<0.000000e+00> : vector<8xf32>
    %119 = vector.multi_reduction <add>, %118, %cst_41 [1] : vector<8x8xf32> to vector<8xf32>
    %120 = vector.shape_cast %119 : vector<8xf32> to vector<8x1xf32>
    %121 = tpu.reciprocal %120 {approx = true} : vector<8x1xf32> -> vector<8x1xf32>
    %122 = vector.broadcast %121 : vector<8x1xf32> to vector<8x8xf32>
    %123 = arith.mulf %118, %122 : vector<8x8xf32>
    %cst_42 = arith.constant dense<0.000000e+00> : vector<8x16xf32>
    %124 = tpu.matmul %123, %108, %cst_42 {dimension_numbers = #tpu.dot_dimension_numbers<[1], [0], [0], [1], [0, 0, 1, 1], [], []>} : vector<8x8xf32>, vector<8x16xf32>, vector<8x16xf32> -> vector<8x16xf32>
    %125 = tpu.concatenate %105, %124 in 1 : vector<8x16xf32>, vector<8x16xf32> -> vector<8x32xf32>
    %126 = tpu.concatenate %85, %125 in 0 : vector<8x32xf32>, vector<8x32xf32> -> vector<16x32xf32>
    %c0_43 = arith.constant 0 : index
    %c0_44 = arith.constant 0 : index
    %c0_45 = arith.constant 0 : index
    %127 = vector.load %arg7[%c0_43, %c0_44, %c0_45] : memref<2x32x32xf32, #tpu.memory_space<vmem>>, vector<1x32x32xf32>
    %128 = vector.shape_cast %127 : vector<1x32x32xf32> to vector<32x32xf32>
    %cst_46 = arith.constant dense<0.000000e+00> : vector<16x32xf32>
    %129 = tpu.matmul %126, %128, %cst_46 {dimension_numbers = #tpu.dot_dimension_numbers<[1], [0], [0], [1], [0, 0, 1, 1], [], []>} : vector<16x32xf32>, vector<32x32xf32>, vector<16x32xf32> -> vector<16x32xf32>
    %c0_47 = arith.constant 0 : index
    %c0_48 = arith.constant 0 : index
    %c0_49 = arith.constant 0 : index
    %130 = vector.load %arg8[%c0_47, %c0_48, %c0_49] : memref<2x1x32xf32, #tpu.memory_space<vmem>>, vector<1x1x32xf32>
    %131 = vector.shape_cast %130 : vector<1x1x32xf32> to vector<1x32xf32>
    %132 = vector.broadcast %131 : vector<1x32xf32> to vector<16x32xf32>
    %133 = arith.addf %129, %132 : vector<16x32xf32>
    %cst_50 = arith.constant 0.000000e+00 : f32
    %134 = vector.broadcast %cst_50 : f32 to vector<16x32xf32>
    %135 = arith.maximumf %133, %134 : vector<16x32xf32>
    %c0_51 = arith.constant 0 : index
    %c0_52 = arith.constant 0 : index
    %c0_53 = arith.constant 0 : index
    %136 = vector.load %arg11[%c0_51, %c0_52, %c0_53] : memref<2x32x96xf32, #tpu.memory_space<vmem>>, vector<1x32x96xf32>
    %137 = vector.shape_cast %136 : vector<1x32x96xf32> to vector<32x96xf32>
    %c0_54 = arith.constant 0 : index
    %c0_55 = arith.constant 0 : index
    %c0_56 = arith.constant 0 : index
    %138 = vector.load %arg12[%c0_54, %c0_55, %c0_56] : memref<2x32x64xf32, #tpu.memory_space<vmem>>, vector<1x32x64xf32>
    %139 = vector.shape_cast %138 : vector<1x32x64xf32> to vector<32x64xf32>
    %c0_57 = arith.constant 0 : index
    %c0_58 = arith.constant 0 : index
    %c0_59 = arith.constant 0 : index
    %140 = vector.load %arg13[%c0_57, %c0_58, %c0_59] : memref<2x32x32xf32, #tpu.memory_space<vmem>>, vector<1x32x32xf32>
    %141 = vector.shape_cast %140 : vector<1x32x32xf32> to vector<32x32xf32>
    %cst_60 = arith.constant dense<0.000000e+00> : vector<16x96xf32>
    %142 = tpu.matmul %135, %137, %cst_60 {dimension_numbers = #tpu.dot_dimension_numbers<[1], [0], [0], [1], [0, 0, 1, 1], [], []>} : vector<16x32xf32>, vector<32x96xf32>, vector<16x96xf32> -> vector<16x96xf32>
    %cst_61 = arith.constant dense<0.000000e+00> : vector<16x64xf32>
    %143 = tpu.matmul %8, %139, %cst_61 {dimension_numbers = #tpu.dot_dimension_numbers<[1], [0], [0], [1], [0, 0, 1, 1], [], []>} : vector<16x32xf32>, vector<32x64xf32>, vector<16x64xf32> -> vector<16x64xf32>
    %144 = vector.extract_strided_slice %142 {offsets = [0, 0], sizes = [16, 32], strides = [1, 1]} : vector<16x96xf32> to vector<16x32xf32>
    %145 = vector.extract_strided_slice %143 {offsets = [0, 0], sizes = [16, 32], strides = [1, 1]} : vector<16x64xf32> to vector<16x32xf32>
    %146 = arith.addf %144, %145 : vector<16x32xf32>
    %147 = arith.negf %146 : vector<16x32xf32>
    %148 = math.exp %147 : vector<16x32xf32>
    %cst_62 = arith.constant 1.000000e+00 : f32
    %149 = vector.broadcast %cst_62 : f32 to vector<16x32xf32>
    %150 = arith.addf %149, %148 : vector<16x32xf32>
    %151 = arith.divf %149, %150 : vector<16x32xf32>
    %152 = vector.extract_strided_slice %142 {offsets = [0, 32], sizes = [16, 32], strides = [1, 1]} : vector<16x96xf32> to vector<16x32xf32>
    %153 = vector.extract_strided_slice %143 {offsets = [0, 32], sizes = [16, 32], strides = [1, 1]} : vector<16x64xf32> to vector<16x32xf32>
    %154 = arith.addf %152, %153 : vector<16x32xf32>
    %cst_63 = arith.constant 2.000000e+00 : f32
    %155 = vector.broadcast %cst_63 : f32 to vector<16x32xf32>
    %156 = arith.subf %154, %155 : vector<16x32xf32>
    %157 = arith.negf %156 : vector<16x32xf32>
    %158 = math.exp %157 : vector<16x32xf32>
    %cst_64 = arith.constant 1.000000e+00 : f32
    %159 = vector.broadcast %cst_64 : f32 to vector<16x32xf32>
    %160 = arith.addf %159, %158 : vector<16x32xf32>
    %161 = arith.divf %159, %160 : vector<16x32xf32>
    %162 = vector.extract_strided_slice %142 {offsets = [0, 64], sizes = [16, 32], strides = [1, 1]} : vector<16x96xf32> to vector<16x32xf32>
    %163 = arith.mulf %151, %8 : vector<16x32xf32>
    %cst_65 = arith.constant dense<0.000000e+00> : vector<16x32xf32>
    %164 = tpu.matmul %163, %141, %cst_65 {dimension_numbers = #tpu.dot_dimension_numbers<[1], [0], [0], [1], [0, 0, 1, 1], [], []>} : vector<16x32xf32>, vector<32x32xf32>, vector<16x32xf32> -> vector<16x32xf32>
    %165 = arith.addf %162, %164 : vector<16x32xf32>
    %166 = math.tanh %165 : vector<16x32xf32>
    %cst_66 = arith.constant 1.000000e+00 : f32
    %167 = vector.broadcast %cst_66 : f32 to vector<16x32xf32>
    %168 = arith.subf %167, %161 : vector<16x32xf32>
    %169 = arith.mulf %168, %8 : vector<16x32xf32>
    %170 = arith.mulf %161, %166 : vector<16x32xf32>
    %171 = arith.addf %169, %170 : vector<16x32xf32>
    %cst_67 = arith.constant dense<0.000000e+00> : vector<16xf32>
    %172 = vector.multi_reduction <add>, %171, %cst_67 [1] : vector<16x32xf32> to vector<16xf32>
    %173 = vector.shape_cast %172 : vector<16xf32> to vector<16x1xf32>
    %cst_68 = arith.constant 3.200000e+01 : f32
    %174 = vector.broadcast %cst_68 : f32 to vector<16x1xf32>
    %175 = arith.divf %173, %174 : vector<16x1xf32>
    %176 = vector.broadcast %175 : vector<16x1xf32> to vector<16x32xf32>
    %177 = arith.subf %171, %176 : vector<16x32xf32>
    %178 = arith.mulf %177, %177 : vector<16x32xf32>
    %cst_69 = arith.constant dense<0.000000e+00> : vector<16xf32>
    %179 = vector.multi_reduction <add>, %178, %cst_69 [1] : vector<16x32xf32> to vector<16xf32>
    %180 = vector.shape_cast %179 : vector<16xf32> to vector<16x1xf32>
    %cst_70 = arith.constant 3.200000e+01 : f32
    %181 = vector.broadcast %cst_70 : f32 to vector<16x1xf32>
    %182 = arith.divf %180, %181 : vector<16x1xf32>
    %183 = vector.broadcast %175 : vector<16x1xf32> to vector<16x32xf32>
    %184 = arith.subf %171, %183 : vector<16x32xf32>
    %cst_71 = arith.constant 9.99999974E-6 : f32
    %185 = vector.broadcast %cst_71 : f32 to vector<16x1xf32>
    %186 = arith.addf %182, %185 : vector<16x1xf32>
    %187 = math.rsqrt %186 : vector<16x1xf32>
    %188 = vector.broadcast %187 : vector<16x1xf32> to vector<16x32xf32>
    %189 = arith.mulf %184, %188 : vector<16x32xf32>
    %190 = vector.broadcast %19 : vector<1x32xf32> to vector<16x32xf32>
    %191 = arith.mulf %189, %190 : vector<16x32xf32>
    %192 = vector.broadcast %20 : vector<1x32xf32> to vector<16x32xf32>
    %193 = arith.addf %191, %192 : vector<16x32xf32>
    %c0_72 = arith.constant 0 : index
    %c0_73 = arith.constant 0 : index
    %c0_74 = arith.constant 0 : index
    %194 = vector.load %arg9[%c0_72, %c0_73, %c0_74] : memref<2x32x32xf32, #tpu.memory_space<vmem>>, vector<1x32x32xf32>
    %195 = vector.shape_cast %194 : vector<1x32x32xf32> to vector<32x32xf32>
    %cst_75 = arith.constant dense<0.000000e+00> : vector<16x32xf32>
    %196 = tpu.matmul %193, %195, %cst_75 {dimension_numbers = #tpu.dot_dimension_numbers<[1], [0], [0], [1], [0, 0, 1, 1], [], []>} : vector<16x32xf32>, vector<32x32xf32>, vector<16x32xf32> -> vector<16x32xf32>
    %c0_76 = arith.constant 0 : index
    %c0_77 = arith.constant 0 : index
    %c0_78 = arith.constant 0 : index
    %197 = vector.load %arg10[%c0_76, %c0_77, %c0_78] : memref<2x1x32xf32, #tpu.memory_space<vmem>>, vector<1x1x32xf32>
    %198 = vector.shape_cast %197 : vector<1x1x32xf32> to vector<1x32xf32>
    %199 = vector.broadcast %198 : vector<1x32xf32> to vector<16x32xf32>
    %200 = arith.addf %196, %199 : vector<16x32xf32>
    %cst_79 = arith.constant 0.000000e+00 : f32
    %201 = vector.broadcast %cst_79 : f32 to vector<16x32xf32>
    %202 = arith.maximumf %200, %201 : vector<16x32xf32>
    %c0_80 = arith.constant 0 : index
    %c0_81 = arith.constant 0 : index
    %c0_82 = arith.constant 0 : index
    %203 = vector.load %arg14[%c0_80, %c0_81, %c0_82] : memref<2x32x96xf32, #tpu.memory_space<vmem>>, vector<1x32x96xf32>
    %204 = vector.shape_cast %203 : vector<1x32x96xf32> to vector<32x96xf32>
    %c0_83 = arith.constant 0 : index
    %c0_84 = arith.constant 0 : index
    %c0_85 = arith.constant 0 : index
    %205 = vector.load %arg15[%c0_83, %c0_84, %c0_85] : memref<2x32x64xf32, #tpu.memory_space<vmem>>, vector<1x32x64xf32>
    %206 = vector.shape_cast %205 : vector<1x32x64xf32> to vector<32x64xf32>
    %c0_86 = arith.constant 0 : index
    %c0_87 = arith.constant 0 : index
    %c0_88 = arith.constant 0 : index
    %207 = vector.load %arg16[%c0_86, %c0_87, %c0_88] : memref<2x32x32xf32, #tpu.memory_space<vmem>>, vector<1x32x32xf32>
    %208 = vector.shape_cast %207 : vector<1x32x32xf32> to vector<32x32xf32>
    %cst_89 = arith.constant dense<0.000000e+00> : vector<16x96xf32>
    %209 = tpu.matmul %202, %204, %cst_89 {dimension_numbers = #tpu.dot_dimension_numbers<[1], [0], [0], [1], [0, 0, 1, 1], [], []>} : vector<16x32xf32>, vector<32x96xf32>, vector<16x96xf32> -> vector<16x96xf32>
    %cst_90 = arith.constant dense<0.000000e+00> : vector<16x64xf32>
    %210 = tpu.matmul %171, %206, %cst_90 {dimension_numbers = #tpu.dot_dimension_numbers<[1], [0], [0], [1], [0, 0, 1, 1], [], []>} : vector<16x32xf32>, vector<32x64xf32>, vector<16x64xf32> -> vector<16x64xf32>
    %211 = vector.extract_strided_slice %209 {offsets = [0, 0], sizes = [16, 32], strides = [1, 1]} : vector<16x96xf32> to vector<16x32xf32>
    %212 = vector.extract_strided_slice %210 {offsets = [0, 0], sizes = [16, 32], strides = [1, 1]} : vector<16x64xf32> to vector<16x32xf32>
    %213 = arith.addf %211, %212 : vector<16x32xf32>
    %214 = arith.negf %213 : vector<16x32xf32>
    %215 = math.exp %214 : vector<16x32xf32>
    %cst_91 = arith.constant 1.000000e+00 : f32
    %216 = vector.broadcast %cst_91 : f32 to vector<16x32xf32>
    %217 = arith.addf %216, %215 : vector<16x32xf32>
    %218 = arith.divf %216, %217 : vector<16x32xf32>
    %219 = vector.extract_strided_slice %209 {offsets = [0, 32], sizes = [16, 32], strides = [1, 1]} : vector<16x96xf32> to vector<16x32xf32>
    %220 = vector.extract_strided_slice %210 {offsets = [0, 32], sizes = [16, 32], strides = [1, 1]} : vector<16x64xf32> to vector<16x32xf32>
    %221 = arith.addf %219, %220 : vector<16x32xf32>
    %cst_92 = arith.constant 2.000000e+00 : f32
    %222 = vector.broadcast %cst_92 : f32 to vector<16x32xf32>
    %223 = arith.subf %221, %222 : vector<16x32xf32>
    %224 = arith.negf %223 : vector<16x32xf32>
    %225 = math.exp %224 : vector<16x32xf32>
    %cst_93 = arith.constant 1.000000e+00 : f32
    %226 = vector.broadcast %cst_93 : f32 to vector<16x32xf32>
    %227 = arith.addf %226, %225 : vector<16x32xf32>
    %228 = arith.divf %226, %227 : vector<16x32xf32>
    %229 = vector.extract_strided_slice %209 {offsets = [0, 64], sizes = [16, 32], strides = [1, 1]} : vector<16x96xf32> to vector<16x32xf32>
    %230 = arith.mulf %218, %171 : vector<16x32xf32>
    %cst_94 = arith.constant dense<0.000000e+00> : vector<16x32xf32>
    %231 = tpu.matmul %230, %208, %cst_94 {dimension_numbers = #tpu.dot_dimension_numbers<[1], [0], [0], [1], [0, 0, 1, 1], [], []>} : vector<16x32xf32>, vector<32x32xf32>, vector<16x32xf32> -> vector<16x32xf32>
    %232 = arith.addf %229, %231 : vector<16x32xf32>
    %233 = math.tanh %232 : vector<16x32xf32>
    %cst_95 = arith.constant 1.000000e+00 : f32
    %234 = vector.broadcast %cst_95 : f32 to vector<16x32xf32>
    %235 = arith.subf %234, %228 : vector<16x32xf32>
    %236 = arith.mulf %235, %171 : vector<16x32xf32>
    %237 = arith.mulf %228, %233 : vector<16x32xf32>
    %238 = arith.addf %236, %237 : vector<16x32xf32>
    %c1 = arith.constant 1 : index
    %c0_96 = arith.constant 0 : index
    %c0_97 = arith.constant 0 : index
    %239 = vector.load %arg5[%c1, %c0_96, %c0_97] : memref<2x4x32xf32, #tpu.memory_space<vmem>>, vector<1x4x32xf32>
    %240 = vector.shape_cast %239 : vector<1x4x32xf32> to vector<4x32xf32>
    %241 = vector.extract_strided_slice %240 {offsets = [0, 0], sizes = [1, 32], strides = [1, 1]} : vector<4x32xf32> to vector<1x32xf32>
    %242 = vector.extract_strided_slice %240 {offsets = [1, 0], sizes = [1, 32], strides = [1, 1]} : vector<4x32xf32> to vector<1x32xf32>
    %243 = vector.extract_strided_slice %240 {offsets = [2, 0], sizes = [1, 32], strides = [1, 1]} : vector<4x32xf32> to vector<1x32xf32>
    %244 = vector.extract_strided_slice %240 {offsets = [3, 0], sizes = [1, 32], strides = [1, 1]} : vector<4x32xf32> to vector<1x32xf32>
    %cst_98 = arith.constant dense<0.000000e+00> : vector<16xf32>
    %245 = vector.multi_reduction <add>, %238, %cst_98 [1] : vector<16x32xf32> to vector<16xf32>
    %246 = vector.shape_cast %245 : vector<16xf32> to vector<16x1xf32>
    %cst_99 = arith.constant 3.200000e+01 : f32
    %247 = vector.broadcast %cst_99 : f32 to vector<16x1xf32>
    %248 = arith.divf %246, %247 : vector<16x1xf32>
    %249 = vector.broadcast %248 : vector<16x1xf32> to vector<16x32xf32>
    %250 = arith.subf %238, %249 : vector<16x32xf32>
    %251 = arith.mulf %250, %250 : vector<16x32xf32>
    %cst_100 = arith.constant dense<0.000000e+00> : vector<16xf32>
    %252 = vector.multi_reduction <add>, %251, %cst_100 [1] : vector<16x32xf32> to vector<16xf32>
    %253 = vector.shape_cast %252 : vector<16xf32> to vector<16x1xf32>
    %cst_101 = arith.constant 3.200000e+01 : f32
    %254 = vector.broadcast %cst_101 : f32 to vector<16x1xf32>
    %255 = arith.divf %253, %254 : vector<16x1xf32>
    %256 = vector.broadcast %248 : vector<16x1xf32> to vector<16x32xf32>
    %257 = arith.subf %238, %256 : vector<16x32xf32>
    %cst_102 = arith.constant 9.99999974E-6 : f32
    %258 = vector.broadcast %cst_102 : f32 to vector<16x1xf32>
    %259 = arith.addf %255, %258 : vector<16x1xf32>
    %260 = math.rsqrt %259 : vector<16x1xf32>
    %261 = vector.broadcast %260 : vector<16x1xf32> to vector<16x32xf32>
    %262 = arith.mulf %257, %261 : vector<16x32xf32>
    %263 = vector.broadcast %241 : vector<1x32xf32> to vector<16x32xf32>
    %264 = arith.mulf %262, %263 : vector<16x32xf32>
    %265 = vector.broadcast %242 : vector<1x32xf32> to vector<16x32xf32>
    %266 = arith.addf %264, %265 : vector<16x32xf32>
    %c1_103 = arith.constant 1 : index
    %c0_104 = arith.constant 0 : index
    %c0_105 = arith.constant 0 : index
    %267 = vector.load %arg6[%c1_103, %c0_104, %c0_105] : memref<2x32x96xf32, #tpu.memory_space<vmem>>, vector<1x32x96xf32>
    %268 = vector.shape_cast %267 : vector<1x32x96xf32> to vector<32x96xf32>
    %cst_106 = arith.constant dense<0.000000e+00> : vector<16x96xf32>
    %269 = tpu.matmul %266, %268, %cst_106 {dimension_numbers = #tpu.dot_dimension_numbers<[1], [0], [0], [1], [0, 0, 1, 1], [], []>} : vector<16x32xf32>, vector<32x96xf32>, vector<16x96xf32> -> vector<16x96xf32>
    %270 = vector.extract_strided_slice %14 {offsets = [0, 0], sizes = [1, 8], strides = [1, 1]} : vector<2x8xf32> to vector<1x8xf32>
    %271 = vector.extract_strided_slice %269 {offsets = [0, 0], sizes = [8, 16], strides = [1, 1]} : vector<16x96xf32> to vector<8x16xf32>
    %272 = vector.extract_strided_slice %269 {offsets = [0, 32], sizes = [8, 16], strides = [1, 1]} : vector<16x96xf32> to vector<8x16xf32>
    %273 = vector.extract_strided_slice %269 {offsets = [0, 64], sizes = [8, 16], strides = [1, 1]} : vector<16x96xf32> to vector<8x16xf32>
    %cst_107 = arith.constant dense<0.000000e+00> : vector<8x8xf32>
    %274 = tpu.matmul %271, %272, %cst_107 {dimension_numbers = #tpu.dot_dimension_numbers<[1], [1], [0], [0], [0, 0, 1, 0], [], []>} : vector<8x16xf32>, vector<8x16xf32>, vector<8x8xf32> -> vector<8x8xf32>
    %cst_108 = arith.constant 2.500000e-01 : f32
    %275 = vector.broadcast %cst_108 : f32 to vector<8x8xf32>
    %276 = arith.mulf %274, %275 : vector<8x8xf32>
    %277 = vector.broadcast %270 : vector<1x8xf32> to vector<8x8xf32>
    %278 = arith.addf %276, %277 : vector<8x8xf32>
    %cst_109 = arith.constant dense<0xFF800000> : vector<8xf32>
    %279 = vector.multi_reduction <maximumf>, %278, %cst_109 [1] : vector<8x8xf32> to vector<8xf32>
    %280 = vector.shape_cast %279 : vector<8xf32> to vector<8x1xf32>
    %281 = vector.broadcast %280 : vector<8x1xf32> to vector<8x8xf32>
    %282 = arith.subf %278, %281 : vector<8x8xf32>
    %283 = math.exp %282 : vector<8x8xf32>
    %cst_110 = arith.constant dense<0.000000e+00> : vector<8xf32>
    %284 = vector.multi_reduction <add>, %283, %cst_110 [1] : vector<8x8xf32> to vector<8xf32>
    %285 = vector.shape_cast %284 : vector<8xf32> to vector<8x1xf32>
    %286 = tpu.reciprocal %285 {approx = true} : vector<8x1xf32> -> vector<8x1xf32>
    %287 = vector.broadcast %286 : vector<8x1xf32> to vector<8x8xf32>
    %288 = arith.mulf %283, %287 : vector<8x8xf32>
    %cst_111 = arith.constant dense<0.000000e+00> : vector<8x16xf32>
    %289 = tpu.matmul %288, %273, %cst_111 {dimension_numbers = #tpu.dot_dimension_numbers<[1], [0], [0], [1], [0, 0, 1, 1], [], []>} : vector<8x8xf32>, vector<8x16xf32>, vector<8x16xf32> -> vector<8x16xf32>
    %290 = vector.extract_strided_slice %269 {offsets = [0, 16], sizes = [8, 16], strides = [1, 1]} : vector<16x96xf32> to vector<8x16xf32>
    %291 = vector.extract_strided_slice %269 {offsets = [0, 48], sizes = [8, 16], strides = [1, 1]} : vector<16x96xf32> to vector<8x16xf32>
    %292 = vector.extract_strided_slice %269 {offsets = [0, 80], sizes = [8, 16], strides = [1, 1]} : vector<16x96xf32> to vector<8x16xf32>
    %cst_112 = arith.constant dense<0.000000e+00> : vector<8x8xf32>
    %293 = tpu.matmul %290, %291, %cst_112 {dimension_numbers = #tpu.dot_dimension_numbers<[1], [1], [0], [0], [0, 0, 1, 0], [], []>} : vector<8x16xf32>, vector<8x16xf32>, vector<8x8xf32> -> vector<8x8xf32>
    %cst_113 = arith.constant 2.500000e-01 : f32
    %294 = vector.broadcast %cst_113 : f32 to vector<8x8xf32>
    %295 = arith.mulf %293, %294 : vector<8x8xf32>
    %296 = vector.broadcast %270 : vector<1x8xf32> to vector<8x8xf32>
    %297 = arith.addf %295, %296 : vector<8x8xf32>
    %cst_114 = arith.constant dense<0xFF800000> : vector<8xf32>
    %298 = vector.multi_reduction <maximumf>, %297, %cst_114 [1] : vector<8x8xf32> to vector<8xf32>
    %299 = vector.shape_cast %298 : vector<8xf32> to vector<8x1xf32>
    %300 = vector.broadcast %299 : vector<8x1xf32> to vector<8x8xf32>
    %301 = arith.subf %297, %300 : vector<8x8xf32>
    %302 = math.exp %301 : vector<8x8xf32>
    %cst_115 = arith.constant dense<0.000000e+00> : vector<8xf32>
    %303 = vector.multi_reduction <add>, %302, %cst_115 [1] : vector<8x8xf32> to vector<8xf32>
    %304 = vector.shape_cast %303 : vector<8xf32> to vector<8x1xf32>
    %305 = tpu.reciprocal %304 {approx = true} : vector<8x1xf32> -> vector<8x1xf32>
    %306 = vector.broadcast %305 : vector<8x1xf32> to vector<8x8xf32>
    %307 = arith.mulf %302, %306 : vector<8x8xf32>
    %cst_116 = arith.constant dense<0.000000e+00> : vector<8x16xf32>
    %308 = tpu.matmul %307, %292, %cst_116 {dimension_numbers = #tpu.dot_dimension_numbers<[1], [0], [0], [1], [0, 0, 1, 1], [], []>} : vector<8x8xf32>, vector<8x16xf32>, vector<8x16xf32> -> vector<8x16xf32>
    %309 = tpu.concatenate %289, %308 in 1 : vector<8x16xf32>, vector<8x16xf32> -> vector<8x32xf32>
    %310 = vector.extract_strided_slice %14 {offsets = [1, 0], sizes = [1, 8], strides = [1, 1]} : vector<2x8xf32> to vector<1x8xf32>
    %311 = vector.extract_strided_slice %269 {offsets = [8, 0], sizes = [8, 16], strides = [1, 1]} : vector<16x96xf32> to vector<8x16xf32>
    %312 = vector.extract_strided_slice %269 {offsets = [8, 32], sizes = [8, 16], strides = [1, 1]} : vector<16x96xf32> to vector<8x16xf32>
    %313 = vector.extract_strided_slice %269 {offsets = [8, 64], sizes = [8, 16], strides = [1, 1]} : vector<16x96xf32> to vector<8x16xf32>
    %cst_117 = arith.constant dense<0.000000e+00> : vector<8x8xf32>
    %314 = tpu.matmul %311, %312, %cst_117 {dimension_numbers = #tpu.dot_dimension_numbers<[1], [1], [0], [0], [0, 0, 1, 0], [], []>} : vector<8x16xf32>, vector<8x16xf32>, vector<8x8xf32> -> vector<8x8xf32>
    %cst_118 = arith.constant 2.500000e-01 : f32
    %315 = vector.broadcast %cst_118 : f32 to vector<8x8xf32>
    %316 = arith.mulf %314, %315 : vector<8x8xf32>
    %317 = vector.broadcast %310 : vector<1x8xf32> to vector<8x8xf32>
    %318 = arith.addf %316, %317 : vector<8x8xf32>
    %cst_119 = arith.constant dense<0xFF800000> : vector<8xf32>
    %319 = vector.multi_reduction <maximumf>, %318, %cst_119 [1] : vector<8x8xf32> to vector<8xf32>
    %320 = vector.shape_cast %319 : vector<8xf32> to vector<8x1xf32>
    %321 = vector.broadcast %320 : vector<8x1xf32> to vector<8x8xf32>
    %322 = arith.subf %318, %321 : vector<8x8xf32>
    %323 = math.exp %322 : vector<8x8xf32>
    %cst_120 = arith.constant dense<0.000000e+00> : vector<8xf32>
    %324 = vector.multi_reduction <add>, %323, %cst_120 [1] : vector<8x8xf32> to vector<8xf32>
    %325 = vector.shape_cast %324 : vector<8xf32> to vector<8x1xf32>
    %326 = tpu.reciprocal %325 {approx = true} : vector<8x1xf32> -> vector<8x1xf32>
    %327 = vector.broadcast %326 : vector<8x1xf32> to vector<8x8xf32>
    %328 = arith.mulf %323, %327 : vector<8x8xf32>
    %cst_121 = arith.constant dense<0.000000e+00> : vector<8x16xf32>
    %329 = tpu.matmul %328, %313, %cst_121 {dimension_numbers = #tpu.dot_dimension_numbers<[1], [0], [0], [1], [0, 0, 1, 1], [], []>} : vector<8x8xf32>, vector<8x16xf32>, vector<8x16xf32> -> vector<8x16xf32>
    %330 = vector.extract_strided_slice %269 {offsets = [8, 16], sizes = [8, 16], strides = [1, 1]} : vector<16x96xf32> to vector<8x16xf32>
    %331 = vector.extract_strided_slice %269 {offsets = [8, 48], sizes = [8, 16], strides = [1, 1]} : vector<16x96xf32> to vector<8x16xf32>
    %332 = vector.extract_strided_slice %269 {offsets = [8, 80], sizes = [8, 16], strides = [1, 1]} : vector<16x96xf32> to vector<8x16xf32>
    %cst_122 = arith.constant dense<0.000000e+00> : vector<8x8xf32>
    %333 = tpu.matmul %330, %331, %cst_122 {dimension_numbers = #tpu.dot_dimension_numbers<[1], [1], [0], [0], [0, 0, 1, 0], [], []>} : vector<8x16xf32>, vector<8x16xf32>, vector<8x8xf32> -> vector<8x8xf32>
    %cst_123 = arith.constant 2.500000e-01 : f32
    %334 = vector.broadcast %cst_123 : f32 to vector<8x8xf32>
    %335 = arith.mulf %333, %334 : vector<8x8xf32>
    %336 = vector.broadcast %310 : vector<1x8xf32> to vector<8x8xf32>
    %337 = arith.addf %335, %336 : vector<8x8xf32>
    %cst_124 = arith.constant dense<0xFF800000> : vector<8xf32>
    %338 = vector.multi_reduction <maximumf>, %337, %cst_124 [1] : vector<8x8xf32> to vector<8xf32>
    %339 = vector.shape_cast %338 : vector<8xf32> to vector<8x1xf32>
    %340 = vector.broadcast %339 : vector<8x1xf32> to vector<8x8xf32>
    %341 = arith.subf %337, %340 : vector<8x8xf32>
    %342 = math.exp %341 : vector<8x8xf32>
    %cst_125 = arith.constant dense<0.000000e+00> : vector<8xf32>
    %343 = vector.multi_reduction <add>, %342, %cst_125 [1] : vector<8x8xf32> to vector<8xf32>
    %344 = vector.shape_cast %343 : vector<8xf32> to vector<8x1xf32>
    %345 = tpu.reciprocal %344 {approx = true} : vector<8x1xf32> -> vector<8x1xf32>
    %346 = vector.broadcast %345 : vector<8x1xf32> to vector<8x8xf32>
    %347 = arith.mulf %342, %346 : vector<8x8xf32>
    %cst_126 = arith.constant dense<0.000000e+00> : vector<8x16xf32>
    %348 = tpu.matmul %347, %332, %cst_126 {dimension_numbers = #tpu.dot_dimension_numbers<[1], [0], [0], [1], [0, 0, 1, 1], [], []>} : vector<8x8xf32>, vector<8x16xf32>, vector<8x16xf32> -> vector<8x16xf32>
    %349 = tpu.concatenate %329, %348 in 1 : vector<8x16xf32>, vector<8x16xf32> -> vector<8x32xf32>
    %350 = tpu.concatenate %309, %349 in 0 : vector<8x32xf32>, vector<8x32xf32> -> vector<16x32xf32>
    %c1_127 = arith.constant 1 : index
    %c0_128 = arith.constant 0 : index
    %c0_129 = arith.constant 0 : index
    %351 = vector.load %arg7[%c1_127, %c0_128, %c0_129] : memref<2x32x32xf32, #tpu.memory_space<vmem>>, vector<1x32x32xf32>
    %352 = vector.shape_cast %351 : vector<1x32x32xf32> to vector<32x32xf32>
    %cst_130 = arith.constant dense<0.000000e+00> : vector<16x32xf32>
    %353 = tpu.matmul %350, %352, %cst_130 {dimension_numbers = #tpu.dot_dimension_numbers<[1], [0], [0], [1], [0, 0, 1, 1], [], []>} : vector<16x32xf32>, vector<32x32xf32>, vector<16x32xf32> -> vector<16x32xf32>
    %c1_131 = arith.constant 1 : index
    %c0_132 = arith.constant 0 : index
    %c0_133 = arith.constant 0 : index
    %354 = vector.load %arg8[%c1_131, %c0_132, %c0_133] : memref<2x1x32xf32, #tpu.memory_space<vmem>>, vector<1x1x32xf32>
    %355 = vector.shape_cast %354 : vector<1x1x32xf32> to vector<1x32xf32>
    %356 = vector.broadcast %355 : vector<1x32xf32> to vector<16x32xf32>
    %357 = arith.addf %353, %356 : vector<16x32xf32>
    %cst_134 = arith.constant 0.000000e+00 : f32
    %358 = vector.broadcast %cst_134 : f32 to vector<16x32xf32>
    %359 = arith.maximumf %357, %358 : vector<16x32xf32>
    %c1_135 = arith.constant 1 : index
    %c0_136 = arith.constant 0 : index
    %c0_137 = arith.constant 0 : index
    %360 = vector.load %arg11[%c1_135, %c0_136, %c0_137] : memref<2x32x96xf32, #tpu.memory_space<vmem>>, vector<1x32x96xf32>
    %361 = vector.shape_cast %360 : vector<1x32x96xf32> to vector<32x96xf32>
    %c1_138 = arith.constant 1 : index
    %c0_139 = arith.constant 0 : index
    %c0_140 = arith.constant 0 : index
    %362 = vector.load %arg12[%c1_138, %c0_139, %c0_140] : memref<2x32x64xf32, #tpu.memory_space<vmem>>, vector<1x32x64xf32>
    %363 = vector.shape_cast %362 : vector<1x32x64xf32> to vector<32x64xf32>
    %c1_141 = arith.constant 1 : index
    %c0_142 = arith.constant 0 : index
    %c0_143 = arith.constant 0 : index
    %364 = vector.load %arg13[%c1_141, %c0_142, %c0_143] : memref<2x32x32xf32, #tpu.memory_space<vmem>>, vector<1x32x32xf32>
    %365 = vector.shape_cast %364 : vector<1x32x32xf32> to vector<32x32xf32>
    %cst_144 = arith.constant dense<0.000000e+00> : vector<16x96xf32>
    %366 = tpu.matmul %359, %361, %cst_144 {dimension_numbers = #tpu.dot_dimension_numbers<[1], [0], [0], [1], [0, 0, 1, 1], [], []>} : vector<16x32xf32>, vector<32x96xf32>, vector<16x96xf32> -> vector<16x96xf32>
    %cst_145 = arith.constant dense<0.000000e+00> : vector<16x64xf32>
    %367 = tpu.matmul %238, %363, %cst_145 {dimension_numbers = #tpu.dot_dimension_numbers<[1], [0], [0], [1], [0, 0, 1, 1], [], []>} : vector<16x32xf32>, vector<32x64xf32>, vector<16x64xf32> -> vector<16x64xf32>
    %368 = vector.extract_strided_slice %366 {offsets = [0, 0], sizes = [16, 32], strides = [1, 1]} : vector<16x96xf32> to vector<16x32xf32>
    %369 = vector.extract_strided_slice %367 {offsets = [0, 0], sizes = [16, 32], strides = [1, 1]} : vector<16x64xf32> to vector<16x32xf32>
    %370 = arith.addf %368, %369 : vector<16x32xf32>
    %371 = arith.negf %370 : vector<16x32xf32>
    %372 = math.exp %371 : vector<16x32xf32>
    %cst_146 = arith.constant 1.000000e+00 : f32
    %373 = vector.broadcast %cst_146 : f32 to vector<16x32xf32>
    %374 = arith.addf %373, %372 : vector<16x32xf32>
    %375 = arith.divf %373, %374 : vector<16x32xf32>
    %376 = vector.extract_strided_slice %366 {offsets = [0, 32], sizes = [16, 32], strides = [1, 1]} : vector<16x96xf32> to vector<16x32xf32>
    %377 = vector.extract_strided_slice %367 {offsets = [0, 32], sizes = [16, 32], strides = [1, 1]} : vector<16x64xf32> to vector<16x32xf32>
    %378 = arith.addf %376, %377 : vector<16x32xf32>
    %cst_147 = arith.constant 2.000000e+00 : f32
    %379 = vector.broadcast %cst_147 : f32 to vector<16x32xf32>
    %380 = arith.subf %378, %379 : vector<16x32xf32>
    %381 = arith.negf %380 : vector<16x32xf32>
    %382 = math.exp %381 : vector<16x32xf32>
    %cst_148 = arith.constant 1.000000e+00 : f32
    %383 = vector.broadcast %cst_148 : f32 to vector<16x32xf32>
    %384 = arith.addf %383, %382 : vector<16x32xf32>
    %385 = arith.divf %383, %384 : vector<16x32xf32>
    %386 = vector.extract_strided_slice %366 {offsets = [0, 64], sizes = [16, 32], strides = [1, 1]} : vector<16x96xf32> to vector<16x32xf32>
    %387 = arith.mulf %375, %238 : vector<16x32xf32>
    %cst_149 = arith.constant dense<0.000000e+00> : vector<16x32xf32>
    %388 = tpu.matmul %387, %365, %cst_149 {dimension_numbers = #tpu.dot_dimension_numbers<[1], [0], [0], [1], [0, 0, 1, 1], [], []>} : vector<16x32xf32>, vector<32x32xf32>, vector<16x32xf32> -> vector<16x32xf32>
    %389 = arith.addf %386, %388 : vector<16x32xf32>
    %390 = math.tanh %389 : vector<16x32xf32>
    %cst_150 = arith.constant 1.000000e+00 : f32
    %391 = vector.broadcast %cst_150 : f32 to vector<16x32xf32>
    %392 = arith.subf %391, %385 : vector<16x32xf32>
    %393 = arith.mulf %392, %238 : vector<16x32xf32>
    %394 = arith.mulf %385, %390 : vector<16x32xf32>
    %395 = arith.addf %393, %394 : vector<16x32xf32>
    %cst_151 = arith.constant dense<0.000000e+00> : vector<16xf32>
    %396 = vector.multi_reduction <add>, %395, %cst_151 [1] : vector<16x32xf32> to vector<16xf32>
    %397 = vector.shape_cast %396 : vector<16xf32> to vector<16x1xf32>
    %cst_152 = arith.constant 3.200000e+01 : f32
    %398 = vector.broadcast %cst_152 : f32 to vector<16x1xf32>
    %399 = arith.divf %397, %398 : vector<16x1xf32>
    %400 = vector.broadcast %399 : vector<16x1xf32> to vector<16x32xf32>
    %401 = arith.subf %395, %400 : vector<16x32xf32>
    %402 = arith.mulf %401, %401 : vector<16x32xf32>
    %cst_153 = arith.constant dense<0.000000e+00> : vector<16xf32>
    %403 = vector.multi_reduction <add>, %402, %cst_153 [1] : vector<16x32xf32> to vector<16xf32>
    %404 = vector.shape_cast %403 : vector<16xf32> to vector<16x1xf32>
    %cst_154 = arith.constant 3.200000e+01 : f32
    %405 = vector.broadcast %cst_154 : f32 to vector<16x1xf32>
    %406 = arith.divf %404, %405 : vector<16x1xf32>
    %407 = vector.broadcast %399 : vector<16x1xf32> to vector<16x32xf32>
    %408 = arith.subf %395, %407 : vector<16x32xf32>
    %cst_155 = arith.constant 9.99999974E-6 : f32
    %409 = vector.broadcast %cst_155 : f32 to vector<16x1xf32>
    %410 = arith.addf %406, %409 : vector<16x1xf32>
    %411 = math.rsqrt %410 : vector<16x1xf32>
    %412 = vector.broadcast %411 : vector<16x1xf32> to vector<16x32xf32>
    %413 = arith.mulf %408, %412 : vector<16x32xf32>
    %414 = vector.broadcast %243 : vector<1x32xf32> to vector<16x32xf32>
    %415 = arith.mulf %413, %414 : vector<16x32xf32>
    %416 = vector.broadcast %244 : vector<1x32xf32> to vector<16x32xf32>
    %417 = arith.addf %415, %416 : vector<16x32xf32>
    %c1_156 = arith.constant 1 : index
    %c0_157 = arith.constant 0 : index
    %c0_158 = arith.constant 0 : index
    %418 = vector.load %arg9[%c1_156, %c0_157, %c0_158] : memref<2x32x32xf32, #tpu.memory_space<vmem>>, vector<1x32x32xf32>
    %419 = vector.shape_cast %418 : vector<1x32x32xf32> to vector<32x32xf32>
    %cst_159 = arith.constant dense<0.000000e+00> : vector<16x32xf32>
    %420 = tpu.matmul %417, %419, %cst_159 {dimension_numbers = #tpu.dot_dimension_numbers<[1], [0], [0], [1], [0, 0, 1, 1], [], []>} : vector<16x32xf32>, vector<32x32xf32>, vector<16x32xf32> -> vector<16x32xf32>
    %c1_160 = arith.constant 1 : index
    %c0_161 = arith.constant 0 : index
    %c0_162 = arith.constant 0 : index
    %421 = vector.load %arg10[%c1_160, %c0_161, %c0_162] : memref<2x1x32xf32, #tpu.memory_space<vmem>>, vector<1x1x32xf32>
    %422 = vector.shape_cast %421 : vector<1x1x32xf32> to vector<1x32xf32>
    %423 = vector.broadcast %422 : vector<1x32xf32> to vector<16x32xf32>
    %424 = arith.addf %420, %423 : vector<16x32xf32>
    %cst_163 = arith.constant 0.000000e+00 : f32
    %425 = vector.broadcast %cst_163 : f32 to vector<16x32xf32>
    %426 = arith.maximumf %424, %425 : vector<16x32xf32>
    %c1_164 = arith.constant 1 : index
    %c0_165 = arith.constant 0 : index
    %c0_166 = arith.constant 0 : index
    %427 = vector.load %arg14[%c1_164, %c0_165, %c0_166] : memref<2x32x96xf32, #tpu.memory_space<vmem>>, vector<1x32x96xf32>
    %428 = vector.shape_cast %427 : vector<1x32x96xf32> to vector<32x96xf32>
    %c1_167 = arith.constant 1 : index
    %c0_168 = arith.constant 0 : index
    %c0_169 = arith.constant 0 : index
    %429 = vector.load %arg15[%c1_167, %c0_168, %c0_169] : memref<2x32x64xf32, #tpu.memory_space<vmem>>, vector<1x32x64xf32>
    %430 = vector.shape_cast %429 : vector<1x32x64xf32> to vector<32x64xf32>
    %c1_170 = arith.constant 1 : index
    %c0_171 = arith.constant 0 : index
    %c0_172 = arith.constant 0 : index
    %431 = vector.load %arg16[%c1_170, %c0_171, %c0_172] : memref<2x32x32xf32, #tpu.memory_space<vmem>>, vector<1x32x32xf32>
    %432 = vector.shape_cast %431 : vector<1x32x32xf32> to vector<32x32xf32>
    %cst_173 = arith.constant dense<0.000000e+00> : vector<16x96xf32>
    %433 = tpu.matmul %426, %428, %cst_173 {dimension_numbers = #tpu.dot_dimension_numbers<[1], [0], [0], [1], [0, 0, 1, 1], [], []>} : vector<16x32xf32>, vector<32x96xf32>, vector<16x96xf32> -> vector<16x96xf32>
    %cst_174 = arith.constant dense<0.000000e+00> : vector<16x64xf32>
    %434 = tpu.matmul %395, %430, %cst_174 {dimension_numbers = #tpu.dot_dimension_numbers<[1], [0], [0], [1], [0, 0, 1, 1], [], []>} : vector<16x32xf32>, vector<32x64xf32>, vector<16x64xf32> -> vector<16x64xf32>
    %435 = vector.extract_strided_slice %433 {offsets = [0, 0], sizes = [16, 32], strides = [1, 1]} : vector<16x96xf32> to vector<16x32xf32>
    %436 = vector.extract_strided_slice %434 {offsets = [0, 0], sizes = [16, 32], strides = [1, 1]} : vector<16x64xf32> to vector<16x32xf32>
    %437 = arith.addf %435, %436 : vector<16x32xf32>
    %438 = arith.negf %437 : vector<16x32xf32>
    %439 = math.exp %438 : vector<16x32xf32>
    %cst_175 = arith.constant 1.000000e+00 : f32
    %440 = vector.broadcast %cst_175 : f32 to vector<16x32xf32>
    %441 = arith.addf %440, %439 : vector<16x32xf32>
    %442 = arith.divf %440, %441 : vector<16x32xf32>
    %443 = vector.extract_strided_slice %433 {offsets = [0, 32], sizes = [16, 32], strides = [1, 1]} : vector<16x96xf32> to vector<16x32xf32>
    %444 = vector.extract_strided_slice %434 {offsets = [0, 32], sizes = [16, 32], strides = [1, 1]} : vector<16x64xf32> to vector<16x32xf32>
    %445 = arith.addf %443, %444 : vector<16x32xf32>
    %cst_176 = arith.constant 2.000000e+00 : f32
    %446 = vector.broadcast %cst_176 : f32 to vector<16x32xf32>
    %447 = arith.subf %445, %446 : vector<16x32xf32>
    %448 = arith.negf %447 : vector<16x32xf32>
    %449 = math.exp %448 : vector<16x32xf32>
    %cst_177 = arith.constant 1.000000e+00 : f32
    %450 = vector.broadcast %cst_177 : f32 to vector<16x32xf32>
    %451 = arith.addf %450, %449 : vector<16x32xf32>
    %452 = arith.divf %450, %451 : vector<16x32xf32>
    %453 = vector.extract_strided_slice %433 {offsets = [0, 64], sizes = [16, 32], strides = [1, 1]} : vector<16x96xf32> to vector<16x32xf32>
    %454 = arith.mulf %442, %395 : vector<16x32xf32>
    %cst_178 = arith.constant dense<0.000000e+00> : vector<16x32xf32>
    %455 = tpu.matmul %454, %432, %cst_178 {dimension_numbers = #tpu.dot_dimension_numbers<[1], [0], [0], [1], [0, 0, 1, 1], [], []>} : vector<16x32xf32>, vector<32x32xf32>, vector<16x32xf32> -> vector<16x32xf32>
    %456 = arith.addf %453, %455 : vector<16x32xf32>
    %457 = math.tanh %456 : vector<16x32xf32>
    %cst_179 = arith.constant 1.000000e+00 : f32
    %458 = vector.broadcast %cst_179 : f32 to vector<16x32xf32>
    %459 = arith.subf %458, %452 : vector<16x32xf32>
    %460 = arith.mulf %459, %395 : vector<16x32xf32>
    %461 = arith.mulf %452, %457 : vector<16x32xf32>
    %462 = arith.addf %460, %461 : vector<16x32xf32>
    %463 = vector.extract_strided_slice %462 {offsets = [7, 0], sizes = [1, 32], strides = [1, 1]} : vector<16x32xf32> to vector<1x32xf32>
    %464 = vector.extract_strided_slice %462 {offsets = [15, 0], sizes = [1, 32], strides = [1, 1]} : vector<16x32xf32> to vector<1x32xf32>
    %465 = tpu.concatenate %463, %464 in 0 : vector<1x32xf32>, vector<1x32xf32> -> vector<2x32xf32>
    %466 = math.tanh %465 : vector<2x32xf32>
    %c0_180 = arith.constant 0 : index
    %c0_181 = arith.constant 0 : index
    %467 = vector.load %arg17[%c0_180, %c0_181] : memref<32x32xf32, #tpu.memory_space<vmem>>, vector<32x32xf32>
    %cst_182 = arith.constant dense<0.000000e+00> : vector<2x32xf32>
    %468 = tpu.matmul %466, %467, %cst_182 {dimension_numbers = #tpu.dot_dimension_numbers<[1], [0], [0], [1], [0, 0, 1, 1], [], []>} : vector<2x32xf32>, vector<32x32xf32>, vector<2x32xf32> -> vector<2x32xf32>
    %c0_183 = arith.constant 0 : index
    %c0_184 = arith.constant 0 : index
    %469 = vector.load %arg18[%c0_183, %c0_184] : memref<1x32xf32, #tpu.memory_space<vmem>>, vector<1x32xf32>
    %470 = vector.broadcast %469 : vector<1x32xf32> to vector<2x32xf32>
    %471 = arith.addf %468, %470 : vector<2x32xf32>
    %472 = math.tanh %471 : vector<2x32xf32>
    %c0_185 = arith.constant 0 : index
    %c0_186 = arith.constant 0 : index
    %473 = vector.load %arg19[%c0_185, %c0_186] : memref<32x12xf32, #tpu.memory_space<vmem>>, vector<32x12xf32>
    %cst_187 = arith.constant dense<0.000000e+00> : vector<2x12xf32>
    %474 = tpu.matmul %472, %473, %cst_187 {dimension_numbers = #tpu.dot_dimension_numbers<[1], [0], [0], [1], [0, 0, 1, 1], [], []>} : vector<2x32xf32>, vector<32x12xf32>, vector<2x12xf32> -> vector<2x12xf32>
    %c0_188 = arith.constant 0 : index
    %c0_189 = arith.constant 0 : index
    %475 = vector.load %arg20[%c0_188, %c0_189] : memref<1x12xf32, #tpu.memory_space<vmem>>, vector<1x12xf32>
    %476 = vector.broadcast %475 : vector<1x12xf32> to vector<2x12xf32>
    %477 = arith.addf %474, %476 : vector<2x12xf32>
    %c0_190 = arith.constant 0 : index
    %c0_191 = arith.constant 0 : index
    %478 = vector.load %arg21[%c0_190, %c0_191] : memref<2x12xf32, #tpu.memory_space<vmem>>, vector<2x12xf32>
    tpu.vector_store %arg21[%c0_190, %c0_191], %477 {strides = array<i32>} : memref<2x12xf32, #tpu.memory_space<vmem>>, vector<2x12xf32>,
    return
  }
}

</mosaic_0001>

<llo_original>
// kernel: ppo_transformer_forward.1
$region0: #{ppo_transformer_forward.1}
  #allocation0 [shape = 'u32[]', space=smem, size = 0x4, offset = 0x4, fixed_abs, tag = 'smem constant byte address 0x4 - core index']
  #allocation1 [shape = 'u32[144,128]{1,0:T(1,128)}', space=vmem, size = 0x12000, scoped, tag = 'internal scratch']
  %s0 = inlined_call_operand.vmem [shape: f32[16,66], index: 0, kind: input, shape index: {}]
  %s1 = inlined_call_operand.vmem [shape: s32[2,8], index: 1, kind: input, shape index: {}]
  %s2 = inlined_call_operand.vmem [shape: f32[66,32], index: 2, kind: input, shape index: {}]
  %s3 = inlined_call_operand.hbm [shape: f32[1,32], index: 3, kind: input, shape index: {}]
  %s4 = inlined_call_operand.vmem [shape: f32[8,32], index: 4, kind: input, shape index: {}]
  %s5 = inlined_call_operand.hbm [shape: f32[2,4,32], index: 5, kind: input, shape index: {}]
  %s6 = inlined_call_operand.vmem [shape: f32[2,32,96], index: 6, kind: input, shape index: {}]
  %s7 = inlined_call_operand.vmem [shape: f32[2,32,32], index: 7, kind: input, shape index: {}]
  %s8 = inlined_call_operand.hbm [shape: f32[2,1,32], index: 8, kind: input, shape index: {}]
  %s9 = inlined_call_operand.vmem [shape: f32[2,32,32], index: 9, kind: input, shape index: {}]
  %s10 = inlined_call_operand.hbm [shape: f32[2,1,32], index: 10, kind: input, shape index: {}]
  %s11 = inlined_call_operand.hbm [shape: f32[2,32,96], index: 11, kind: input, shape index: {}]
  %s12 = inlined_call_operand.hbm [shape: f32[2,32,64], index: 12, kind: input, shape index: {}]
  %s13 = inlined_call_operand.hbm [shape: f32[2,32,32], index: 13, kind: input, shape index: {}]
  %s14 = inlined_call_operand.vmem [shape: f32[2,32,96], index: 14, kind: input, shape index: {}]
  %s15 = inlined_call_operand.hbm [shape: f32[2,32,64], index: 15, kind: input, shape index: {}]
  %s16 = inlined_call_operand.hbm [shape: f32[2,32,32], index: 16, kind: input, shape index: {}]
  %s17 = inlined_call_operand.hbm [shape: f32[32,32], index: 17, kind: input, shape index: {}]
  %s18 = inlined_call_operand.hbm [shape: f32[1,32], index: 18, kind: input, shape index: {}]
  %s19 = inlined_call_operand.vmem [shape: f32[32,12], index: 19, kind: input, shape index: {}]
  %s20 = inlined_call_operand.hbm [shape: f32[1,12], index: 20, kind: input, shape index: {}]
  %s21 = inlined_call_operand.hbm [shape: f32[2,12], index: 21, kind: output, shape index: {}]
  %s22 = sld [smem:[#allocation0]]
  $region142: #{ppo_transformer_forward.1} parent=0
    _
  %s24 = ssub.s32 1, %s22
  %s25 = scalar_select 0, %s24, %s22
  $region1: #{ppo_transformer_forward.1} parent=0
    #allocation2 [shape = 'u8[512]{0}', space=vmem, size = 0x400, scoped, tag = 'input window, operand 3, single buffered']
    #allocation3 [shape = 's32[1]{0}', space=sflag, size = 0x4, scoped, tag = 'scoped memory for ppo_transformer_forward.1']
    #allocation4 [shape = 's32[1]{0}', space=sflag, size = 0x4, scoped, tag = 'scoped memory for ppo_transformer_forward.1']
    #allocation5 [shape = 'u8[4096]{0}', space=vmem, size = 0x1000, scoped, tag = 'input window, operand 5, single buffered']
    #allocation6 [shape = 's32[1]{0}', space=sflag, size = 0x4, scoped, tag = 'scoped memory for ppo_transformer_forward.1']
    #allocation7 [shape = 'u8[1024]{0}', space=vmem, size = 0x400, scoped, tag = 'input window, operand 8, single buffered']
    #allocation8 [shape = 'u8[1024]{0}', space=vmem, size = 0x400, scoped, tag = 'input window, operand 10, single buffered']
    #allocation9 [shape = 's32[1]{0}', space=sflag, size = 0x4, scoped, tag = 'scoped memory for ppo_transformer_forward.1']
    #allocation10 [shape = 'u8[32768]{0}', space=vmem, size = 0x8000, scoped, tag = 'input window, operand 11, single buffered']
    #allocation11 [shape = 'u8[32768]{0}', space=vmem, size = 0x8000, scoped, tag = 'input window, operand 12, single buffered']
    #allocation12 [shape = 's32[1]{0}', space=sflag, size = 0x4, scoped, tag = 'scoped memory for ppo_transformer_forward.1']
    #allocation13 [shape = 'u8[32768]{0}', space=vmem, size = 0x8000, scoped, tag = 'input window, operand 13, single buffered']
    #allocation14 [shape = 'u8[32768]{0}', space=vmem, size = 0x8000, scoped, tag = 'input window, operand 15, single buffered']
    #allocation15 [shape = 's32[1]{0}', space=sflag, size = 0x4, scoped, tag = 'scoped memory for ppo_transformer_forward.1']
    #allocation16 [shape = 'u8[32768]{0}', space=vmem, size = 0x8000, scoped, tag = 'input window, operand 16, single buffered']
    #allocation17 [shape = 'u8[16384]{0}', space=vmem, size = 0x4000, scoped, tag = 'input window, operand 17, single buffered']
    #allocation18 [shape = 's32[1]{0}', space=sflag, size = 0x4, scoped, tag = 'scoped memory for ppo_transformer_forward.1']
    #allocation19 [shape = 'u8[512]{0}', space=vmem, size = 0x400, scoped, tag = 'input window, operand 18, single buffered']
    #allocation20 [shape = 'u8[512]{0}', space=vmem, size = 0x400, scoped, tag = 'input window, operand 20, single buffered']
    #allocation21 [shape = 's32[1]{0}', space=sflag, size = 0x4, scoped, tag = 'scoped memory for ppo_transformer_forward.1']
    #allocation22 [shape = 'u8[1024]{0}', space=vmem, size = 0x400, scoped, tag = 'output window, operand 0, single buffered']
    %26 = vsyncpa [#allocation3], 0
    %27 = vsyncpa [#allocation6], 0
    %28 = vsyncpa [#allocation9], 0
    %29 = vsyncpa [#allocation12], 0
    %30 = vsyncpa [#allocation15], 0
    %31 = vsyncpa [#allocation18], 0
    %32 = vsyncpa [#allocation21], 0
    %33 = vsyncpa [#allocation4], 0
    // Predicated region
    $region2: #{ppo_transformer_forward.1} parent=1 // pred_check
      _
    $region3: #{ppo_transformer_forward.1} parent=1 // pred_check_branch
      %35 = sbr.rel (0) target = $region5
    $region4: #{ppo_transformer_forward.1} parent=1 // pred_region
      _
    $region5: #{ppo_transformer_forward.1} parent=1 // pred_fallthru
      _
    // Predicated region
    $region6: #{ppo_transformer_forward.1} parent=1 // pred_check
      _
    $region7: #{ppo_transformer_forward.1} parent=1 // pred_check_branch
      %37 = sbr.rel (0) target = $region9
    $region8: #{ppo_transformer_forward.1} parent=1 // pred_region
      _
    $region9: #{ppo_transformer_forward.1} parent=1 // pred_fallthru
      _
    // Predicated region
    $region10: #{ppo_transformer_forward.1} parent=1 // pred_check
      _
    $region11: #{ppo_transformer_forward.1} parent=1 // pred_check_branch
      %39 = sbr.rel (0) target = $region13
    $region12: #{ppo_transformer_forward.1} parent=1 // pred_region
      _
    $region13: #{ppo_transformer_forward.1} parent=1 // pred_fallthru
      _
    // Predicated region
    $region14: #{ppo_transformer_forward.1} parent=1 // pred_check
      _
    $region15: #{ppo_transformer_forward.1} parent=1 // pred_check_branch
      %41 = sbr.rel (0) target = $region17
    $region16: #{ppo_transformer_forward.1} parent=1 // pred_region
      %s43 = ssub.s32 16, 16
      %44 = vsyncadd [#allocation3], %s43
      %s46 = sshll.u32 [#allocation2], 4
      %s47 = int_to_ptr.vmem [resolvable:$true] %s46
      %49 = dma.hbm_to_vmem [thread:$0]  %s3, 16, %s47, [#allocation3]
    $region17: #{ppo_transformer_forward.1} parent=1 // pred_fallthru
      _
    // Predicated region
    $region18: #{ppo_transformer_forward.1} parent=1 // pred_check
      _
    $region19: #{ppo_transformer_forward.1} parent=1 // pred_check_branch
      %51 = sbr.rel (0) target = $region21
    $region20: #{ppo_transformer_forward.1} parent=1 // pred_region
      _
    $region21: #{ppo_transformer_forward.1} parent=1 // pred_fallthru
      _
    // Predicated region
    $region22: #{ppo_transformer_forward.1} parent=1 // pred_check
      _
    $region23: #{ppo_transformer_forward.1} parent=1 // pred_check_branch
      %53 = sbr.rel (0) target = $region25
    $region24: #{ppo_transformer_forward.1} parent=1 // pred_region
      %s55 = ssub.s32 128, 128
      %56 = vsyncadd [#allocation6], %s55
      %s57 = sshll.u32 [#allocation5], 4
      %s58 = int_to_ptr.vmem [resolvable:$true] %s57
      %63 = dma.hbm_to_vmem [thread:$0]  %s5, 128, %s58, [#allocation6], 64, 64, 4
    $region25: #{ppo_transformer_forward.1} parent=1 // pred_fallthru
      _
    // Predicated region
    $region26: #{ppo_transformer_forward.1} parent=1 // pred_check
      _
    $region27: #{ppo_transformer_forward.1} parent=1 // pred_check_branch
      %65 = sbr.rel (0) target = $region29
    $region28: #{ppo_transformer_forward.1} parent=1 // pred_region
      _
    $region29: #{ppo_transformer_forward.1} parent=1 // pred_fallthru
      _
    // Predicated region
    $region30: #{ppo_transformer_forward.1} parent=1 // pred_check
      _
    $region31: #{ppo_transformer_forward.1} parent=1 // pred_check_branch
      %67 = sbr.rel (0) target = $region33
    $region32: #{ppo_transformer_forward.1} parent=1 // pred_region
      _
    $region33: #{ppo_transformer_forward.1} parent=1 // pred_fallthru
      _
    // Predicated region
    $region34: #{ppo_transformer_forward.1} parent=1 // pred_check
      _
    $region35: #{ppo_transformer_forward.1} parent=1 // pred_check_branch
      %69 = sbr.rel (0) target = $region37
    $region36: #{ppo_transformer_forward.1} parent=1 // pred_region
      %s71 = ssub.s32 32, 32
      %72 = vsyncadd [#allocation6], %s71
      %s73 = sshll.u32 [#allocation7], 4
      %s74 = int_to_ptr.vmem [resolvable:$true] %s73
      %79 = dma.hbm_to_vmem [thread:$0]  %s8, 32, %s74, [#allocation6], 16, 16, 1
    $region37: #{ppo_transformer_forward.1} parent=1 // pred_fallthru
      _
    // Predicated region
    $region38: #{ppo_transformer_forward.1} parent=1 // pred_check
      _
    $region39: #{ppo_transformer_forward.1} parent=1 // pred_check_branch
      %81 = sbr.rel (0) target = $region41
    $region40: #{ppo_transformer_forward.1} parent=1 // pred_region
      _
    $region41: #{ppo_transformer_forward.1} parent=1 // pred_fallthru
      _
    // Predicated region
    $region42: #{ppo_transformer_forward.1} parent=1 // pred_check
      _
    $region43: #{ppo_transformer_forward.1} parent=1 // pred_check_branch
      %83 = sbr.rel (0) target = $region45
    $region44: #{ppo_transformer_forward.1} parent=1 // pred_region
      %s85 = ssub.s32 32, 32
      %86 = vsyncadd [#allocation9], %s85
      %s87 = sshll.u32 [#allocation8], 4
      %s88 = int_to_ptr.vmem [resolvable:$true] %s87
      %93 = dma.hbm_to_vmem [thread:$0]  %s10, 32, %s88, [#allocation9], 16, 16, 1
    $region45: #{ppo_transformer_forward.1} parent=1 // pred_fallthru
      _
    // Predicated region
    $region46: #{ppo_transformer_forward.1} parent=1 // pred_check
      _
    $region47: #{ppo_transformer_forward.1} parent=1 // pred_check_branch
      %95 = sbr.rel (0) target = $region49
    $region48: #{ppo_transformer_forward.1} parent=1 // pred_region
      %s97 = ssub.s32 1024, 1024
      %98 = vsyncadd [#allocation9], %s97
      %s99 = sshll.u32 [#allocation10], 4
      %s100 = int_to_ptr.vmem [resolvable:$true] %s99
      %105 = dma.hbm_to_vmem [thread:$0]  %s11, 1024, %s100, [#allocation9], 128, 128, 8
    $region49: #{ppo_transformer_forward.1} parent=1 // pred_fallthru
      _
    // Predicated region
    $region50: #{ppo_transformer_forward.1} parent=1 // pred_check
      _
    $region51: #{ppo_transformer_forward.1} parent=1 // pred_check_branch
      %107 = sbr.rel (0) target = $region53
    $region52: #{ppo_transformer_forward.1} parent=1 // pred_region
      %s109 = ssub.s32 1024, 1024
      %110 = vsyncadd [#allocation12], %s109
      %s111 = sshll.u32 [#allocation11], 4
      %s112 = int_to_ptr.vmem [resolvable:$true] %s111
      %117 = dma.hbm_to_vmem [thread:$0]  %s12, 1024, %s112, [#allocation12], 128, 128, 8
    $region53: #{ppo_transformer_forward.1} parent=1 // pred_fallthru
      _
    // Predicated region
    $region54: #{ppo_transformer_forward.1} parent=1 // pred_check
      _
    $region55: #{ppo_transformer_forward.1} parent=1 // pred_check_branch
      %119 = sbr.rel (0) target = $region57
    $region56: #{ppo_transformer_forward.1} parent=1 // pred_region
      %s121 = ssub.s32 1024, 1024
      %122 = vsyncadd [#allocation12], %s121
      %s123 = sshll.u32 [#allocation13], 4
      %s124 = int_to_ptr.vmem [resolvable:$true] %s123
      %129 = dma.hbm_to_vmem [thread:$0]  %s13, 1024, %s124, [#allocation12], 128, 128, 8
    $region57: #{ppo_transformer_forward.1} parent=1 // pred_fallthru
      _
    // Predicated region
    $region58: #{ppo_transformer_forward.1} parent=1 // pred_check
      _
    $region59: #{ppo_transformer_forward.1} parent=1 // pred_check_branch
      %131 = sbr.rel (0) target = $region61
    $region60: #{ppo_transformer_forward.1} parent=1 // pred_region
      _
    $region61: #{ppo_transformer_forward.1} parent=1 // pred_fallthru
      _
    // Predicated region
    $region62: #{ppo_transformer_forward.1} parent=1 // pred_check
      _
    $region63: #{ppo_transformer_forward.1} parent=1 // pred_check_branch
      %133 = sbr.rel (0) target = $region65
    $region64: #{ppo_transformer_forward.1} parent=1 // pred_region
      %s135 = ssub.s32 1024, 1024
      %136 = vsyncadd [#allocation15], %s135
      %s137 = sshll.u32 [#allocation14], 4
      %s138 = int_to_ptr.vmem [resolvable:$true] %s137
      %143 = dma.hbm_to_vmem [thread:$0]  %s15, 1024, %s138, [#allocation15], 128, 128, 8
    $region65: #{ppo_transformer_forward.1} parent=1 // pred_fallthru
      _
    // Predicated region
    $region66: #{ppo_transformer_forward.1} parent=1 // pred_check
      _
    $region67: #{ppo_transformer_forward.1} parent=1 // pred_check_branch
      %145 = sbr.rel (0) target = $region69
    $region68: #{ppo_transformer_forward.1} parent=1 // pred_region
      %s147 = ssub.s32 1024, 1024
      %148 = vsyncadd [#allocation15], %s147
      %s149 = sshll.u32 [#allocation16], 4
      %s150 = int_to_ptr.vmem [resolvable:$true] %s149
      %155 = dma.hbm_to_vmem [thread:$0]  %s16, 1024, %s150, [#allocation15], 128, 128, 8
    $region69: #{ppo_transformer_forward.1} parent=1 // pred_fallthru
      _
    // Predicated region
    $region70: #{ppo_transformer_forward.1} parent=1 // pred_check
      _
    $region71: #{ppo_transformer_forward.1} parent=1 // pred_check_branch
      %157 = sbr.rel (0) target = $region73
    $region72: #{ppo_transformer_forward.1} parent=1 // pred_region
      %s159 = ssub.s32 512, 512
      %160 = vsyncadd [#allocation18], %s159
      %s161 = sshll.u32 [#allocation17], 4
      %s162 = int_to_ptr.vmem [resolvable:$true] %s161
      %167 = dma.hbm_to_vmem [thread:$0]  %s17, 512, %s162, [#allocation18], 128, 128, 8
    $region73: #{ppo_transformer_forward.1} parent=1 // pred_fallthru
      _
    // Predicated region
    $region74: #{ppo_transformer_forward.1} parent=1 // pred_check
      _
    $region75: #{ppo_transformer_forward.1} parent=1 // pred_check_branch
      %169 = sbr.rel (0) target = $region77
    $region76: #{ppo_transformer_forward.1} parent=1 // pred_region
      %s171 = ssub.s32 16, 16
      %172 = vsyncadd [#allocation18], %s171
      %s174 = sshll.u32 [#allocation19], 4
      %s175 = int_to_ptr.vmem [resolvable:$true] %s174
      %177 = dma.hbm_to_vmem [thread:$0]  %s18, 16, %s175, [#allocation18]
    $region77: #{ppo_transformer_forward.1} parent=1 // pred_fallthru
      _
    // Predicated region
    $region78: #{ppo_transformer_forward.1} parent=1 // pred_check
      _
    $region79: #{ppo_transformer_forward.1} parent=1 // pred_check_branch
      %179 = sbr.rel (0) target = $region81
    $region80: #{ppo_transformer_forward.1} parent=1 // pred_region
      _
    $region81: #{ppo_transformer_forward.1} parent=1 // pred_fallthru
      _
    // Predicated region
    $region82: #{ppo_transformer_forward.1} parent=1 // pred_check
      _
    $region83: #{ppo_transformer_forward.1} parent=1 // pred_check_branch
      %181 = sbr.rel (0) target = $region85
    $region84: #{ppo_transformer_forward.1} parent=1 // pred_region
      %s183 = ssub.s32 16, 16
      %184 = vsyncadd [#allocation21], %s183
      %s186 = sshll.u32 [#allocation20], 4
      %s187 = int_to_ptr.vmem [resolvable:$true] %s186
      %189 = dma.hbm_to_vmem [thread:$0]  %s20, 16, %s187, [#allocation21]
    $region85: #{ppo_transformer_forward.1} parent=1 // pred_fallthru
      _
    // Predicated region
    $region86: #{ppo_transformer_forward.1} parent=1 // pred_check
      _
    $region87: #{ppo_transformer_forward.1} parent=1 // pred_check_branch
      %191 = sbr.rel (0) target = $region89
    $region88: #{ppo_transformer_forward.1} parent=1 // pred_region
      %192 = dma.done [#allocation3], 16
    $region89: #{ppo_transformer_forward.1} parent=1 // pred_fallthru
      _
    // Predicated region
    $region90: #{ppo_transformer_forward.1} parent=1 // pred_check
      _
    $region91: #{ppo_transformer_forward.1} parent=1 // pred_check_branch
      %194 = sbr.rel (0) target = $region93
    $region92: #{ppo_transformer_forward.1} parent=1 // pred_region
      %195 = dma.done [#allocation6], 128
    $region93: #{ppo_transformer_forward.1} parent=1 // pred_fallthru
      _
    // Predicated region
    $region94: #{ppo_transformer_forward.1} parent=1 // pred_check
      _
    $region95: #{ppo_transformer_forward.1} parent=1 // pred_check_branch
      %197 = sbr.rel (0) target = $region97
    $region96: #{ppo_transformer_forward.1} parent=1 // pred_region
      %198 = dma.done [#allocation6], 32
    $region97: #{ppo_transformer_forward.1} parent=1 // pred_fallthru
      _
    // Predicated region
    $region98: #{ppo_transformer_forward.1} parent=1 // pred_check
      _
    $region99: #{ppo_transformer_forward.1} parent=1 // pred_check_branch
      %200 = sbr.rel (0) target = $region101
    $region100: #{ppo_transformer_forward.1} parent=1 // pred_region
      %201 = dma.done [#allocation9], 32
    $region101: #{ppo_transformer_forward.1} parent=1 // pred_fallthru
      _
    // Predicated region
    $region102: #{ppo_transformer_forward.1} parent=1 // pred_check
      _
    $region103: #{ppo_transformer_forward.1} parent=1 // pred_check_branch
      %203 = sbr.rel (0) target = $region105
    $region104: #{ppo_transformer_forward.1} parent=1 // pred_region
      %204 = dma.done [#allocation9], 1024
    $region105: #{ppo_transformer_forward.1} parent=1 // pred_fallthru
      _
    // Predicated region
    $region106: #{ppo_transformer_forward.1} parent=1 // pred_check
      _
    $region107: #{ppo_transformer_forward.1} parent=1 // pred_check_branch
      %206 = sbr.rel (0) target = $region109
    $region108: #{ppo_transformer_forward.1} parent=1 // pred_region
      %207 = dma.done [#allocation12], 1024
    $region109: #{ppo_transformer_forward.1} parent=1 // pred_fallthru
      _
    // Predicated region
    $region110: #{ppo_transformer_forward.1} parent=1 // pred_check
      _
    $region111: #{ppo_transformer_forward.1} parent=1 // pred_check_branch
      %209 = sbr.rel (0) target = $region113
    $region112: #{ppo_transformer_forward.1} parent=1 // pred_region
      %210 = dma.done [#allocation12], 1024
    $region113: #{ppo_transformer_forward.1} parent=1 // pred_fallthru
      _
    // Predicated region
    $region114: #{ppo_transformer_forward.1} parent=1 // pred_check
      _
    $region115: #{ppo_transformer_forward.1} parent=1 // pred_check_branch
      %212 = sbr.rel (0) target = $region117
    $region116: #{ppo_transformer_forward.1} parent=1 // pred_region
      %213 = dma.done [#allocation15], 1024
    $region117: #{ppo_transformer_forward.1} parent=1 // pred_fallthru
      _
    // Predicated region
    $region118: #{ppo_transformer_forward.1} parent=1 // pred_check
      _
    $region119: #{ppo_transformer_forward.1} parent=1 // pred_check_branch
      %215 = sbr.rel (0) target = $region121
    $region120: #{ppo_transformer_forward.1} parent=1 // pred_region
      %216 = dma.done [#allocation15], 1024
    $region121: #{ppo_transformer_forward.1} parent=1 // pred_fallthru
      _
    // Predicated region
    $region122: #{ppo_transformer_forward.1} parent=1 // pred_check
      _
    $region123: #{ppo_transformer_forward.1} parent=1 // pred_check_branch
      %218 = sbr.rel (0) target = $region125
    $region124: #{ppo_transformer_forward.1} parent=1 // pred_region
      %219 = dma.done [#allocation18], 512
    $region125: #{ppo_transformer_forward.1} parent=1 // pred_fallthru
      _
    // Predicated region
    $region126: #{ppo_transformer_forward.1} parent=1 // pred_check
      _
    $region127: #{ppo_transformer_forward.1} parent=1 // pred_check_branch
      %221 = sbr.rel (0) target = $region129
    $region128: #{ppo_transformer_forward.1} parent=1 // pred_region
      %222 = dma.done [#allocation18], 16
    $region129: #{ppo_transformer_forward.1} parent=1 // pred_fallthru
      _
    // Predicated region
    $region130: #{ppo_transformer_forward.1} parent=1 // pred_check
      _
    $region131: #{ppo_transformer_forward.1} parent=1 // pred_check_branch
      %224 = sbr.rel (0) target = $region133
    $region132: #{ppo_transformer_forward.1} parent=1 // pred_region
      %225 = dma.done [#allocation21], 16
    $region133: #{ppo_transformer_forward.1} parent=1 // pred_fallthru
      _
    %v226 = vld [vmem:[%s0] sm:$0xff]
    %v227 = vld [vmem:[%s0 + $0x8] sm:$0xff]
    %v228 = vld [vmem:[%s2] sm:$0xff]
    %v229 = vld [vmem:[%s2 + $0x8] sm:$0xff]
    %v230 = vld [vmem:[%s2 + $0x10] sm:$0xff]
    %v231 = vld [vmem:[%s2 + $0x18] sm:$0xff]
    %v232 = vld [vmem:[%s2 + $0x20] sm:$0xff]
    %v233 = vld [vmem:[%s2 + $0x28] sm:$0xff]
    %v234 = vld [vmem:[%s2 + $0x30] sm:$0xff]
    %v235 = vld [vmem:[%s2 + $0x38] sm:$0xff]
    %v236 = vld [vmem:[%s2 + $0x40] sm:$0x3]
    %v237 = vld [vmem:[#allocation2] sm:$0x1]
    %v239 = vlaneseq
    %v240 = vshrl.u32 %v239, 7
    %v241 = vsub.s32 0, %v240
    %v242 = vrot.slane %v237, %v241
    %vm244 = vcmask 539648
    %v246 = vsel %vm244, %v226, 0
    %v249 = vsel %vm244, %v227, 0
    %vm251 = vcmask 1041408
    %v253 = vsel %vm251, %v236, 0
    %255 = vmatprep.subr.mxu0 0.0
    %256 = vmatpush1.msra.mxu0 %v228
    %257 = vmatprep.subr.mxu0 0.0
    %258 = vmatpush1.msra.mxu0 %v229
    %259 = vmatprep.subr.mxu0 0.0
    %260 = vmatpush1.msra.mxu0 %v230
    %261 = vmatprep.subr.mxu0 0.0
    %262 = vmatpush1.msra.mxu0 %v231
    %263 = vmatprep.subr.mxu0 0.0
    %264 = vmatpush1.msra.mxu0 %v232
    %265 = vmatprep.subr.mxu0 0.0
    %266 = vmatpush1.msra.mxu0 %v233
    %267 = vmatprep.subr.mxu0 0.0
    %268 = vmatpush1.msra.mxu0 %v234
    %269 = vmatprep.subr.mxu0 0.0
    %270 = vmatpush1.msra.mxu0 %v235
    %271 = vmatprep.subr.mxu0 0.0
    %272 = vmatpush1.msra.mxu0 %v253
    %273 = vmatprep.subr.mxu0 0.0
    %274 = vmatpush1.msra.mxu0 0.0
    %275 = vmatprep.subr.mxu0 0.0
    %276 = vmatpush1.msra.mxu0 0.0
    %277 = vmatprep.subr.mxu0 0.0
    %278 = vmatpush1.msra.mxu0 0.0
    %279 = vmatprep.subr.mxu0 0.0
    %280 = vmatpush1.msra.mxu0 0.0
    %281 = vmatprep.subr.mxu0 0.0
    %282 = vmatpush1.msra.mxu0 0.0
    %283 = vmatprep.subr.mxu0 0.0
    %284 = vmatpush1.msra.mxu0 0.0
    %285 = vmatprep.subr.mxu0 0.0
    %286 = vmatpush1.msra.mxu0 0.0
    %287 = vmatprep.subr.mxu0 0.0
    %288 = vmatpush1.msra.mxu0 0.0
    %289 = vmatprep.subr.mxu0 0.0
    %290 = vmatpush1.msra.mxu0 0.0
    %291 = vmatprep.subr.mxu0 0.0
    %292 = vmatpush1.msra.mxu0 0.0
    %293 = vmatprep.subr.mxu0 0.0
    %294 = vmatpush1.msra.mxu0 0.0
    %295 = vmatprep.subr.mxu0 0.0
    %296 = vmatpush1.msra.mxu0 0.0
    %297 = vmatprep.subr.mxu0 0.0
    %298 = vmatpush1.msra.mxu0 0.0
    %299 = vmatprep.subr.mxu0 0.0
    %300 = vmatpush1.msra.mxu0 0.0
    %301 = vmatprep.subr.mxu0 0.0
    %302 = vmatpush1.msra.mxu0 0.0
    %303 = vmatprep.subr.mxu0 0.0
    %304 = vmatpush1.msra.mxu0 0.0
    %305 = vmatprep.subr.mxu0 0.0
    %306 = vmatpush1.msra.mxu0 0.0
    %307 = vmatprep.subr.mxu0 0.0
    %308 = vmatpush1.msra.mxu0 0.0
    %309 = vmatprep.subr.mxu0 0.0
    %310 = vmatpush1.msra.mxu0 0.0
    %311 = vmatprep.subr.mxu0 0.0
    %312 = vmatpush1.msra.mxu0 0.0
    %313 = vmatprep.subr.mxu0 0.0
    %314 = vmatpush1.msra.mxu0 0.0
    %315 = vmatprep.subr.mxu0 0.0
    %316 = vmatpush1.msra.mxu0 0.0
    %317 = vmatprep.subr.mxu0 0.0
    %318 = vmatpush1.msra.mxu0 0.0
    %319 = vmatprep.mubr.f32.mxu0 0.0
    %320 = vmatmul.mubr.f32.gmra.mrb[0].mxu0 %v246
    %v321 = vpop.f32.mrb[0].mxu0
    %v322 = vadd.f32 %v242, %v321
    %v323 = vpop.f32.mrb[0].mxu0
    %324 = vmatprep.mubr.f32.mxu0 0.0
    %325 = vmatmul.mubr.f32.gmra.mrb[0].mxu0 %v249
    %v326 = vpop.f32.mrb[0].mxu0
    %v327 = vadd.f32 %v242, %v326
    %v328 = vpop.f32.mrb[0].mxu0
    %329 = vdwg.mxu0
    %v330 = vld [vmem:[%s4] sm:$0xff]
    %v331 = vadd.f32 %v322, %v330
    %v332 = vadd.f32 %v327, %v330
    %v333 = vld [vmem:[%s1] sm:$0x3]
    %vm334 = vcmp.eq.s32.totalorder %v333, 0
    %v335 = vsel %vm334, -1e+20, 0.0
    %v336 = vld [vmem:[#allocation5] sm:$0xf]
    %vm337 = vcmask 261120
    %v338 = vsel %vm337, %v331, 0.0
    %339 = vadd.xlane.f32.xlu0 %v338
    %v340 = vpop.xlane.xlu0 %339
    %v341 = vsel %vm337, %v332, 0.0
    %342 = vadd.xlane.f32.xlu0 %v341
    %v343 = vpop.xlane.xlu0 %342
    %v344 = vrcp.pop 32.0
    %v345 = vmul.f32 %v340, %v344
    %v346 = vmul.f32 %v343, %v344
    %v347 = vsub.f32 %v331, %v345
    %v348 = vsub.f32 %v332, %v346
    %v349 = vmul.f32 %v347, %v347
    %v350 = vmul.f32 %v348, %v348
    %v351 = vsel %vm337, %v349, 0.0
    %352 = vadd.xlane.f32.xlu0 %v351
    %v353 = vpop.xlane.xlu0 %352
    %v354 = vsel %vm337, %v350, 0.0
    %355 = vadd.xlane.f32.xlu0 %v354
    %v356 = vpop.xlane.xlu0 %355
    %v357 = vmul.f32 %v353, %v344
    %v358 = vmul.f32 %v356, %v344
    %v359 = vadd.f32 %v357, 1e-05
    %v360 = vadd.f32 %v358, 1e-05
    %v361 = vrsqrt.pop %v359
    %v362 = vrsqrt.pop %v360
    %v363 = vmul.f32 %v347, %v361
    %v364 = vmul.f32 %v348, %v362
    %v365 = vlaneseq
    %v366 = vshrl.u32 %v365, 7
    %v367 = vsub.s32 0, %v366
    %v368 = vrot.slane %v336, %v367
    %v369 = vmul.f32 %v363, %v368
    %v370 = vmul.f32 %v364, %v368
    %v371 = vlaneseq
    %v372 = vshrl.u32 %v371, 7
    %v373 = vsub.s32 1, %v372
    %v374 = vrot.slane %v336, %v373
    %v375 = vadd.f32 %v369, %v374
    %v376 = vadd.f32 %v370, %v374
    %v377 = vld [vmem:[%s6] sm:$0xff]
    %v378 = vld [vmem:[%s6 + $0x8] sm:$0xff]
    %v379 = vld [vmem:[%s6 + $0x10] sm:$0xff]
    %v380 = vld [vmem:[%s6 + $0x18] sm:$0xff]
    %v382 = vsel %vm337, %v375, 0
    %v385 = vsel %vm337, %v376, 0
    %387 = vmatprep.subr.mxu0 0.0
    %388 = vmatpush1.msra.mxu0 %v377
    %389 = vmatprep.subr.mxu0 0.0
    %390 = vmatpush1.msra.mxu0 %v378
    %391 = vmatprep.subr.mxu0 0.0
    %392 = vmatpush1.msra.mxu0 %v379
    %393 = vmatprep.subr.mxu0 0.0
    %394 = vmatpush1.msra.mxu0 %v380
    %395 = vmatprep.subr.mxu0 0.0
    %396 = vmatpush1.msra.mxu0 0.0
    %397 = vmatprep.subr.mxu0 0.0
    %398 = vmatpush1.msra.mxu0 0.0
    %399 = vmatprep.subr.mxu0 0.0
    %400 = vmatpush1.msra.mxu0 0.0
    %401 = vmatprep.subr.mxu0 0.0
    %402 = vmatpush1.msra.mxu0 0.0
    %403 = vmatprep.subr.mxu0 0.0
    %404 = vmatpush1.msra.mxu0 0.0
    %405 = vmatprep.subr.mxu0 0.0
    %406 = vmatpush1.msra.mxu0 0.0
    %407 = vmatprep.subr.mxu0 0.0
    %408 = vmatpush1.msra.mxu0 0.0
    %409 = vmatprep.subr.mxu0 0.0
    %410 = vmatpush1.msra.mxu0 0.0
    %411 = vmatprep.subr.mxu0 0.0
    %412 = vmatpush1.msra.mxu0 0.0
    %413 = vmatprep.subr.mxu0 0.0
    %414 = vmatpush1.msra.mxu0 0.0
    %415 = vmatprep.subr.mxu0 0.0
    %416 = vmatpush1.msra.mxu0 0.0
    %417 = vmatprep.subr.mxu0 0.0
    %418 = vmatpush1.msra.mxu0 0.0
    %419 = vmatprep.subr.mxu0 0.0
    %420 = vmatpush1.msra.mxu0 0.0
    %421 = vmatprep.subr.mxu0 0.0
    %422 = vmatpush1.msra.mxu0 0.0
    %423 = vmatprep.subr.mxu0 0.0
    %424 = vmatpush1.msra.mxu0 0.0
    %425 = vmatprep.subr.mxu0 0.0
    %426 = vmatpush1.msra.mxu0 0.0
    %427 = vmatprep.subr.mxu0 0.0
    %428 = vmatpush1.msra.mxu0 0.0
    %429 = vmatprep.subr.mxu0 0.0
    %430 = vmatpush1.msra.mxu0 0.0
    %431 = vmatprep.subr.mxu0 0.0
    %432 = vmatpush1.msra.mxu0 0.0
    %433 = vmatprep.subr.mxu0 0.0
    %434 = vmatpush1.msra.mxu0 0.0
    %435 = vmatprep.subr.mxu0 0.0
    %436 = vmatpush1.msra.mxu0 0.0
    %437 = vmatprep.subr.mxu0 0.0
    %438 = vmatpush1.msra.mxu0 0.0
    %439 = vmatprep.subr.mxu0 0.0
    %440 = vmatpush1.msra.mxu0 0.0
    %441 = vmatprep.subr.mxu0 0.0
    %442 = vmatpush1.msra.mxu0 0.0
    %443 = vmatprep.subr.mxu0 0.0
    %444 = vmatpush1.msra.mxu0 0.0
    %445 = vmatprep.subr.mxu0 0.0
    %446 = vmatpush1.msra.mxu0 0.0
    %447 = vmatprep.subr.mxu0 0.0
    %448 = vmatpush1.msra.mxu0 0.0
    %449 = vmatprep.subr.mxu0 0.0
    %450 = vmatpush1.msra.mxu0 0.0
    %451 = vmatprep.mubr.f32.mxu0 0.0
    %452 = vmatmul.mubr.f32.gmra.mrb[0].mxu0 %v382
    %v453 = vpop.f32.mrb[0].mxu0
    %v454 = vadd.f32 0.0, %v453
    %v455 = vpop.f32.mrb[0].mxu0
    %456 = vmatprep.mubr.f32.mxu0 0.0
    %457 = vmatmul.mubr.f32.gmra.mrb[0].mxu0 %v385
    %v458 = vpop.f32.mrb[0].mxu0
    %v459 = vadd.f32 0.0, %v458
    %v460 = vpop.f32.mrb[0].mxu0
    %461 = vdwg.mxu0
    %463 = vrot.lane.b32.xlu0 %v454, 96
    %v464 = vpop.permute.xlu0 %463
    %vm465 = vcmask 130048
    %v466 = vsel %vm465, %v454, 0
    %v468 = vsel %vm465, %v464, 0
    %470 = vmatprep.subr.mxu0 0.0
    %471 = vmatpush1.xpose.msra.mxu0 %v468
    %472 = vmatprep.subr.mxu0 0.0
    %473 = vmatpush1.xpose.msra.mxu0 0.0
    %474 = vmatprep.subr.mxu0 0.0
    %475 = vmatpush1.xpose.msra.mxu0 0.0
    %476 = vmatprep.subr.mxu0 0.0
    %477 = vmatpush1.xpose.msra.mxu0 0.0
    %478 = vmatprep.subr.mxu0 0.0
    %479 = vmatpush1.xpose.msra.mxu0 0.0
    %480 = vmatprep.subr.mxu0 0.0
    %481 = vmatpush1.xpose.msra.mxu0 0.0
    %482 = vmatprep.subr.mxu0 0.0
    %483 = vmatpush1.xpose.msra.mxu0 0.0
    %484 = vmatprep.subr.mxu0 0.0
    %485 = vmatpush1.xpose.msra.mxu0 0.0
    %486 = vmatprep.subr.mxu0 0.0
    %487 = vmatpush1.xpose.msra.mxu0 0.0
    %488 = vmatprep.subr.mxu0 0.0
    %489 = vmatpush1.xpose.msra.mxu0 0.0
    %490 = vmatprep.subr.mxu0 0.0
    %491 = vmatpush1.xpose.msra.mxu0 0.0
    %492 = vmatprep.subr.mxu0 0.0
    %493 = vmatpush1.xpose.msra.mxu0 0.0
    %494 = vmatprep.subr.mxu0 0.0
    %495 = vmatpush1.xpose.msra.mxu0 0.0
    %496 = vmatprep.subr.mxu0 0.0
    %497 = vmatpush1.xpose.msra.mxu0 0.0
    %498 = vmatprep.subr.mxu0 0.0
    %499 = vmatpush1.xpose.msra.mxu0 0.0
    %500 = vmatprep.subr.mxu0 0.0
    %501 = vmatpush1.xpose.msra.mxu0 0.0
    %502 = vmatprep.subr.mxu0 0.0
    %503 = vmatpush1.xpose.msra.mxu0 0.0
    %504 = vmatprep.subr.mxu0 0.0
    %505 = vmatpush1.xpose.msra.mxu0 0.0
    %506 = vmatprep.subr.mxu0 0.0
    %507 = vmatpush1.xpose.msra.mxu0 0.0
    %508 = vmatprep.subr.mxu0 0.0
    %509 = vmatpush1.xpose.msra.mxu0 0.0
    %510 = vmatprep.subr.mxu0 0.0
    %511 = vmatpush1.xpose.msra.mxu0 0.0
    %512 = vmatprep.subr.mxu0 0.0
    %513 = vmatpush1.xpose.msra.mxu0 0.0
    %514 = vmatprep.subr.mxu0 0.0
    %515 = vmatpush1.xpose.msra.mxu0 0.0
    %516 = vmatprep.subr.mxu0 0.0
    %517 = vmatpush1.xpose.msra.mxu0 0.0
    %518 = vmatprep.subr.mxu0 0.0
    %519 = vmatpush1.xpose.msra.mxu0 0.0
    %520 = vmatprep.subr.mxu0 0.0
    %521 = vmatpush1.xpose.msra.mxu0 0.0
    %522 = vmatprep.subr.mxu0 0.0
    %523 = vmatpush1.xpose.msra.mxu0 0.0
    %524 = vmatprep.subr.mxu0 0.0
    %525 = vmatpush1.xpose.msra.mxu0 0.0
    %526 = vmatprep.subr.mxu0 0.0
    %527 = vmatpush1.xpose.msra.mxu0 0.0
    %528 = vmatprep.subr.mxu0 0.0
    %529 = vmatpush1.xpose.msra.mxu0 0.0
    %530 = vmatprep.subr.mxu0 0.0
    %531 = vmatpush1.xpose.msra.mxu0 0.0
    %532 = vmatprep.subr.mxu0 0.0
    %533 = vmatpush1.xpose.msra.mxu0 0.0
    %534 = vmatprep.mubr.f32.mxu0 0.0
    %535 = vmatmul.mubr.f32.gmra.mrb[0].mxu0 %v466
    %v536 = vpop.f32.mrb[0].mxu0
    %v537 = vadd.f32 0.0, %v536
    %v538 = vpop.f32.mrb[0].mxu0
    %539 = vdwg.mxu0
    %v540 = vmul.f32 %v537, 0.25
    %v541 = vlaneseq
    %v542 = vshrl.u32 %v541, 7
    %v543 = vsub.s32 0, %v542
    %v544 = vrot.slane %v335, %v543
    %v545 = vadd.f32 %v540, %v544
    %vm546 = vcmask 64512
    %v547 = vsel %vm546, %v545, -inf
    %548 = vmax.xlane.f32.xlu0 %v547
    %v549 = vpop.xlane.xlu0 %548
    %v550 = vsub.f32 %v545, %v549
    %v551 = vmul.f32 %v550, 1.442695
    %v552 = vpow.pop %v551
    %v553 = vsel %vm546, %v552, 0.0
    %554 = vadd.xlane.f32.xlu0 %v553
    %v555 = vpop.xlane.xlu0 %554
    %v556 = vrcp.pop %v555
    %v557 = vmul.f32 %v552, %v556
    %558 = vrot.lane.b32.xlu0 %v454, 64
    %v559 = vpop.permute.xlu0 %558
    %v562 = vsel %vm546, %v557, 0
    %564 = vmatprep.subr.mxu0 0.0
    %565 = vmatpush1.msra.mxu0 %v559
    %566 = vmatprep.subr.mxu0 0.0
    %567 = vmatpush1.msra.mxu0 0.0
    %568 = vmatprep.subr.mxu0 0.0
    %569 = vmatpush1.msra.mxu0 0.0
    %570 = vmatprep.subr.mxu0 0.0
    %571 = vmatpush1.msra.mxu0 0.0
    %572 = vmatprep.subr.mxu0 0.0
    %573 = vmatpush1.msra.mxu0 0.0
    %574 = vmatprep.subr.mxu0 0.0
    %575 = vmatpush1.msra.mxu0 0.0
    %576 = vmatprep.subr.mxu0 0.0
    %577 = vmatpush1.msra.mxu0 0.0
    %578 = vmatprep.subr.mxu0 0.0
    %579 = vmatpush1.msra.mxu0 0.0
    %580 = vmatprep.subr.mxu0 0.0
    %581 = vmatpush1.msra.mxu0 0.0
    %582 = vmatprep.subr.mxu0 0.0
    %583 = vmatpush1.msra.mxu0 0.0
    %584 = vmatprep.subr.mxu0 0.0
    %585 = vmatpush1.msra.mxu0 0.0
    %586 = vmatprep.subr.mxu0 0.0
    %587 = vmatpush1.msra.mxu0 0.0
    %588 = vmatprep.subr.mxu0 0.0
    %589 = vmatpush1.msra.mxu0 0.0
    %590 = vmatprep.subr.mxu0 0.0
    %591 = vmatpush1.msra.mxu0 0.0
    %592 = vmatprep.subr.mxu0 0.0
    %593 = vmatpush1.msra.mxu0 0.0
    %594 = vmatprep.subr.mxu0 0.0
    %595 = vmatpush1.msra.mxu0 0.0
    %596 = vmatprep.subr.mxu0 0.0
    %597 = vmatpush1.msra.mxu0 0.0
    %598 = vmatprep.subr.mxu0 0.0
    %599 = vmatpush1.msra.mxu0 0.0
    %600 = vmatprep.subr.mxu0 0.0
    %601 = vmatpush1.msra.mxu0 0.0
    %602 = vmatprep.subr.mxu0 0.0
    %603 = vmatpush1.msra.mxu0 0.0
    %604 = vmatprep.subr.mxu0 0.0
    %605 = vmatpush1.msra.mxu0 0.0
    %606 = vmatprep.subr.mxu0 0.0
    %607 = vmatpush1.msra.mxu0 0.0
    %608 = vmatprep.subr.mxu0 0.0
    %609 = vmatpush1.msra.mxu0 0.0
    %610 = vmatprep.subr.mxu0 0.0
    %611 = vmatpush1.msra.mxu0 0.0
    %612 = vmatprep.subr.mxu0 0.0
    %613 = vmatpush1.msra.mxu0 0.0
    %614 = vmatprep.subr.mxu0 0.0
    %615 = vmatpush1.msra.mxu0 0.0
    %616 = vmatprep.subr.mxu0 0.0
    %617 = vmatpush1.msra.mxu0 0.0
    %618 = vmatprep.subr.mxu0 0.0
    %619 = vmatpush1.msra.mxu0 0.0
    %620 = vmatprep.subr.mxu0 0.0
    %621 = vmatpush1.msra.mxu0 0.0
    %622 = vmatprep.subr.mxu0 0.0
    %623 = vmatpush1.msra.mxu0 0.0
    %624 = vmatprep.subr.mxu0 0.0
    %625 = vmatpush1.msra.mxu0 0.0
    %626 = vmatprep.subr.mxu0 0.0
    %627 = vmatpush1.msra.mxu0 0.0
    %628 = vmatprep.mubr.f32.mxu0 0.0
    %629 = vmatmul.mubr.f32.gmra.mrb[0].mxu0 %v562
    %v630 = vpop.f32.mrb[0].mxu0
    %v631 = vadd.f32 0.0, %v630
    %v632 = vpop.f32.mrb[0].mxu0
    %633 = vdwg.mxu0
    %634 = vrot.lane.b32.xlu0 %v454, 112
    %v635 = vpop.permute.xlu0 %634
    %636 = vrot.lane.b32.xlu0 %v454, 80
    %v637 = vpop.permute.xlu0 %636
    %v638 = vsel %vm465, %v635, 0
    %v640 = vsel %vm465, %v637, 0
    %642 = vmatprep.subr.mxu0 0.0
    %643 = vmatpush1.xpose.msra.mxu0 %v640
    %644 = vmatprep.subr.mxu0 0.0
    %645 = vmatpush1.xpose.msra.mxu0 0.0
    %646 = vmatprep.subr.mxu0 0.0
    %647 = vmatpush1.xpose.msra.mxu0 0.0
    %648 = vmatprep.subr.mxu0 0.0
    %649 = vmatpush1.xpose.msra.mxu0 0.0
    %650 = vmatprep.subr.mxu0 0.0
    %651 = vmatpush1.xpose.msra.mxu0 0.0
    %652 = vmatprep.subr.mxu0 0.0
    %653 = vmatpush1.xpose.msra.mxu0 0.0
    %654 = vmatprep.subr.mxu0 0.0
    %655 = vmatpush1.xpose.msra.mxu0 0.0
    %656 = vmatprep.subr.mxu0 0.0
    %657 = vmatpush1.xpose.msra.mxu0 0.0
    %658 = vmatprep.subr.mxu0 0.0
    %659 = vmatpush1.xpose.msra.mxu0 0.0
    %660 = vmatprep.subr.mxu0 0.0
    %661 = vmatpush1.xpose.msra.mxu0 0.0
    %662 = vmatprep.subr.mxu0 0.0
    %663 = vmatpush1.xpose.msra.mxu0 0.0
    %664 = vmatprep.subr.mxu0 0.0
    %665 = vmatpush1.xpose.msra.mxu0 0.0
    %666 = vmatprep.subr.mxu0 0.0
    %667 = vmatpush1.xpose.msra.mxu0 0.0
    %668 = vmatprep.subr.mxu0 0.0
    %669 = vmatpush1.xpose.msra.mxu0 0.0
    %670 = vmatprep.subr.mxu0 0.0
    %671 = vmatpush1.xpose.msra.mxu0 0.0
    %672 = vmatprep.subr.mxu0 0.0
    %673 = vmatpush1.xpose.msra.mxu0 0.0
    %674 = vmatprep.subr.mxu0 0.0
    %675 = vmatpush1.xpose.msra.mxu0 0.0
    %676 = vmatprep.subr.mxu0 0.0
    %677 = vmatpush1.xpose.msra.mxu0 0.0
    %678 = vmatprep.subr.mxu0 0.0
    %679 = vmatpush1.xpose.msra.mxu0 0.0
    %680 = vmatprep.subr.mxu0 0.0
    %681 = vmatpush1.xpose.msra.mxu0 0.0
    %682 = vmatprep.subr.mxu0 0.0
    %683 = vmatpush1.xpose.msra.mxu0 0.0
    %684 = vmatprep.subr.mxu0 0.0
    %685 = vmatpush1.xpose.msra.mxu0 0.0
    %686 = vmatprep.subr.mxu0 0.0
    %687 = vmatpush1.xpose.msra.mxu0 0.0
    %688 = vmatprep.subr.mxu0 0.0
    %689 = vmatpush1.xpose.msra.mxu0 0.0
    %690 = vmatprep.subr.mxu0 0.0
    %691 = vmatpush1.xpose.msra.mxu0 0.0
    %692 = vmatprep.subr.mxu0 0.0
    %693 = vmatpush1.xpose.msra.mxu0 0.0
    %694 = vmatprep.subr.mxu0 0.0
    %695 = vmatpush1.xpose.msra.mxu0 0.0
    %696 = vmatprep.subr.mxu0 0.0
    %697 = vmatpush1.xpose.msra.mxu0 0.0
    %698 = vmatprep.subr.mxu0 0.0
    %699 = vmatpush1.xpose.msra.mxu0 0.0
    %700 = vmatprep.subr.mxu0 0.0
    %701 = vmatpush1.xpose.msra.mxu0 0.0
    %702 = vmatprep.subr.mxu0 0.0
    %703 = vmatpush1.xpose.msra.mxu0 0.0
    %704 = vmatprep.subr.mxu0 0.0
    %705 = vmatpush1.xpose.msra.mxu0 0.0
    %706 = vmatprep.mubr.f32.mxu0 0.0
    %707 = vmatmul.mubr.f32.gmra.mrb[0].mxu0 %v638
    %v708 = vpop.f32.mrb[0].mxu0
    %v709 = vadd.f32 0.0, %v708
    %v710 = vpop.f32.mrb[0].mxu0
    %711 = vdwg.mxu0
    %v712 = vmul.f32 %v709, 0.25
    %v713 = vadd.f32 %v712, %v544
    %v714 = vsel %vm546, %v713, -inf
    %715 = vmax.xlane.f32.xlu0 %v714
    %v716 = vpop.xlane.xlu0 %715
    %v717 = vsub.f32 %v713, %v716
    %v718 = vmul.f32 %v717, 1.442695
    %v719 = vpow.pop %v718
    %v720 = vsel %vm546, %v719, 0.0
    %721 = vadd.xlane.f32.xlu0 %v720
    %v722 = vpop.xlane.xlu0 %721
    %v723 = vrcp.pop %v722
    %v724 = vmul.f32 %v719, %v723
    %725 = vrot.lane.b32.xlu0 %v454, 48
    %v726 = vpop.permute.xlu0 %725
    %v729 = vsel %vm546, %v724, 0
    %731 = vmatprep.subr.mxu0 0.0
    %732 = vmatpush1.msra.mxu0 %v726
    %733 = vmatprep.subr.mxu0 0.0
    %734 = vmatpush1.msra.mxu0 0.0
    %735 = vmatprep.subr.mxu0 0.0
    %736 = vmatpush1.msra.mxu0 0.0
    %737 = vmatprep.subr.mxu0 0.0
    %738 = vmatpush1.msra.mxu0 0.0
    %739 = vmatprep.subr.mxu0 0.0
    %740 = vmatpush1.msra.mxu0 0.0
    %741 = vmatprep.subr.mxu0 0.0
    %742 = vmatpush1.msra.mxu0 0.0
    %743 = vmatprep.subr.mxu0 0.0
    %744 = vmatpush1.msra.mxu0 0.0
    %745 = vmatprep.subr.mxu0 0.0
    %746 = vmatpush1.msra.mxu0 0.0
    %747 = vmatprep.subr.mxu0 0.0
    %748 = vmatpush1.msra.mxu0 0.0
    %749 = vmatprep.subr.mxu0 0.0
    %750 = vmatpush1.msra.mxu0 0.0
    %751 = vmatprep.subr.mxu0 0.0
    %752 = vmatpush1.msra.mxu0 0.0
    %753 = vmatprep.subr.mxu0 0.0
    %754 = vmatpush1.msra.mxu0 0.0
    %755 = vmatprep.subr.mxu0 0.0
    %756 = vmatpush1.msra.mxu0 0.0
    %757 = vmatprep.subr.mxu0 0.0
    %758 = vmatpush1.msra.mxu0 0.0
    %759 = vmatprep.subr.mxu0 0.0
    %760 = vmatpush1.msra.mxu0 0.0
    %761 = vmatprep.subr.mxu0 0.0
    %762 = vmatpush1.msra.mxu0 0.0
    %763 = vmatprep.subr.mxu0 0.0
    %764 = vmatpush1.msra.mxu0 0.0
    %765 = vmatprep.subr.mxu0 0.0
    %766 = vmatpush1.msra.mxu0 0.0
    %767 = vmatprep.subr.mxu0 0.0
    %768 = vmatpush1.msra.mxu0 0.0
    %769 = vmatprep.subr.mxu0 0.0
    %770 = vmatpush1.msra.mxu0 0.0
    %771 = vmatprep.subr.mxu0 0.0
    %772 = vmatpush1.msra.mxu0 0.0
    %773 = vmatprep.subr.mxu0 0.0
    %774 = vmatpush1.msra.mxu0 0.0
    %775 = vmatprep.subr.mxu0 0.0
    %776 = vmatpush1.msra.mxu0 0.0
    %777 = vmatprep.subr.mxu0 0.0
    %778 = vmatpush1.msra.mxu0 0.0
    %779 = vmatprep.subr.mxu0 0.0
    %780 = vmatpush1.msra.mxu0 0.0
    %781 = vmatprep.subr.mxu0 0.0
    %782 = vmatpush1.msra.mxu0 0.0
    %783 = vmatprep.subr.mxu0 0.0
    %784 = vmatpush1.msra.mxu0 0.0
    %785 = vmatprep.subr.mxu0 0.0
    %786 = vmatpush1.msra.mxu0 0.0
    %787 = vmatprep.subr.mxu0 0.0
    %788 = vmatpush1.msra.mxu0 0.0
    %789 = vmatprep.subr.mxu0 0.0
    %790 = vmatpush1.msra.mxu0 0.0
    %791 = vmatprep.subr.mxu0 0.0
    %792 = vmatpush1.msra.mxu0 0.0
    %793 = vmatprep.subr.mxu0 0.0
    %794 = vmatpush1.msra.mxu0 0.0
    %795 = vmatprep.mubr.f32.mxu0 0.0
    %796 = vmatmul.mubr.f32.gmra.mrb[0].mxu0 %v729
    %v797 = vpop.f32.mrb[0].mxu0
    %v798 = vadd.f32 0.0, %v797
    %v799 = vpop.f32.mrb[0].mxu0
    %800 = vdwg.mxu0
    %802 = vrot.lane.b32.xlu0 %v798, 16
    %v803 = vpop.permute.xlu0 %802
    %v805 = vsel %vm465, %v631, %v803
    %807 = vrot.lane.b32.xlu0 %v459, 96
    %v808 = vpop.permute.xlu0 %807
    %v809 = vsel %vm465, %v459, 0
    %v811 = vsel %vm465, %v808, 0
    %813 = vmatprep.subr.mxu0 0.0
    %814 = vmatpush1.xpose.msra.mxu0 %v811
    %815 = vmatprep.subr.mxu0 0.0
    %816 = vmatpush1.xpose.msra.mxu0 0.0
    %817 = vmatprep.subr.mxu0 0.0
    %818 = vmatpush1.xpose.msra.mxu0 0.0
    %819 = vmatprep.subr.mxu0 0.0
    %820 = vmatpush1.xpose.msra.mxu0 0.0
    %821 = vmatprep.subr.mxu0 0.0
    %822 = vmatpush1.xpose.msra.mxu0 0.0
    %823 = vmatprep.subr.mxu0 0.0
    %824 = vmatpush1.xpose.msra.mxu0 0.0
    %825 = vmatprep.subr.mxu0 0.0
    %826 = vmatpush1.xpose.msra.mxu0 0.0
    %827 = vmatprep.subr.mxu0 0.0
    %828 = vmatpush1.xpose.msra.mxu0 0.0
    %829 = vmatprep.subr.mxu0 0.0
    %830 = vmatpush1.xpose.msra.mxu0 0.0
    %831 = vmatprep.subr.mxu0 0.0
    %832 = vmatpush1.xpose.msra.mxu0 0.0
    %833 = vmatprep.subr.mxu0 0.0
    %834 = vmatpush1.xpose.msra.mxu0 0.0
    %835 = vmatprep.subr.mxu0 0.0
    %836 = vmatpush1.xpose.msra.mxu0 0.0
    %837 = vmatprep.subr.mxu0 0.0
    %838 = vmatpush1.xpose.msra.mxu0 0.0
    %839 = vmatprep.subr.mxu0 0.0
    %840 = vmatpush1.xpose.msra.mxu0 0.0
    %841 = vmatprep.subr.mxu0 0.0
    %842 = vmatpush1.xpose.msra.mxu0 0.0
    %843 = vmatprep.subr.mxu0 0.0
    %844 = vmatpush1.xpose.msra.mxu0 0.0
    %845 = vmatprep.subr.mxu0 0.0
    %846 = vmatpush1.xpose.msra.mxu0 0.0
    %847 = vmatprep.subr.mxu0 0.0
    %848 = vmatpush1.xpose.msra.mxu0 0.0
    %849 = vmatprep.subr.mxu0 0.0
    %850 = vmatpush1.xpose.msra.mxu0 0.0
    %851 = vmatprep.subr.mxu0 0.0
    %852 = vmatpush1.xpose.msra.mxu0 0.0
    %853 = vmatprep.subr.mxu0 0.0
    %854 = vmatpush1.xpose.msra.mxu0 0.0
    %855 = vmatprep.subr.mxu0 0.0
    %856 = vmatpush1.xpose.msra.mxu0 0.0
    %857 = vmatprep.subr.mxu0 0.0
    %858 = vmatpush1.xpose.msra.mxu0 0.0
    %859 = vmatprep.subr.mxu0 0.0
    %860 = vmatpush1.xpose.msra.mxu0 0.0
    %861 = vmatprep.subr.mxu0 0.0
    %862 = vmatpush1.xpose.msra.mxu0 0.0
    %863 = vmatprep.subr.mxu0 0.0
    %864 = vmatpush1.xpose.msra.mxu0 0.0
    %865 = vmatprep.subr.mxu0 0.0
    %866 = vmatpush1.xpose.msra.mxu0 0.0
    %867 = vmatprep.subr.mxu0 0.0
    %868 = vmatpush1.xpose.msra.mxu0 0.0
    %869 = vmatprep.subr.mxu0 0.0
    %870 = vmatpush1.xpose.msra.mxu0 0.0
    %871 = vmatprep.subr.mxu0 0.0
    %872 = vmatpush1.xpose.msra.mxu0 0.0
    %873 = vmatprep.subr.mxu0 0.0
    %874 = vmatpush1.xpose.msra.mxu0 0.0
    %875 = vmatprep.subr.mxu0 0.0
    %876 = vmatpush1.xpose.msra.mxu0 0.0
    %877 = vmatprep.mubr.f32.mxu0 0.0
    %878 = vmatmul.mubr.f32.gmra.mrb[0].mxu0 %v809
    %v879 = vpop.f32.mrb[0].mxu0
    %v880 = vadd.f32 0.0, %v879
    %v881 = vpop.f32.mrb[0].mxu0
    %882 = vdwg.mxu0
    %v883 = vmul.f32 %v880, 0.25
    %v884 = vlaneseq
    %v885 = vshrl.u32 %v884, 7
    %v886 = vsub.s32 1, %v885
    %v887 = vrot.slane %v335, %v886
    %v888 = vadd.f32 %v883, %v887
    %v889 = vsel %vm546, %v888, -inf
    %890 = vmax.xlane.f32.xlu0 %v889
    %v891 = vpop.xlane.xlu0 %890
    %v892 = vsub.f32 %v888, %v891
    %v893 = vmul.f32 %v892, 1.442695
    %v894 = vpow.pop %v893
    %v895 = vsel %vm546, %v894, 0.0
    %896 = vadd.xlane.f32.xlu0 %v895
    %v897 = vpop.xlane.xlu0 %896
    %v898 = vrcp.pop %v897
    %v899 = vmul.f32 %v894, %v898
    %900 = vrot.lane.b32.xlu0 %v459, 64
    %v901 = vpop.permute.xlu0 %900
    %v904 = vsel %vm546, %v899, 0
    %906 = vmatprep.subr.mxu0 0.0
    %907 = vmatpush1.msra.mxu0 %v901
    %908 = vmatprep.subr.mxu0 0.0
    %909 = vmatpush1.msra.mxu0 0.0
    %910 = vmatprep.subr.mxu0 0.0
    %911 = vmatpush1.msra.mxu0 0.0
    %912 = vmatprep.subr.mxu0 0.0
    %913 = vmatpush1.msra.mxu0 0.0
    %914 = vmatprep.subr.mxu0 0.0
    %915 = vmatpush1.msra.mxu0 0.0
    %916 = vmatprep.subr.mxu0 0.0
    %917 = vmatpush1.msra.mxu0 0.0
    %918 = vmatprep.subr.mxu0 0.0
    %919 = vmatpush1.msra.mxu0 0.0
    %920 = vmatprep.subr.mxu0 0.0
    %921 = vmatpush1.msra.mxu0 0.0
    %922 = vmatprep.subr.mxu0 0.0
    %923 = vmatpush1.msra.mxu0 0.0
    %924 = vmatprep.subr.mxu0 0.0
    %925 = vmatpush1.msra.mxu0 0.0
    %926 = vmatprep.subr.mxu0 0.0
    %927 = vmatpush1.msra.mxu0 0.0
    %928 = vmatprep.subr.mxu0 0.0
    %929 = vmatpush1.msra.mxu0 0.0
    %930 = vmatprep.subr.mxu0 0.0
    %931 = vmatpush1.msra.mxu0 0.0
    %932 = vmatprep.subr.mxu0 0.0
    %933 = vmatpush1.msra.mxu0 0.0
    %934 = vmatprep.subr.mxu0 0.0
    %935 = vmatpush1.msra.mxu0 0.0
    %936 = vmatprep.subr.mxu0 0.0
    %937 = vmatpush1.msra.mxu0 0.0
    %938 = vmatprep.subr.mxu0 0.0
    %939 = vmatpush1.msra.mxu0 0.0
    %940 = vmatprep.subr.mxu0 0.0
    %941 = vmatpush1.msra.mxu0 0.0
    %942 = vmatprep.subr.mxu0 0.0
    %943 = vmatpush1.msra.mxu0 0.0
    %944 = vmatprep.subr.mxu0 0.0
    %945 = vmatpush1.msra.mxu0 0.0
    %946 = vmatprep.subr.mxu0 0.0
    %947 = vmatpush1.msra.mxu0 0.0
    %948 = vmatprep.subr.mxu0 0.0
    %949 = vmatpush1.msra.mxu0 0.0
    %950 = vmatprep.subr.mxu0 0.0
    %951 = vmatpush1.msra.mxu0 0.0
    %952 = vmatprep.subr.mxu0 0.0
    %953 = vmatpush1.msra.mxu0 0.0
    %954 = vmatprep.subr.mxu0 0.0
    %955 = vmatpush1.msra.mxu0 0.0
    %956 = vmatprep.subr.mxu0 0.0
    %957 = vmatpush1.msra.mxu0 0.0
    %958 = vmatprep.subr.mxu0 0.0
    %959 = vmatpush1.msra.mxu0 0.0
    %960 = vmatprep.subr.mxu0 0.0
    %961 = vmatpush1.msra.mxu0 0.0
    %962 = vmatprep.subr.mxu0 0.0
    %963 = vmatpush1.msra.mxu0 0.0
    %964 = vmatprep.subr.mxu0 0.0
    %965 = vmatpush1.msra.mxu0 0.0
    %966 = vmatprep.subr.mxu0 0.0
    %967 = vmatpush1.msra.mxu0 0.0
    %968 = vmatprep.subr.mxu0 0.0
    %969 = vmatpush1.msra.mxu0 0.0
    %970 = vmatprep.mubr.f32.mxu0 0.0
    %971 = vmatmul.mubr.f32.gmra.mrb[0].mxu0 %v904
    %v972 = vpop.f32.mrb[0].mxu0
    %v973 = vadd.f32 0.0, %v972
    %v974 = vpop.f32.mrb[0].mxu0
    %975 = vdwg.mxu0
    %976 = vrot.lane.b32.xlu0 %v459, 112
    %v977 = vpop.permute.xlu0 %976
    %978 = vrot.lane.b32.xlu0 %v459, 80
    %v979 = vpop.permute.xlu0 %978
    %v980 = vsel %vm465, %v977, 0
    %v982 = vsel %vm465, %v979, 0
    %984 = vmatprep.subr.mxu0 0.0
    %985 = vmatpush1.xpose.msra.mxu0 %v982
    %986 = vmatprep.subr.mxu0 0.0
    %987 = vmatpush1.xpose.msra.mxu0 0.0
    %988 = vmatprep.subr.mxu0 0.0
    %989 = vmatpush1.xpose.msra.mxu0 0.0
    %990 = vmatprep.subr.mxu0 0.0
    %991 = vmatpush1.xpose.msra.mxu0 0.0
    %992 = vmatprep.subr.mxu0 0.0
    %993 = vmatpush1.xpose.msra.mxu0 0.0
    %994 = vmatprep.subr.mxu0 0.0
    %995 = vmatpush1.xpose.msra.mxu0 0.0
    %996 = vmatprep.subr.mxu0 0.0
    %997 = vmatpush1.xpose.msra.mxu0 0.0
    %998 = vmatprep.subr.mxu0 0.0
    %999 = vmatpush1.xpose.msra.mxu0 0.0
    %1000 = vmatprep.subr.mxu0 0.0
    %1001 = vmatpush1.xpose.msra.mxu0 0.0
    %1002 = vmatprep.subr.mxu0 0.0
    %1003 = vmatpush1.xpose.msra.mxu0 0.0
    %1004 = vmatprep.subr.mxu0 0.0
    %1005 = vmatpush1.xpose.msra.mxu0 0.0
    %1006 = vmatprep.subr.mxu0 0.0
    %1007 = vmatpush1.xpose.msra.mxu0 0.0
    %1008 = vmatprep.subr.mxu0 0.0
    %1009 = vmatpush1.xpose.msra.mxu0 0.0
    %1010 = vmatprep.subr.mxu0 0.0
    %1011 = vmatpush1.xpose.msra.mxu0 0.0
    %1012 = vmatprep.subr.mxu0 0.0
    %1013 = vmatpush1.xpose.msra.mxu0 0.0
    %1014 = vmatprep.subr.mxu0 0.0
    %1015 = vmatpush1.xpose.msra.mxu0 0.0
    %1016 = vmatprep.subr.mxu0 0.0
    %1017 = vmatpush1.xpose.msra.mxu0 0.0
    %1018 = vmatprep.subr.mxu0 0.0
    %1019 = vmatpush1.xpose.msra.mxu0 0.0
    %1020 = vmatprep.subr.mxu0 0.0
    %1021 = vmatpush1.xpose.msra.mxu0 0.0
    %1022 = vmatprep.subr.mxu0 0.0
    %1023 = vmatpush1.xpose.msra.mxu0 0.0
    %1024 = vmatprep.subr.mxu0 0.0
    %1025 = vmatpush1.xpose.msra.mxu0 0.0
    %1026 = vmatprep.subr.mxu0 0.0
    %1027 = vmatpush1.xpose.msra.mxu0 0.0
    %1028 = vmatprep.subr.mxu0 0.0
    %1029 = vmatpush1.xpose.msra.mxu0 0.0
    %1030 = vmatprep.subr.mxu0 0.0
    %1031 = vmatpush1.xpose.msra.mxu0 0.0
    %1032 = vmatprep.subr.mxu0 0.0
    %1033 = vmatpush1.xpose.msra.mxu0 0.0
    %1034 = vmatprep.subr.mxu0 0.0
    %1035 = vmatpush1.xpose.msra.mxu0 0.0
    %1036 = vmatprep.subr.mxu0 0.0
    %1037 = vmatpush1.xpose.msra.mxu0 0.0
    %1038 = vmatprep.subr.mxu0 0.0
    %1039 = vmatpush1.xpose.msra.mxu0 0.0
    %1040 = vmatprep.subr.mxu0 0.0
    %1041 = vmatpush1.xpose.msra.mxu0 0.0
    %1042 = vmatprep.subr.mxu0 0.0
    %1043 = vmatpush1.xpose.msra.mxu0 0.0
    %1044 = vmatprep.subr.mxu0 0.0
    %1045 = vmatpush1.xpose.msra.mxu0 0.0
    %1046 = vmatprep.subr.mxu0 0.0
    %1047 = vmatpush1.xpose.msra.mxu0 0.0
    %1048 = vmatprep.mubr.f32.mxu0 0.0
    %1049 = vmatmul.mubr.f32.gmra.mrb[0].mxu0 %v980
    %v1050 = vpop.f32.mrb[0].mxu0
    %v1051 = vadd.f32 0.0, %v1050
    %v1052 = vpop.f32.mrb[0].mxu0
    %1053 = vdwg.mxu0
    %v1054 = vmul.f32 %v1051, 0.25
    %v1055 = vadd.f32 %v1054, %v887
    %v1056 = vsel %vm546, %v1055, -inf
    %1057 = vmax.xlane.f32.xlu0 %v1056
    %v1058 = vpop.xlane.xlu0 %1057
    %v1059 = vsub.f32 %v1055, %v1058
    %v1060 = vmul.f32 %v1059, 1.442695
    %v1061 = vpow.pop %v1060
    %v1062 = vsel %vm546, %v1061, 0.0
    %1063 = vadd.xlane.f32.xlu0 %v1062
    %v1064 = vpop.xlane.xlu0 %1063
    %v1065 = vrcp.pop %v1064
    %v1066 = vmul.f32 %v1061, %v1065
    %1067 = vrot.lane.b32.xlu0 %v459, 48
    %v1068 = vpop.permute.xlu0 %1067
    %v1071 = vsel %vm546, %v1066, 0
    %1073 = vmatprep.subr.mxu0 0.0
    %1074 = vmatpush1.msra.mxu0 %v1068
    %1075 = vmatprep.subr.mxu0 0.0
    %1076 = vmatpush1.msra.mxu0 0.0
    %1077 = vmatprep.subr.mxu0 0.0
    %1078 = vmatpush1.msra.mxu0 0.0
    %1079 = vmatprep.subr.mxu0 0.0
    %1080 = vmatpush1.msra.mxu0 0.0
    %1081 = vmatprep.subr.mxu0 0.0
    %1082 = vmatpush1.msra.mxu0 0.0
    %1083 = vmatprep.subr.mxu0 0.0
    %1084 = vmatpush1.msra.mxu0 0.0
    %1085 = vmatprep.subr.mxu0 0.0
    %1086 = vmatpush1.msra.mxu0 0.0
    %1087 = vmatprep.subr.mxu0 0.0
    %1088 = vmatpush1.msra.mxu0 0.0
    %1089 = vmatprep.subr.mxu0 0.0
    %1090 = vmatpush1.msra.mxu0 0.0
    %1091 = vmatprep.subr.mxu0 0.0
    %1092 = vmatpush1.msra.mxu0 0.0
    %1093 = vmatprep.subr.mxu0 0.0
    %1094 = vmatpush1.msra.mxu0 0.0
    %1095 = vmatprep.subr.mxu0 0.0
    %1096 = vmatpush1.msra.mxu0 0.0
    %1097 = vmatprep.subr.mxu0 0.0
    %1098 = vmatpush1.msra.mxu0 0.0
    %1099 = vmatprep.subr.mxu0 0.0
    %1100 = vmatpush1.msra.mxu0 0.0
    %1101 = vmatprep.subr.mxu0 0.0
    %1102 = vmatpush1.msra.mxu0 0.0
    %1103 = vmatprep.subr.mxu0 0.0
    %1104 = vmatpush1.msra.mxu0 0.0
    %1105 = vmatprep.subr.mxu0 0.0
    %1106 = vmatpush1.msra.mxu0 0.0
    %1107 = vmatprep.subr.mxu0 0.0
    %1108 = vmatpush1.msra.mxu0 0.0
    %1109 = vmatprep.subr.mxu0 0.0
    %1110 = vmatpush1.msra.mxu0 0.0
    %1111 = vmatprep.subr.mxu0 0.0
    %1112 = vmatpush1.msra.mxu0 0.0
    %1113 = vmatprep.subr.mxu0 0.0
    %1114 = vmatpush1.msra.mxu0 0.0
    %1115 = vmatprep.subr.mxu0 0.0
    %1116 = vmatpush1.msra.mxu0 0.0
    %1117 = vmatprep.subr.mxu0 0.0
    %1118 = vmatpush1.msra.mxu0 0.0
    %1119 = vmatprep.subr.mxu0 0.0
    %1120 = vmatpush1.msra.mxu0 0.0
    %1121 = vmatprep.subr.mxu0 0.0
    %1122 = vmatpush1.msra.mxu0 0.0
    %1123 = vmatprep.subr.mxu0 0.0
    %1124 = vmatpush1.msra.mxu0 0.0
    %1125 = vmatprep.subr.mxu0 0.0
    %1126 = vmatpush1.msra.mxu0 0.0
    %1127 = vmatprep.subr.mxu0 0.0
    %1128 = vmatpush1.msra.mxu0 0.0
    %1129 = vmatprep.subr.mxu0 0.0
    %1130 = vmatpush1.msra.mxu0 0.0
    %1131 = vmatprep.subr.mxu0 0.0
    %1132 = vmatpush1.msra.mxu0 0.0
    %1133 = vmatprep.subr.mxu0 0.0
    %1134 = vmatpush1.msra.mxu0 0.0
    %1135 = vmatprep.subr.mxu0 0.0
    %1136 = vmatpush1.msra.mxu0 0.0
    %1137 = vmatprep.mubr.f32.mxu0 0.0
    %1138 = vmatmul.mubr.f32.gmra.mrb[0].mxu0 %v1071
    %v1139 = vpop.f32.mrb[0].mxu0
    %v1140 = vadd.f32 0.0, %v1139
    %v1141 = vpop.f32.mrb[0].mxu0
    %1142 = vdwg.mxu0
    %1144 = vrot.lane.b32.xlu0 %v1140, 16
    %v1145 = vpop.permute.xlu0 %1144
    %v1147 = vsel %vm465, %v973, %v1145
    %v1148 = vld [vmem:[%s7] sm:$0xff]
    %v1149 = vld [vmem:[%s7 + $0x8] sm:$0xff]
    %v1150 = vld [vmem:[%s7 + $0x10] sm:$0xff]
    %v1151 = vld [vmem:[%s7 + $0x18] sm:$0xff]
    %v1152 = vld [vmem:[#allocation7] sm:$0x1]
    %v1154 = vlaneseq
    %v1155 = vshrl.u32 %v1154, 7
    %v1156 = vsub.s32 0, %v1155
    %v1157 = vrot.slane %v1152, %v1156
    %v1160 = vsel %vm337, %v805, 0
    %v1163 = vsel %vm337, %v1147, 0
    %1165 = vmatprep.subr.mxu0 0.0
    %1166 = vmatpush1.msra.mxu0 %v1148
    %1167 = vmatprep.subr.mxu0 0.0
    %1168 = vmatpush1.msra.mxu0 %v1149
    %1169 = vmatprep.subr.mxu0 0.0
    %1170 = vmatpush1.msra.mxu0 %v1150
    %1171 = vmatprep.subr.mxu0 0.0
    %1172 = vmatpush1.msra.mxu0 %v1151
    %1173 = vmatprep.subr.mxu0 0.0
    %1174 = vmatpush1.msra.mxu0 0.0
    %1175 = vmatprep.subr.mxu0 0.0
    %1176 = vmatpush1.msra.mxu0 0.0
    %1177 = vmatprep.subr.mxu0 0.0
    %1178 = vmatpush1.msra.mxu0 0.0
    %1179 = vmatprep.subr.mxu0 0.0
    %1180 = vmatpush1.msra.mxu0 0.0
    %1181 = vmatprep.subr.mxu0 0.0
    %1182 = vmatpush1.msra.mxu0 0.0
    %1183 = vmatprep.subr.mxu0 0.0
    %1184 = vmatpush1.msra.mxu0 0.0
    %1185 = vmatprep.subr.mxu0 0.0
    %1186 = vmatpush1.msra.mxu0 0.0
    %1187 = vmatprep.subr.mxu0 0.0
    %1188 = vmatpush1.msra.mxu0 0.0
    %1189 = vmatprep.subr.mxu0 0.0
    %1190 = vmatpush1.msra.mxu0 0.0
    %1191 = vmatprep.subr.mxu0 0.0
    %1192 = vmatpush1.msra.mxu0 0.0
    %1193 = vmatprep.subr.mxu0 0.0
    %1194 = vmatpush1.msra.mxu0 0.0
    %1195 = vmatprep.subr.mxu0 0.0
    %1196 = vmatpush1.msra.mxu0 0.0
    %1197 = vmatprep.subr.mxu0 0.0
    %1198 = vmatpush1.msra.mxu0 0.0
    %1199 = vmatprep.subr.mxu0 0.0
    %1200 = vmatpush1.msra.mxu0 0.0
    %1201 = vmatprep.subr.mxu0 0.0
    %1202 = vmatpush1.msra.mxu0 0.0
    %1203 = vmatprep.subr.mxu0 0.0
    %1204 = vmatpush1.msra.mxu0 0.0
    %1205 = vmatprep.subr.mxu0 0.0
    %1206 = vmatpush1.msra.mxu0 0.0
    %1207 = vmatprep.subr.mxu0 0.0
    %1208 = vmatpush1.msra.mxu0 0.0
    %1209 = vmatprep.subr.mxu0 0.0
    %1210 = vmatpush1.msra.mxu0 0.0
    %1211 = vmatprep.subr.mxu0 0.0
    %1212 = vmatpush1.msra.mxu0 0.0
    %1213 = vmatprep.subr.mxu0 0.0
    %1214 = vmatpush1.msra.mxu0 0.0
    %1215 = vmatprep.subr.mxu0 0.0
    %1216 = vmatpush1.msra.mxu0 0.0
    %1217 = vmatprep.subr.mxu0 0.0
    %1218 = vmatpush1.msra.mxu0 0.0
    %1219 = vmatprep.subr.mxu0 0.0
    %1220 = vmatpush1.msra.mxu0 0.0
    %1221 = vmatprep.subr.mxu0 0.0
    %1222 = vmatpush1.msra.mxu0 0.0
    %1223 = vmatprep.subr.mxu0 0.0
    %1224 = vmatpush1.msra.mxu0 0.0
    %1225 = vmatprep.subr.mxu0 0.0
    %1226 = vmatpush1.msra.mxu0 0.0
    %1227 = vmatprep.subr.mxu0 0.0
    %1228 = vmatpush1.msra.mxu0 0.0
    %1229 = vmatprep.mubr.f32.mxu0 0.0
    %1230 = vmatmul.mubr.f32.gmra.mrb[0].mxu0 %v1160
    %v1231 = vpop.f32.mrb[0].mxu0
    %v1232 = vadd.f32 %v1157, %v1231
    %v1233 = vpop.f32.mrb[0].mxu0
    %1234 = vmatprep.mubr.f32.mxu0 0.0
    %1235 = vmatmul.mubr.f32.gmra.mrb[0].mxu0 %v1163
    %v1236 = vpop.f32.mrb[0].mxu0
    %v1237 = vadd.f32 %v1157, %v1236
    %v1238 = vpop.f32.mrb[0].mxu0
    %1239 = vdwg.mxu0
    %v1240 = vmax.f32 %v1232, 0.0
    %v1241 = vmax.f32 %v1237, 0.0
    %v1242 = vld [vmem:[#allocation10] sm:$0xff]
    %v1243 = vld [vmem:[#allocation10 + $0x8] sm:$0xff]
    %v1244 = vld [vmem:[#allocation10 + $0x10] sm:$0xff]
    %v1245 = vld [vmem:[#allocation10 + $0x18] sm:$0xff]
    %v1246 = vld [vmem:[#allocation11] sm:$0xff]
    %v1247 = vld [vmem:[#allocation11 + $0x8] sm:$0xff]
    %v1248 = vld [vmem:[#allocation11 + $0x10] sm:$0xff]
    %v1249 = vld [vmem:[#allocation11 + $0x18] sm:$0xff]
    %v1250 = vld [vmem:[#allocation13] sm:$0xff]
    %v1251 = vld [vmem:[#allocation13 + $0x8] sm:$0xff]
    %v1252 = vld [vmem:[#allocation13 + $0x10] sm:$0xff]
    %v1253 = vld [vmem:[#allocation13 + $0x18] sm:$0xff]
    %v1255 = vsel %vm337, %v1240, 0
    %v1258 = vsel %vm337, %v1241, 0
    %1260 = vmatprep.subr.mxu0 0.0
    %1261 = vmatpush1.msra.mxu0 %v1242
    %1262 = vmatprep.subr.mxu0 0.0
    %1263 = vmatpush1.msra.mxu0 %v1243
    %1264 = vmatprep.subr.mxu0 0.0
    %1265 = vmatpush1.msra.mxu0 %v1244
    %1266 = vmatprep.subr.mxu0 0.0
    %1267 = vmatpush1.msra.mxu0 %v1245
    %1268 = vmatprep.subr.mxu0 0.0
    %1269 = vmatpush1.msra.mxu0 0.0
    %1270 = vmatprep.subr.mxu0 0.0
    %1271 = vmatpush1.msra.mxu0 0.0
    %1272 = vmatprep.subr.mxu0 0.0
    %1273 = vmatpush1.msra.mxu0 0.0
    %1274 = vmatprep.subr.mxu0 0.0
    %1275 = vmatpush1.msra.mxu0 0.0
    %1276 = vmatprep.subr.mxu0 0.0
    %1277 = vmatpush1.msra.mxu0 0.0
    %1278 = vmatprep.subr.mxu0 0.0
    %1279 = vmatpush1.msra.mxu0 0.0
    %1280 = vmatprep.subr.mxu0 0.0
    %1281 = vmatpush1.msra.mxu0 0.0
    %1282 = vmatprep.subr.mxu0 0.0
    %1283 = vmatpush1.msra.mxu0 0.0
    %1284 = vmatprep.subr.mxu0 0.0
    %1285 = vmatpush1.msra.mxu0 0.0
    %1286 = vmatprep.subr.mxu0 0.0
    %1287 = vmatpush1.msra.mxu0 0.0
    %1288 = vmatprep.subr.mxu0 0.0
    %1289 = vmatpush1.msra.mxu0 0.0
    %1290 = vmatprep.subr.mxu0 0.0
    %1291 = vmatpush1.msra.mxu0 0.0
    %1292 = vmatprep.subr.mxu0 0.0
    %1293 = vmatpush1.msra.mxu0 0.0
    %1294 = vmatprep.subr.mxu0 0.0
    %1295 = vmatpush1.msra.mxu0 0.0
    %1296 = vmatprep.subr.mxu0 0.0
    %1297 = vmatpush1.msra.mxu0 0.0
    %1298 = vmatprep.subr.mxu0 0.0
    %1299 = vmatpush1.msra.mxu0 0.0
    %1300 = vmatprep.subr.mxu0 0.0
    %1301 = vmatpush1.msra.mxu0 0.0
    %1302 = vmatprep.subr.mxu0 0.0
    %1303 = vmatpush1.msra.mxu0 0.0
    %1304 = vmatprep.subr.mxu0 0.0
    %1305 = vmatpush1.msra.mxu0 0.0
    %1306 = vmatprep.subr.mxu0 0.0
    %1307 = vmatpush1.msra.mxu0 0.0
    %1308 = vmatprep.subr.mxu0 0.0
    %1309 = vmatpush1.msra.mxu0 0.0
    %1310 = vmatprep.subr.mxu0 0.0
    %1311 = vmatpush1.msra.mxu0 0.0
    %1312 = vmatprep.subr.mxu0 0.0
    %1313 = vmatpush1.msra.mxu0 0.0
    %1314 = vmatprep.subr.mxu0 0.0
    %1315 = vmatpush1.msra.mxu0 0.0
    %1316 = vmatprep.subr.mxu0 0.0
    %1317 = vmatpush1.msra.mxu0 0.0
    %1318 = vmatprep.subr.mxu0 0.0
    %1319 = vmatpush1.msra.mxu0 0.0
    %1320 = vmatprep.subr.mxu0 0.0
    %1321 = vmatpush1.msra.mxu0 0.0
    %1322 = vmatprep.subr.mxu0 0.0
    %1323 = vmatpush1.msra.mxu0 0.0
    %1324 = vmatprep.mubr.f32.mxu0 0.0
    %1325 = vmatmul.mubr.f32.gmra.mrb[0].mxu0 %v1255
    %v1326 = vpop.f32.mrb[0].mxu0
    %v1327 = vadd.f32 0.0, %v1326
    %v1328 = vpop.f32.mrb[0].mxu0
    %1329 = vmatprep.mubr.f32.mxu0 0.0
    %1330 = vmatmul.mubr.f32.gmra.mrb[0].mxu0 %v1258
    %v1331 = vpop.f32.mrb[0].mxu0
    %v1332 = vadd.f32 0.0, %v1331
    %v1333 = vpop.f32.mrb[0].mxu0
    %1334 = vdwg.mxu0
    %v1336 = vsel %vm337, %v331, 0
    %v1339 = vsel %vm337, %v332, 0
    %1341 = vmatprep.subr.mxu0 0.0
    %1342 = vmatpush1.msra.mxu0 %v1246
    %1343 = vmatprep.subr.mxu0 0.0
    %1344 = vmatpush1.msra.mxu0 %v1247
    %1345 = vmatprep.subr.mxu0 0.0
    %1346 = vmatpush1.msra.mxu0 %v1248
    %1347 = vmatprep.subr.mxu0 0.0
    %1348 = vmatpush1.msra.mxu0 %v1249
    %1349 = vmatprep.subr.mxu0 0.0
    %1350 = vmatpush1.msra.mxu0 0.0
    %1351 = vmatprep.subr.mxu0 0.0
    %1352 = vmatpush1.msra.mxu0 0.0
    %1353 = vmatprep.subr.mxu0 0.0
    %1354 = vmatpush1.msra.mxu0 0.0
    %1355 = vmatprep.subr.mxu0 0.0
    %1356 = vmatpush1.msra.mxu0 0.0
    %1357 = vmatprep.subr.mxu0 0.0
    %1358 = vmatpush1.msra.mxu0 0.0
    %1359 = vmatprep.subr.mxu0 0.0
    %1360 = vmatpush1.msra.mxu0 0.0
    %1361 = vmatprep.subr.mxu0 0.0
    %1362 = vmatpush1.msra.mxu0 0.0
    %1363 = vmatprep.subr.mxu0 0.0
    %1364 = vmatpush1.msra.mxu0 0.0
    %1365 = vmatprep.subr.mxu0 0.0
    %1366 = vmatpush1.msra.mxu0 0.0
    %1367 = vmatprep.subr.mxu0 0.0
    %1368 = vmatpush1.msra.mxu0 0.0
    %1369 = vmatprep.subr.mxu0 0.0
    %1370 = vmatpush1.msra.mxu0 0.0
    %1371 = vmatprep.subr.mxu0 0.0
    %1372 = vmatpush1.msra.mxu0 0.0
    %1373 = vmatprep.subr.mxu0 0.0
    %1374 = vmatpush1.msra.mxu0 0.0
    %1375 = vmatprep.subr.mxu0 0.0
    %1376 = vmatpush1.msra.mxu0 0.0
    %1377 = vmatprep.subr.mxu0 0.0
    %1378 = vmatpush1.msra.mxu0 0.0
    %1379 = vmatprep.subr.mxu0 0.0
    %1380 = vmatpush1.msra.mxu0 0.0
    %1381 = vmatprep.subr.mxu0 0.0
    %1382 = vmatpush1.msra.mxu0 0.0
    %1383 = vmatprep.subr.mxu0 0.0
    %1384 = vmatpush1.msra.mxu0 0.0
    %1385 = vmatprep.subr.mxu0 0.0
    %1386 = vmatpush1.msra.mxu0 0.0
    %1387 = vmatprep.subr.mxu0 0.0
    %1388 = vmatpush1.msra.mxu0 0.0
    %1389 = vmatprep.subr.mxu0 0.0
    %1390 = vmatpush1.msra.mxu0 0.0
    %1391 = vmatprep.subr.mxu0 0.0
    %1392 = vmatpush1.msra.mxu0 0.0
    %1393 = vmatprep.subr.mxu0 0.0
    %1394 = vmatpush1.msra.mxu0 0.0
    %1395 = vmatprep.subr.mxu0 0.0
    %1396 = vmatpush1.msra.mxu0 0.0
    %1397 = vmatprep.subr.mxu0 0.0
    %1398 = vmatpush1.msra.mxu0 0.0
    %1399 = vmatprep.subr.mxu0 0.0
    %1400 = vmatpush1.msra.mxu0 0.0
    %1401 = vmatprep.subr.mxu0 0.0
    %1402 = vmatpush1.msra.mxu0 0.0
    %1403 = vmatprep.subr.mxu0 0.0
    %1404 = vmatpush1.msra.mxu0 0.0
    %1405 = vmatprep.mubr.f32.mxu0 0.0
    %1406 = vmatmul.mubr.f32.gmra.mrb[0].mxu0 %v1336
    %v1407 = vpop.f32.mrb[0].mxu0
    %v1408 = vadd.f32 0.0, %v1407
    %v1409 = vpop.f32.mrb[0].mxu0
    %1410 = vmatprep.mubr.f32.mxu0 0.0
    %1411 = vmatmul.mubr.f32.gmra.mrb[0].mxu0 %v1339
    %v1412 = vpop.f32.mrb[0].mxu0
    %v1413 = vadd.f32 0.0, %v1412
    %v1414 = vpop.f32.mrb[0].mxu0
    %1415 = vdwg.mxu0
    %v1416 = vadd.f32 %v1327, %v1408
    %v1417 = vadd.f32 %v1332, %v1413
    %v1418 = vxor.u32 %v1416, 2147483648
    %v1419 = vxor.u32 %v1417, 2147483648
    %v1420 = vmul.f32 %v1418, 1.442695
    %v1421 = vpow.pop %v1420
    %v1422 = vmul.f32 %v1419, 1.442695
    %v1423 = vpow.pop %v1422
    %v1424 = vadd.f32 %v1421, 1.0
    %v1425 = vadd.f32 %v1423, 1.0
    %v1426 = vrcp.pop %v1424
    %v1427 = vmul.f32 1.0, %v1426
    %v1428 = vrcp.pop %v1425
    %v1429 = vmul.f32 1.0, %v1428
    %v1430 = vsub.f32 %v1416, 2.0
    %v1431 = vsub.f32 %v1417, 2.0
    %v1432 = vxor.u32 %v1430, 2147483648
    %v1433 = vxor.u32 %v1431, 2147483648
    %v1434 = vmul.f32 %v1432, 1.442695
    %v1435 = vpow.pop %v1434
    %v1436 = vmul.f32 %v1433, 1.442695
    %v1437 = vpow.pop %v1436
    %v1438 = vadd.f32 %v1435, 1.0
    %v1439 = vadd.f32 %v1437, 1.0
    %v1440 = vrcp.pop %v1438
    %v1441 = vmul.f32 1.0, %v1440
    %v1442 = vrcp.pop %v1439
    %v1443 = vmul.f32 1.0, %v1442
    %v1444 = vmul.f32 %v1427, %v331
    %v1445 = vmul.f32 %v1429, %v332
    %v1447 = vsel %vm337, %v1444, 0
    %v1450 = vsel %vm337, %v1445, 0
    %1452 = vmatprep.subr.mxu0 0.0
    %1453 = vmatpush1.msra.mxu0 %v1250
    %1454 = vmatprep.subr.mxu0 0.0
    %1455 = vmatpush1.msra.mxu0 %v1251
    %1456 = vmatprep.subr.mxu0 0.0
    %1457 = vmatpush1.msra.mxu0 %v1252
    %1458 = vmatprep.subr.mxu0 0.0
    %1459 = vmatpush1.msra.mxu0 %v1253
    %1460 = vmatprep.subr.mxu0 0.0
    %1461 = vmatpush1.msra.mxu0 0.0
    %1462 = vmatprep.subr.mxu0 0.0
    %1463 = vmatpush1.msra.mxu0 0.0
    %1464 = vmatprep.subr.mxu0 0.0
    %1465 = vmatpush1.msra.mxu0 0.0
    %1466 = vmatprep.subr.mxu0 0.0
    %1467 = vmatpush1.msra.mxu0 0.0
    %1468 = vmatprep.subr.mxu0 0.0
    %1469 = vmatpush1.msra.mxu0 0.0
    %1470 = vmatprep.subr.mxu0 0.0
    %1471 = vmatpush1.msra.mxu0 0.0
    %1472 = vmatprep.subr.mxu0 0.0
    %1473 = vmatpush1.msra.mxu0 0.0
    %1474 = vmatprep.subr.mxu0 0.0
    %1475 = vmatpush1.msra.mxu0 0.0
    %1476 = vmatprep.subr.mxu0 0.0
    %1477 = vmatpush1.msra.mxu0 0.0
    %1478 = vmatprep.subr.mxu0 0.0
    %1479 = vmatpush1.msra.mxu0 0.0
    %1480 = vmatprep.subr.mxu0 0.0
    %1481 = vmatpush1.msra.mxu0 0.0
    %1482 = vmatprep.subr.mxu0 0.0
    %1483 = vmatpush1.msra.mxu0 0.0
    %1484 = vmatprep.subr.mxu0 0.0
    %1485 = vmatpush1.msra.mxu0 0.0
    %1486 = vmatprep.subr.mxu0 0.0
    %1487 = vmatpush1.msra.mxu0 0.0
    %1488 = vmatprep.subr.mxu0 0.0
    %1489 = vmatpush1.msra.mxu0 0.0
    %1490 = vmatprep.subr.mxu0 0.0
    %1491 = vmatpush1.msra.mxu0 0.0
    %1492 = vmatprep.subr.mxu0 0.0
    %1493 = vmatpush1.msra.mxu0 0.0
    %1494 = vmatprep.subr.mxu0 0.0
    %1495 = vmatpush1.msra.mxu0 0.0
    %1496 = vmatprep.subr.mxu0 0.0
    %1497 = vmatpush1.msra.mxu0 0.0
    %1498 = vmatprep.subr.mxu0 0.0
    %1499 = vmatpush1.msra.mxu0 0.0
    %1500 = vmatprep.subr.mxu0 0.0
    %1501 = vmatpush1.msra.mxu0 0.0
    %1502 = vmatprep.subr.mxu0 0.0
    %1503 = vmatpush1.msra.mxu0 0.0
    %1504 = vmatprep.subr.mxu0 0.0
    %1505 = vmatpush1.msra.mxu0 0.0
    %1506 = vmatprep.subr.mxu0 0.0
    %1507 = vmatpush1.msra.mxu0 0.0
    %1508 = vmatprep.subr.mxu0 0.0
    %1509 = vmatpush1.msra.mxu0 0.0
    %1510 = vmatprep.subr.mxu0 0.0
    %1511 = vmatpush1.msra.mxu0 0.0
    %1512 = vmatprep.subr.mxu0 0.0
    %1513 = vmatpush1.msra.mxu0 0.0
    %1514 = vmatprep.subr.mxu0 0.0
    %1515 = vmatpush1.msra.mxu0 0.0
    %1516 = vmatprep.mubr.f32.mxu0 0.0
    %1517 = vmatmul.mubr.f32.gmra.mrb[0].mxu0 %v1447
    %v1518 = vpop.f32.mrb[0].mxu0
    %v1519 = vadd.f32 0.0, %v1518
    %v1520 = vpop.f32.mrb[0].mxu0
    %1521 = vmatprep.mubr.f32.mxu0 0.0
    %1522 = vmatmul.mubr.f32.gmra.mrb[0].mxu0 %v1450
    %v1523 = vpop.f32.mrb[0].mxu0
    %v1524 = vadd.f32 0.0, %v1523
    %v1525 = vpop.f32.mrb[0].mxu0
    %1526 = vdwg.mxu0
    %1529 = vrot.lane.b32.xlu0 %v1519, 64
    %v1530 = vpop.permute.xlu0 %1529
    %1531 = vrot.lane.b32.xlu0 %v1524, 64
    %v1532 = vpop.permute.xlu0 %1531
    %v1535 = vadd.f32 %v1327, %v1530
    %v1536 = vadd.f32 %v1332, %v1532
    %v1537 = vtanh.pop %v1535
    %v1538 = vtanh.pop %v1536
    %v1539 = vsub.f32 1.0, %v1441
    %v1540 = vsub.f32 1.0, %v1443
    %1541 = vrot.lane.b32.xlu0 %v331, 32
    %v1542 = vpop.permute.xlu0 %1541
    %1543 = vrot.lane.b32.xlu0 %v332, 32
    %v1544 = vpop.permute.xlu0 %1543
    %v1547 = vmul.f32 %v1539, %v1542
    %v1548 = vmul.f32 %v1540, %v1544
    %1551 = vrot.lane.b32.xlu0 %v1537, 96
    %v1552 = vpop.permute.xlu0 %1551
    %1553 = vrot.lane.b32.xlu0 %v1538, 96
    %v1554 = vpop.permute.xlu0 %1553
    %v1557 = vmul.f32 %v1441, %v1552
    %v1558 = vmul.f32 %v1443, %v1554
    %v1559 = vadd.f32 %v1547, %v1557
    %v1560 = vadd.f32 %v1548, %v1558
    %1563 = vrot.lane.b32.xlu0 %v1559, 96
    %v1564 = vpop.permute.xlu0 %1563
    %1565 = vrot.lane.b32.xlu0 %v1560, 96
    %v1566 = vpop.permute.xlu0 %1565
    %v1569 = vsel %vm337, %v1564, 0.0
    %1570 = vadd.xlane.f32.xlu0 %v1569
    %v1571 = vpop.xlane.xlu0 %1570
    %v1572 = vsel %vm337, %v1566, 0.0
    %1573 = vadd.xlane.f32.xlu0 %v1572
    %v1574 = vpop.xlane.xlu0 %1573
    %v1575 = vmul.f32 %v1571, %v344
    %v1576 = vmul.f32 %v1574, %v344
    %v1577 = vsub.f32 %v1559, %v1575
    %v1578 = vsub.f32 %v1560, %v1576
    %v1579 = vmul.f32 %v1577, %v1577
    %v1580 = vmul.f32 %v1578, %v1578
    %1583 = vrot.lane.b32.xlu0 %v1579, 96
    %v1584 = vpop.permute.xlu0 %1583
    %1585 = vrot.lane.b32.xlu0 %v1580, 96
    %v1586 = vpop.permute.xlu0 %1585
    %v1589 = vsel %vm337, %v1584, 0.0
    %1590 = vadd.xlane.f32.xlu0 %v1589
    %v1591 = vpop.xlane.xlu0 %1590
    %v1592 = vsel %vm337, %v1586, 0.0
    %1593 = vadd.xlane.f32.xlu0 %v1592
    %v1594 = vpop.xlane.xlu0 %1593
    %v1595 = vmul.f32 %v1591, %v344
    %v1596 = vmul.f32 %v1594, %v344
    %v1597 = vadd.f32 %v1595, 1e-05
    %v1598 = vadd.f32 %v1596, 1e-05
    %v1599 = vrsqrt.pop %v1597
    %v1600 = vrsqrt.pop %v1598
    %v1601 = vmul.f32 %v1577, %v1599
    %v1602 = vmul.f32 %v1578, %v1600
    %v1603 = vlaneseq
    %v1604 = vshrl.u32 %v1603, 7
    %v1605 = vsub.s32 2, %v1604
    %v1606 = vrot.slane %v336, %v1605
    %1608 = vrot.lane.b32.xlu0 %v1606, 32
    %v1609 = vpop.permute.xlu0 %1608
    %v1611 = vmul.f32 %v1601, %v1609
    %v1612 = vmul.f32 %v1602, %v1609
    %v1613 = vlaneseq
    %v1614 = vshrl.u32 %v1613, 7
    %v1615 = vsub.s32 3, %v1614
    %v1616 = vrot.slane %v336, %v1615
    %1618 = vrot.lane.b32.xlu0 %v1616, 32
    %v1619 = vpop.permute.xlu0 %1618
    %v1621 = vadd.f32 %v1611, %v1619
    %v1622 = vadd.f32 %v1612, %v1619
    %v1623 = vld [vmem:[%s9] sm:$0xff]
    %v1624 = vld [vmem:[%s9 + $0x8] sm:$0xff]
    %v1625 = vld [vmem:[%s9 + $0x10] sm:$0xff]
    %v1626 = vld [vmem:[%s9 + $0x18] sm:$0xff]
    %v1627 = vld [vmem:[#allocation8] sm:$0x1]
    %v1629 = vlaneseq
    %v1630 = vshrl.u32 %v1629, 7
    %v1631 = vsub.s32 0, %v1630
    %v1632 = vrot.slane %v1627, %v1631
    %1636 = vrot.lane.b32.xlu0 %v1621, 96
    %v1637 = vpop.permute.xlu0 %1636
    %1638 = vrot.lane.b32.xlu0 %v1622, 96
    %v1639 = vpop.permute.xlu0 %1638
    %v1640 = vsel %vm337, %v1637, 0
    %v1642 = vsel %vm337, %v1639, 0
    %1644 = vmatprep.subr.mxu0 0.0
    %1645 = vmatpush1.msra.mxu0 %v1623
    %1646 = vmatprep.subr.mxu0 0.0
    %1647 = vmatpush1.msra.mxu0 %v1624
    %1648 = vmatprep.subr.mxu0 0.0
    %1649 = vmatpush1.msra.mxu0 %v1625
    %1650 = vmatprep.subr.mxu0 0.0
    %1651 = vmatpush1.msra.mxu0 %v1626
    %1652 = vmatprep.subr.mxu0 0.0
    %1653 = vmatpush1.msra.mxu0 0.0
    %1654 = vmatprep.subr.mxu0 0.0
    %1655 = vmatpush1.msra.mxu0 0.0
    %1656 = vmatprep.subr.mxu0 0.0
    %1657 = vmatpush1.msra.mxu0 0.0
    %1658 = vmatprep.subr.mxu0 0.0
    %1659 = vmatpush1.msra.mxu0 0.0
    %1660 = vmatprep.subr.mxu0 0.0
    %1661 = vmatpush1.msra.mxu0 0.0
    %1662 = vmatprep.subr.mxu0 0.0
    %1663 = vmatpush1.msra.mxu0 0.0
    %1664 = vmatprep.subr.mxu0 0.0
    %1665 = vmatpush1.msra.mxu0 0.0
    %1666 = vmatprep.subr.mxu0 0.0
    %1667 = vmatpush1.msra.mxu0 0.0
    %1668 = vmatprep.subr.mxu0 0.0
    %1669 = vmatpush1.msra.mxu0 0.0
    %1670 = vmatprep.subr.mxu0 0.0
    %1671 = vmatpush1.msra.mxu0 0.0
    %1672 = vmatprep.subr.mxu0 0.0
    %1673 = vmatpush1.msra.mxu0 0.0
    %1674 = vmatprep.subr.mxu0 0.0
    %1675 = vmatpush1.msra.mxu0 0.0
    %1676 = vmatprep.subr.mxu0 0.0
    %1677 = vmatpush1.msra.mxu0 0.0
    %1678 = vmatprep.subr.mxu0 0.0
    %1679 = vmatpush1.msra.mxu0 0.0
    %1680 = vmatprep.subr.mxu0 0.0
    %1681 = vmatpush1.msra.mxu0 0.0
    %1682 = vmatprep.subr.mxu0 0.0
    %1683 = vmatpush1.msra.mxu0 0.0
    %1684 = vmatprep.subr.mxu0 0.0
    %1685 = vmatpush1.msra.mxu0 0.0
    %1686 = vmatprep.subr.mxu0 0.0
    %1687 = vmatpush1.msra.mxu0 0.0
    %1688 = vmatprep.subr.mxu0 0.0
    %1689 = vmatpush1.msra.mxu0 0.0
    %1690 = vmatprep.subr.mxu0 0.0
    %1691 = vmatpush1.msra.mxu0 0.0
    %1692 = vmatprep.subr.mxu0 0.0
    %1693 = vmatpush1.msra.mxu0 0.0
    %1694 = vmatprep.subr.mxu0 0.0
    %1695 = vmatpush1.msra.mxu0 0.0
    %1696 = vmatprep.subr.mxu0 0.0
    %1697 = vmatpush1.msra.mxu0 0.0
    %1698 = vmatprep.subr.mxu0 0.0
    %1699 = vmatpush1.msra.mxu0 0.0
    %1700 = vmatprep.subr.mxu0 0.0
    %1701 = vmatpush1.msra.mxu0 0.0
    %1702 = vmatprep.subr.mxu0 0.0
    %1703 = vmatpush1.msra.mxu0 0.0
    %1704 = vmatprep.subr.mxu0 0.0
    %1705 = vmatpush1.msra.mxu0 0.0
    %1706 = vmatprep.subr.mxu0 0.0
    %1707 = vmatpush1.msra.mxu0 0.0
    %1708 = vmatprep.mubr.f32.mxu0 0.0
    %1709 = vmatmul.mubr.f32.gmra.mrb[0].mxu0 %v1640
    %v1710 = vpop.f32.mrb[0].mxu0
    %v1711 = vadd.f32 %v1632, %v1710
    %v1712 = vpop.f32.mrb[0].mxu0
    %1713 = vmatprep.mubr.f32.mxu0 0.0
    %1714 = vmatmul.mubr.f32.gmra.mrb[0].mxu0 %v1642
    %v1715 = vpop.f32.mrb[0].mxu0
    %v1716 = vadd.f32 %v1632, %v1715
    %v1717 = vpop.f32.mrb[0].mxu0
    %1718 = vdwg.mxu0
    %v1719 = vmax.f32 %v1711, 0.0
    %v1720 = vmax.f32 %v1716, 0.0
    %v1721 = vld [vmem:[%s14] sm:$0xff]
    %v1722 = vld [vmem:[%s14 + $0x8] sm:$0xff]
    %v1723 = vld [vmem:[%s14 + $0x10] sm:$0xff]
    %v1724 = vld [vmem:[%s14 + $0x18] sm:$0xff]
    %v1725 = vld [vmem:[#allocation14] sm:$0xff]
    %v1726 = vld [vmem:[#allocation14 + $0x8] sm:$0xff]
    %v1727 = vld [vmem:[#allocation14 + $0x10] sm:$0xff]
    %v1728 = vld [vmem:[#allocation14 + $0x18] sm:$0xff]
    %v1729 = vld [vmem:[#allocation16] sm:$0xff]
    %v1730 = vld [vmem:[#allocation16 + $0x8] sm:$0xff]
    %v1731 = vld [vmem:[#allocation16 + $0x10] sm:$0xff]
    %v1732 = vld [vmem:[#allocation16 + $0x18] sm:$0xff]
    %v1734 = vsel %vm337, %v1719, 0
    %v1737 = vsel %vm337, %v1720, 0
    %1739 = vmatprep.subr.mxu0 0.0
    %1740 = vmatpush1.msra.mxu0 %v1721
    %1741 = vmatprep.subr.mxu0 0.0
    %1742 = vmatpush1.msra.mxu0 %v1722
    %1743 = vmatprep.subr.mxu0 0.0
    %1744 = vmatpush1.msra.mxu0 %v1723
    %1745 = vmatprep.subr.mxu0 0.0
    %1746 = vmatpush1.msra.mxu0 %v1724
    %1747 = vmatprep.subr.mxu0 0.0
    %1748 = vmatpush1.msra.mxu0 0.0
    %1749 = vmatprep.subr.mxu0 0.0
    %1750 = vmatpush1.msra.mxu0 0.0
    %1751 = vmatprep.subr.mxu0 0.0
    %1752 = vmatpush1.msra.mxu0 0.0
    %1753 = vmatprep.subr.mxu0 0.0
    %1754 = vmatpush1.msra.mxu0 0.0
    %1755 = vmatprep.subr.mxu0 0.0
    %1756 = vmatpush1.msra.mxu0 0.0
    %1757 = vmatprep.subr.mxu0 0.0
    %1758 = vmatpush1.msra.mxu0 0.0
    %1759 = vmatprep.subr.mxu0 0.0
    %1760 = vmatpush1.msra.mxu0 0.0
    %1761 = vmatprep.subr.mxu0 0.0
    %1762 = vmatpush1.msra.mxu0 0.0
    %1763 = vmatprep.subr.mxu0 0.0
    %1764 = vmatpush1.msra.mxu0 0.0
    %1765 = vmatprep.subr.mxu0 0.0
    %1766 = vmatpush1.msra.mxu0 0.0
    %1767 = vmatprep.subr.mxu0 0.0
    %1768 = vmatpush1.msra.mxu0 0.0
    %1769 = vmatprep.subr.mxu0 0.0
    %1770 = vmatpush1.msra.mxu0 0.0
    %1771 = vmatprep.subr.mxu0 0.0
    %1772 = vmatpush1.msra.mxu0 0.0
    %1773 = vmatprep.subr.mxu0 0.0
    %1774 = vmatpush1.msra.mxu0 0.0
    %1775 = vmatprep.subr.mxu0 0.0
    %1776 = vmatpush1.msra.mxu0 0.0
    %1777 = vmatprep.subr.mxu0 0.0
    %1778 = vmatpush1.msra.mxu0 0.0
    %1779 = vmatprep.subr.mxu0 0.0
    %1780 = vmatpush1.msra.mxu0 0.0
    %1781 = vmatprep.subr.mxu0 0.0
    %1782 = vmatpush1.msra.mxu0 0.0
    %1783 = vmatprep.subr.mxu0 0.0
    %1784 = vmatpush1.msra.mxu0 0.0
    %1785 = vmatprep.subr.mxu0 0.0
    %1786 = vmatpush1.msra.mxu0 0.0
    %1787 = vmatprep.subr.mxu0 0.0
    %1788 = vmatpush1.msra.mxu0 0.0
    %1789 = vmatprep.subr.mxu0 0.0
    %1790 = vmatpush1.msra.mxu0 0.0
    %1791 = vmatprep.subr.mxu0 0.0
    %1792 = vmatpush1.msra.mxu0 0.0
    %1793 = vmatprep.subr.mxu0 0.0
    %1794 = vmatpush1.msra.mxu0 0.0
    %1795 = vmatprep.subr.mxu0 0.0
    %1796 = vmatpush1.msra.mxu0 0.0
    %1797 = vmatprep.subr.mxu0 0.0
    %1798 = vmatpush1.msra.mxu0 0.0
    %1799 = vmatprep.subr.mxu0 0.0
    %1800 = vmatpush1.msra.mxu0 0.0
    %1801 = vmatprep.subr.mxu0 0.0
    %1802 = vmatpush1.msra.mxu0 0.0
    %1803 = vmatprep.mubr.f32.mxu0 0.0
    %1804 = vmatmul.mubr.f32.gmra.mrb[0].mxu0 %v1734
    %v1805 = vpop.f32.mrb[0].mxu0
    %v1806 = vadd.f32 0.0, %v1805
    %v1807 = vpop.f32.mrb[0].mxu0
    %1808 = vmatprep.mubr.f32.mxu0 0.0
    %1809 = vmatmul.mubr.f32.gmra.mrb[0].mxu0 %v1737
    %v1810 = vpop.f32.mrb[0].mxu0
    %v1811 = vadd.f32 0.0, %v1810
    %v1812 = vpop.f32.mrb[0].mxu0
    %1813 = vdwg.mxu0
    %v1814 = vsel %vm337, %v1564, 0
    %v1816 = vsel %vm337, %v1566, 0
    %1818 = vmatprep.subr.mxu0 0.0
    %1819 = vmatpush1.msra.mxu0 %v1725
    %1820 = vmatprep.subr.mxu0 0.0
    %1821 = vmatpush1.msra.mxu0 %v1726
    %1822 = vmatprep.subr.mxu0 0.0
    %1823 = vmatpush1.msra.mxu0 %v1727
    %1824 = vmatprep.subr.mxu0 0.0
    %1825 = vmatpush1.msra.mxu0 %v1728
    %1826 = vmatprep.subr.mxu0 0.0
    %1827 = vmatpush1.msra.mxu0 0.0
    %1828 = vmatprep.subr.mxu0 0.0
    %1829 = vmatpush1.msra.mxu0 0.0
    %1830 = vmatprep.subr.mxu0 0.0
    %1831 = vmatpush1.msra.mxu0 0.0
    %1832 = vmatprep.subr.mxu0 0.0
    %1833 = vmatpush1.msra.mxu0 0.0
    %1834 = vmatprep.subr.mxu0 0.0
    %1835 = vmatpush1.msra.mxu0 0.0
    %1836 = vmatprep.subr.mxu0 0.0
    %1837 = vmatpush1.msra.mxu0 0.0
    %1838 = vmatprep.subr.mxu0 0.0
    %1839 = vmatpush1.msra.mxu0 0.0
    %1840 = vmatprep.subr.mxu0 0.0
    %1841 = vmatpush1.msra.mxu0 0.0
    %1842 = vmatprep.subr.mxu0 0.0
    %1843 = vmatpush1.msra.mxu0 0.0
    %1844 = vmatprep.subr.mxu0 0.0
    %1845 = vmatpush1.msra.mxu0 0.0
    %1846 = vmatprep.subr.mxu0 0.0
    %1847 = vmatpush1.msra.mxu0 0.0
    %1848 = vmatprep.subr.mxu0 0.0
    %1849 = vmatpush1.msra.mxu0 0.0
    %1850 = vmatprep.subr.mxu0 0.0
    %1851 = vmatpush1.msra.mxu0 0.0
    %1852 = vmatprep.subr.mxu0 0.0
    %1853 = vmatpush1.msra.mxu0 0.0
    %1854 = vmatprep.subr.mxu0 0.0
    %1855 = vmatpush1.msra.mxu0 0.0
    %1856 = vmatprep.subr.mxu0 0.0
    %1857 = vmatpush1.msra.mxu0 0.0
    %1858 = vmatprep.subr.mxu0 0.0
    %1859 = vmatpush1.msra.mxu0 0.0
    %1860 = vmatprep.subr.mxu0 0.0
    %1861 = vmatpush1.msra.mxu0 0.0
    %1862 = vmatprep.subr.mxu0 0.0
    %1863 = vmatpush1.msra.mxu0 0.0
    %1864 = vmatprep.subr.mxu0 0.0
    %1865 = vmatpush1.msra.mxu0 0.0
    %1866 = vmatprep.subr.mxu0 0.0
    %1867 = vmatpush1.msra.mxu0 0.0
    %1868 = vmatprep.subr.mxu0 0.0
    %1869 = vmatpush1.msra.mxu0 0.0
    %1870 = vmatprep.subr.mxu0 0.0
    %1871 = vmatpush1.msra.mxu0 0.0
    %1872 = vmatprep.subr.mxu0 0.0
    %1873 = vmatpush1.msra.mxu0 0.0
    %1874 = vmatprep.subr.mxu0 0.0
    %1875 = vmatpush1.msra.mxu0 0.0
    %1876 = vmatprep.subr.mxu0 0.0
    %1877 = vmatpush1.msra.mxu0 0.0
    %1878 = vmatprep.subr.mxu0 0.0
    %1879 = vmatpush1.msra.mxu0 0.0
    %1880 = vmatprep.subr.mxu0 0.0
    %1881 = vmatpush1.msra.mxu0 0.0
    %1882 = vmatprep.mubr.f32.mxu0 0.0
    %1883 = vmatmul.mubr.f32.gmra.mrb[0].mxu0 %v1814
    %v1884 = vpop.f32.mrb[0].mxu0
    %v1885 = vadd.f32 0.0, %v1884
    %v1886 = vpop.f32.mrb[0].mxu0
    %1887 = vmatprep.mubr.f32.mxu0 0.0
    %1888 = vmatmul.mubr.f32.gmra.mrb[0].mxu0 %v1816
    %v1889 = vpop.f32.mrb[0].mxu0
    %v1890 = vadd.f32 0.0, %v1889
    %v1891 = vpop.f32.mrb[0].mxu0
    %1892 = vdwg.mxu0
    %v1893 = vadd.f32 %v1806, %v1885
    %v1894 = vadd.f32 %v1811, %v1890
    %v1895 = vxor.u32 %v1893, 2147483648
    %v1896 = vxor.u32 %v1894, 2147483648
    %v1897 = vmul.f32 %v1895, 1.442695
    %v1898 = vpow.pop %v1897
    %v1899 = vmul.f32 %v1896, 1.442695
    %v1900 = vpow.pop %v1899
    %v1901 = vadd.f32 %v1898, 1.0
    %v1902 = vadd.f32 %v1900, 1.0
    %v1903 = vrcp.pop %v1901
    %v1904 = vmul.f32 1.0, %v1903
    %v1905 = vrcp.pop %v1902
    %v1906 = vmul.f32 1.0, %v1905
    %v1907 = vsub.f32 %v1893, 2.0
    %v1908 = vsub.f32 %v1894, 2.0
    %v1909 = vxor.u32 %v1907, 2147483648
    %v1910 = vxor.u32 %v1908, 2147483648
    %v1911 = vmul.f32 %v1909, 1.442695
    %v1912 = vpow.pop %v1911
    %v1913 = vmul.f32 %v1910, 1.442695
    %v1914 = vpow.pop %v1913
    %v1915 = vadd.f32 %v1912, 1.0
    %v1916 = vadd.f32 %v1914, 1.0
    %v1917 = vrcp.pop %v1915
    %v1918 = vmul.f32 1.0, %v1917
    %v1919 = vrcp.pop %v1916
    %v1920 = vmul.f32 1.0, %v1919
    %v1921 = vmul.f32 %v1904, %v1564
    %v1922 = vmul.f32 %v1906, %v1566
    %v1924 = vsel %vm337, %v1921, 0
    %v1927 = vsel %vm337, %v1922, 0
    %1929 = vmatprep.subr.mxu0 0.0
    %1930 = vmatpush1.msra.mxu0 %v1729
    %1931 = vmatprep.subr.mxu0 0.0
    %1932 = vmatpush1.msra.mxu0 %v1730
    %1933 = vmatprep.subr.mxu0 0.0
    %1934 = vmatpush1.msra.mxu0 %v1731
    %1935 = vmatprep.subr.mxu0 0.0
    %1936 = vmatpush1.msra.mxu0 %v1732
    %1937 = vmatprep.subr.mxu0 0.0
    %1938 = vmatpush1.msra.mxu0 0.0
    %1939 = vmatprep.subr.mxu0 0.0
    %1940 = vmatpush1.msra.mxu0 0.0
    %1941 = vmatprep.subr.mxu0 0.0
    %1942 = vmatpush1.msra.mxu0 0.0
    %1943 = vmatprep.subr.mxu0 0.0
    %1944 = vmatpush1.msra.mxu0 0.0
    %1945 = vmatprep.subr.mxu0 0.0
    %1946 = vmatpush1.msra.mxu0 0.0
    %1947 = vmatprep.subr.mxu0 0.0
    %1948 = vmatpush1.msra.mxu0 0.0
    %1949 = vmatprep.subr.mxu0 0.0
    %1950 = vmatpush1.msra.mxu0 0.0
    %1951 = vmatprep.subr.mxu0 0.0
    %1952 = vmatpush1.msra.mxu0 0.0
    %1953 = vmatprep.subr.mxu0 0.0
    %1954 = vmatpush1.msra.mxu0 0.0
    %1955 = vmatprep.subr.mxu0 0.0
    %1956 = vmatpush1.msra.mxu0 0.0
    %1957 = vmatprep.subr.mxu0 0.0
    %1958 = vmatpush1.msra.mxu0 0.0
    %1959 = vmatprep.subr.mxu0 0.0
    %1960 = vmatpush1.msra.mxu0 0.0
    %1961 = vmatprep.subr.mxu0 0.0
    %1962 = vmatpush1.msra.mxu0 0.0
    %1963 = vmatprep.subr.mxu0 0.0
    %1964 = vmatpush1.msra.mxu0 0.0
    %1965 = vmatprep.subr.mxu0 0.0
    %1966 = vmatpush1.msra.mxu0 0.0
    %1967 = vmatprep.subr.mxu0 0.0
    %1968 = vmatpush1.msra.mxu0 0.0
    %1969 = vmatprep.subr.mxu0 0.0
    %1970 = vmatpush1.msra.mxu0 0.0
    %1971 = vmatprep.subr.mxu0 0.0
    %1972 = vmatpush1.msra.mxu0 0.0
    %1973 = vmatprep.subr.mxu0 0.0
    %1974 = vmatpush1.msra.mxu0 0.0
    %1975 = vmatprep.subr.mxu0 0.0
    %1976 = vmatpush1.msra.mxu0 0.0
    %1977 = vmatprep.subr.mxu0 0.0
    %1978 = vmatpush1.msra.mxu0 0.0
    %1979 = vmatprep.subr.mxu0 0.0
    %1980 = vmatpush1.msra.mxu0 0.0
    %1981 = vmatprep.subr.mxu0 0.0
    %1982 = vmatpush1.msra.mxu0 0.0
    %1983 = vmatprep.subr.mxu0 0.0
    %1984 = vmatpush1.msra.mxu0 0.0
    %1985 = vmatprep.subr.mxu0 0.0
    %1986 = vmatpush1.msra.mxu0 0.0
    %1987 = vmatprep.subr.mxu0 0.0
    %1988 = vmatpush1.msra.mxu0 0.0
    %1989 = vmatprep.subr.mxu0 0.0
    %1990 = vmatpush1.msra.mxu0 0.0
    %1991 = vmatprep.subr.mxu0 0.0
    %1992 = vmatpush1.msra.mxu0 0.0
    %1993 = vmatprep.mubr.f32.mxu0 0.0
    %1994 = vmatmul.mubr.f32.gmra.mrb[0].mxu0 %v1924
    %v1995 = vpop.f32.mrb[0].mxu0
    %v1996 = vadd.f32 0.0, %v1995
    %v1997 = vpop.f32.mrb[0].mxu0
    %1998 = vmatprep.mubr.f32.mxu0 0.0
    %1999 = vmatmul.mubr.f32.gmra.mrb[0].mxu0 %v1927
    %v2000 = vpop.f32.mrb[0].mxu0
    %v2001 = vadd.f32 0.0, %v2000
    %v2002 = vpop.f32.mrb[0].mxu0
    %2003 = vdwg.mxu0
    %2006 = vrot.lane.b32.xlu0 %v1996, 64
    %v2007 = vpop.permute.xlu0 %2006
    %2008 = vrot.lane.b32.xlu0 %v2001, 64
    %v2009 = vpop.permute.xlu0 %2008
    %v2012 = vadd.f32 %v1806, %v2007
    %v2013 = vadd.f32 %v1811, %v2009
    %v2014 = vtanh.pop %v2012
    %v2015 = vtanh.pop %v2013
    %v2016 = vsub.f32 1.0, %v1918
    %v2017 = vsub.f32 1.0, %v1920
    %v2018 = vmul.f32 %v2016, %v1559
    %v2019 = vmul.f32 %v2017, %v1560
    %2022 = vrot.lane.b32.xlu0 %v2014, 96
    %v2023 = vpop.permute.xlu0 %2022
    %2024 = vrot.lane.b32.xlu0 %v2015, 96
    %v2025 = vpop.permute.xlu0 %2024
    %v2028 = vmul.f32 %v1918, %v2023
    %v2029 = vmul.f32 %v1920, %v2025
    %v2030 = vadd.f32 %v2018, %v2028
    %v2031 = vadd.f32 %v2019, %v2029
    %s2032 = scalar_lea.vmem [#allocation5], 4
    %v2033 = vld [vmem:[%s2032] sm:$0xf]
    %2036 = vrot.lane.b32.xlu0 %v2030, 96
    %v2037 = vpop.permute.xlu0 %2036
    %2038 = vrot.lane.b32.xlu0 %v2031, 96
    %v2039 = vpop.permute.xlu0 %2038
    %v2042 = vsel %vm337, %v2037, 0.0
    %2043 = vadd.xlane.f32.xlu0 %v2042
    %v2044 = vpop.xlane.xlu0 %2043
    %v2045 = vsel %vm337, %v2039, 0.0
    %2046 = vadd.xlane.f32.xlu0 %v2045
    %v2047 = vpop.xlane.xlu0 %2046
    %v2048 = vmul.f32 %v2044, %v344
    %v2049 = vmul.f32 %v2047, %v344
    %v2050 = vsub.f32 %v2030, %v2048
    %v2051 = vsub.f32 %v2031, %v2049
    %v2052 = vmul.f32 %v2050, %v2050
    %v2053 = vmul.f32 %v2051, %v2051
    %2056 = vrot.lane.b32.xlu0 %v2052, 96
    %v2057 = vpop.permute.xlu0 %2056
    %2058 = vrot.lane.b32.xlu0 %v2053, 96
    %v2059 = vpop.permute.xlu0 %2058
    %v2062 = vsel %vm337, %v2057, 0.0
    %2063 = vadd.xlane.f32.xlu0 %v2062
    %v2064 = vpop.xlane.xlu0 %2063
    %v2065 = vsel %vm337, %v2059, 0.0
    %2066 = vadd.xlane.f32.xlu0 %v2065
    %v2067 = vpop.xlane.xlu0 %2066
    %v2068 = vmul.f32 %v2064, %v344
    %v2069 = vmul.f32 %v2067, %v344
    %v2070 = vadd.f32 %v2068, 1e-05
    %v2071 = vadd.f32 %v2069, 1e-05
    %v2072 = vrsqrt.pop %v2070
    %v2073 = vrsqrt.pop %v2071
    %v2074 = vmul.f32 %v2050, %v2072
    %v2075 = vmul.f32 %v2051, %v2073
    %v2076 = vlaneseq
    %v2077 = vshrl.u32 %v2076, 7
    %v2078 = vsub.s32 0, %v2077
    %v2079 = vrot.slane %v2033, %v2078
    %2081 = vrot.lane.b32.xlu0 %v2079, 32
    %v2082 = vpop.permute.xlu0 %2081
    %v2084 = vmul.f32 %v2074, %v2082
    %v2085 = vmul.f32 %v2075, %v2082
    %v2086 = vlaneseq
    %v2087 = vshrl.u32 %v2086, 7
    %v2088 = vsub.s32 1, %v2087
    %v2089 = vrot.slane %v2033, %v2088
    %2091 = vrot.lane.b32.xlu0 %v2089, 32
    %v2092 = vpop.permute.xlu0 %2091
    %v2094 = vadd.f32 %v2084, %v2092
    %v2095 = vadd.f32 %v2085, %v2092
    %s2096 = scalar_lea.vmem %s6, 32
    %v2097 = vld [vmem:[%s2096] sm:$0xff]
    %v2098 = vld [vmem:[%s2096 + $0x8] sm:$0xff]
    %v2099 = vld [vmem:[%s2096 + $0x10] sm:$0xff]
    %v2100 = vld [vmem:[%s2096 + $0x18] sm:$0xff]
    %2103 = vrot.lane.b32.xlu0 %v2094, 96
    %v2104 = vpop.permute.xlu0 %2103
    %2105 = vrot.lane.b32.xlu0 %v2095, 96
    %v2106 = vpop.permute.xlu0 %2105
    %v2107 = vsel %vm337, %v2104, 0
    %v2109 = vsel %vm337, %v2106, 0
    %2111 = vmatprep.subr.mxu0 0.0
    %2112 = vmatpush1.msra.mxu0 %v2097
    %2113 = vmatprep.subr.mxu0 0.0
    %2114 = vmatpush1.msra.mxu0 %v2098
    %2115 = vmatprep.subr.mxu0 0.0
    %2116 = vmatpush1.msra.mxu0 %v2099
    %2117 = vmatprep.subr.mxu0 0.0
    %2118 = vmatpush1.msra.mxu0 %v2100
    %2119 = vmatprep.subr.mxu0 0.0
    %2120 = vmatpush1.msra.mxu0 0.0
    %2121 = vmatprep.subr.mxu0 0.0
    %2122 = vmatpush1.msra.mxu0 0.0
    %2123 = vmatprep.subr.mxu0 0.0
    %2124 = vmatpush1.msra.mxu0 0.0
    %2125 = vmatprep.subr.mxu0 0.0
    %2126 = vmatpush1.msra.mxu0 0.0
    %2127 = vmatprep.subr.mxu0 0.0
    %2128 = vmatpush1.msra.mxu0 0.0
    %2129 = vmatprep.subr.mxu0 0.0
    %2130 = vmatpush1.msra.mxu0 0.0
    %2131 = vmatprep.subr.mxu0 0.0
    %2132 = vmatpush1.msra.mxu0 0.0
    %2133 = vmatprep.subr.mxu0 0.0
    %2134 = vmatpush1.msra.mxu0 0.0
    %2135 = vmatprep.subr.mxu0 0.0
    %2136 = vmatpush1.msra.mxu0 0.0
    %2137 = vmatprep.subr.mxu0 0.0
    %2138 = vmatpush1.msra.mxu0 0.0
    %2139 = vmatprep.subr.mxu0 0.0
    %2140 = vmatpush1.msra.mxu0 0.0
    %2141 = vmatprep.subr.mxu0 0.0
    %2142 = vmatpush1.msra.mxu0 0.0
    %2143 = vmatprep.subr.mxu0 0.0
    %2144 = vmatpush1.msra.mxu0 0.0
    %2145 = vmatprep.subr.mxu0 0.0
    %2146 = vmatpush1.msra.mxu0 0.0
    %2147 = vmatprep.subr.mxu0 0.0
    %2148 = vmatpush1.msra.mxu0 0.0
    %2149 = vmatprep.subr.mxu0 0.0
    %2150 = vmatpush1.msra.mxu0 0.0
    %2151 = vmatprep.subr.mxu0 0.0
    %2152 = vmatpush1.msra.mxu0 0.0
    %2153 = vmatprep.subr.mxu0 0.0
    %2154 = vmatpush1.msra.mxu0 0.0
    %2155 = vmatprep.subr.mxu0 0.0
    %2156 = vmatpush1.msra.mxu0 0.0
    %2157 = vmatprep.subr.mxu0 0.0
    %2158 = vmatpush1.msra.mxu0 0.0
    %2159 = vmatprep.subr.mxu0 0.0
    %2160 = vmatpush1.msra.mxu0 0.0
    %2161 = vmatprep.subr.mxu0 0.0
    %2162 = vmatpush1.msra.mxu0 0.0
    %2163 = vmatprep.subr.mxu0 0.0
    %2164 = vmatpush1.msra.mxu0 0.0
    %2165 = vmatprep.subr.mxu0 0.0
    %2166 = vmatpush1.msra.mxu0 0.0
    %2167 = vmatprep.subr.mxu0 0.0
    %2168 = vmatpush1.msra.mxu0 0.0
    %2169 = vmatprep.subr.mxu0 0.0
    %2170 = vmatpush1.msra.mxu0 0.0
    %2171 = vmatprep.subr.mxu0 0.0
    %2172 = vmatpush1.msra.mxu0 0.0
    %2173 = vmatprep.subr.mxu0 0.0
    %2174 = vmatpush1.msra.mxu0 0.0
    %2175 = vmatprep.mubr.f32.mxu0 0.0
    %2176 = vmatmul.mubr.f32.gmra.mrb[0].mxu0 %v2107
    %v2177 = vpop.f32.mrb[0].mxu0
    %v2178 = vadd.f32 0.0, %v2177
    %v2179 = vpop.f32.mrb[0].mxu0
    %2180 = vmatprep.mubr.f32.mxu0 0.0
    %2181 = vmatmul.mubr.f32.gmra.mrb[0].mxu0 %v2109
    %v2182 = vpop.f32.mrb[0].mxu0
    %v2183 = vadd.f32 0.0, %v2182
    %v2184 = vpop.f32.mrb[0].mxu0
    %2185 = vdwg.mxu0
    %2187 = vrot.lane.b32.xlu0 %v2178, 96
    %v2188 = vpop.permute.xlu0 %2187
    %v2189 = vsel %vm465, %v2178, 0
    %v2191 = vsel %vm465, %v2188, 0
    %2193 = vmatprep.subr.mxu0 0.0
    %2194 = vmatpush1.xpose.msra.mxu0 %v2191
    %2195 = vmatprep.subr.mxu0 0.0
    %2196 = vmatpush1.xpose.msra.mxu0 0.0
    %2197 = vmatprep.subr.mxu0 0.0
    %2198 = vmatpush1.xpose.msra.mxu0 0.0
    %2199 = vmatprep.subr.mxu0 0.0
    %2200 = vmatpush1.xpose.msra.mxu0 0.0
    %2201 = vmatprep.subr.mxu0 0.0
    %2202 = vmatpush1.xpose.msra.mxu0 0.0
    %2203 = vmatprep.subr.mxu0 0.0
    %2204 = vmatpush1.xpose.msra.mxu0 0.0
    %2205 = vmatprep.subr.mxu0 0.0
    %2206 = vmatpush1.xpose.msra.mxu0 0.0
    %2207 = vmatprep.subr.mxu0 0.0
    %2208 = vmatpush1.xpose.msra.mxu0 0.0
    %2209 = vmatprep.subr.mxu0 0.0
    %2210 = vmatpush1.xpose.msra.mxu0 0.0
    %2211 = vmatprep.subr.mxu0 0.0
    %2212 = vmatpush1.xpose.msra.mxu0 0.0
    %2213 = vmatprep.subr.mxu0 0.0
    %2214 = vmatpush1.xpose.msra.mxu0 0.0
    %2215 = vmatprep.subr.mxu0 0.0
    %2216 = vmatpush1.xpose.msra.mxu0 0.0
    %2217 = vmatprep.subr.mxu0 0.0
    %2218 = vmatpush1.xpose.msra.mxu0 0.0
    %2219 = vmatprep.subr.mxu0 0.0
    %2220 = vmatpush1.xpose.msra.mxu0 0.0
    %2221 = vmatprep.subr.mxu0 0.0
    %2222 = vmatpush1.xpose.msra.mxu0 0.0
    %2223 = vmatprep.subr.mxu0 0.0
    %2224 = vmatpush1.xpose.msra.mxu0 0.0
    %2225 = vmatprep.subr.mxu0 0.0
    %2226 = vmatpush1.xpose.msra.mxu0 0.0
    %2227 = vmatprep.subr.mxu0 0.0
    %2228 = vmatpush1.xpose.msra.mxu0 0.0
    %2229 = vmatprep.subr.mxu0 0.0
    %2230 = vmatpush1.xpose.msra.mxu0 0.0
    %2231 = vmatprep.subr.mxu0 0.0
    %2232 = vmatpush1.xpose.msra.mxu0 0.0
    %2233 = vmatprep.subr.mxu0 0.0
    %2234 = vmatpush1.xpose.msra.mxu0 0.0
    %2235 = vmatprep.subr.mxu0 0.0
    %2236 = vmatpush1.xpose.msra.mxu0 0.0
    %2237 = vmatprep.subr.mxu0 0.0
    %2238 = vmatpush1.xpose.msra.mxu0 0.0
    %2239 = vmatprep.subr.mxu0 0.0
    %2240 = vmatpush1.xpose.msra.mxu0 0.0
    %2241 = vmatprep.subr.mxu0 0.0
    %2242 = vmatpush1.xpose.msra.mxu0 0.0
    %2243 = vmatprep.subr.mxu0 0.0
    %2244 = vmatpush1.xpose.msra.mxu0 0.0
    %2245 = vmatprep.subr.mxu0 0.0
    %2246 = vmatpush1.xpose.msra.mxu0 0.0
    %2247 = vmatprep.subr.mxu0 0.0
    %2248 = vmatpush1.xpose.msra.mxu0 0.0
    %2249 = vmatprep.subr.mxu0 0.0
    %2250 = vmatpush1.xpose.msra.mxu0 0.0
    %2251 = vmatprep.subr.mxu0 0.0
    %2252 = vmatpush1.xpose.msra.mxu0 0.0
    %2253 = vmatprep.subr.mxu0 0.0
    %2254 = vmatpush1.xpose.msra.mxu0 0.0
    %2255 = vmatprep.subr.mxu0 0.0
    %2256 = vmatpush1.xpose.msra.mxu0 0.0
    %2257 = vmatprep.mubr.f32.mxu0 0.0
    %2258 = vmatmul.mubr.f32.gmra.mrb[0].mxu0 %v2189
    %v2259 = vpop.f32.mrb[0].mxu0
    %v2260 = vadd.f32 0.0, %v2259
    %v2261 = vpop.f32.mrb[0].mxu0
    %2262 = vdwg.mxu0
    %v2263 = vmul.f32 %v2260, 0.25
    %v2264 = vadd.f32 %v2263, %v544
    %v2265 = vsel %vm546, %v2264, -inf
    %2266 = vmax.xlane.f32.xlu0 %v2265
    %v2267 = vpop.xlane.xlu0 %2266
    %v2268 = vsub.f32 %v2264, %v2267
    %v2269 = vmul.f32 %v2268, 1.442695
    %v2270 = vpow.pop %v2269
    %v2271 = vsel %vm546, %v2270, 0.0
    %2272 = vadd.xlane.f32.xlu0 %v2271
    %v2273 = vpop.xlane.xlu0 %2272
    %v2274 = vrcp.pop %v2273
    %v2275 = vmul.f32 %v2270, %v2274
    %2276 = vrot.lane.b32.xlu0 %v2178, 64
    %v2277 = vpop.permute.xlu0 %2276
    %v2280 = vsel %vm546, %v2275, 0
    %2282 = vmatprep.subr.mxu0 0.0
    %2283 = vmatpush1.msra.mxu0 %v2277
    %2284 = vmatprep.subr.mxu0 0.0
    %2285 = vmatpush1.msra.mxu0 0.0
    %2286 = vmatprep.subr.mxu0 0.0
    %2287 = vmatpush1.msra.mxu0 0.0
    %2288 = vmatprep.subr.mxu0 0.0
    %2289 = vmatpush1.msra.mxu0 0.0
    %2290 = vmatprep.subr.mxu0 0.0
    %2291 = vmatpush1.msra.mxu0 0.0
    %2292 = vmatprep.subr.mxu0 0.0
    %2293 = vmatpush1.msra.mxu0 0.0
    %2294 = vmatprep.subr.mxu0 0.0
    %2295 = vmatpush1.msra.mxu0 0.0
    %2296 = vmatprep.subr.mxu0 0.0
    %2297 = vmatpush1.msra.mxu0 0.0
    %2298 = vmatprep.subr.mxu0 0.0
    %2299 = vmatpush1.msra.mxu0 0.0
    %2300 = vmatprep.subr.mxu0 0.0
    %2301 = vmatpush1.msra.mxu0 0.0
    %2302 = vmatprep.subr.mxu0 0.0
    %2303 = vmatpush1.msra.mxu0 0.0
    %2304 = vmatprep.subr.mxu0 0.0
    %2305 = vmatpush1.msra.mxu0 0.0
    %2306 = vmatprep.subr.mxu0 0.0
    %2307 = vmatpush1.msra.mxu0 0.0
    %2308 = vmatprep.subr.mxu0 0.0
    %2309 = vmatpush1.msra.mxu0 0.0
    %2310 = vmatprep.subr.mxu0 0.0
    %2311 = vmatpush1.msra.mxu0 0.0
    %2312 = vmatprep.subr.mxu0 0.0
    %2313 = vmatpush1.msra.mxu0 0.0
    %2314 = vmatprep.subr.mxu0 0.0
    %2315 = vmatpush1.msra.mxu0 0.0
    %2316 = vmatprep.subr.mxu0 0.0
    %2317 = vmatpush1.msra.mxu0 0.0
    %2318 = vmatprep.subr.mxu0 0.0
    %2319 = vmatpush1.msra.mxu0 0.0
    %2320 = vmatprep.subr.mxu0 0.0
    %2321 = vmatpush1.msra.mxu0 0.0
    %2322 = vmatprep.subr.mxu0 0.0
    %2323 = vmatpush1.msra.mxu0 0.0
    %2324 = vmatprep.subr.mxu0 0.0
    %2325 = vmatpush1.msra.mxu0 0.0
    %2326 = vmatprep.subr.mxu0 0.0
    %2327 = vmatpush1.msra.mxu0 0.0
    %2328 = vmatprep.subr.mxu0 0.0
    %2329 = vmatpush1.msra.mxu0 0.0
    %2330 = vmatprep.subr.mxu0 0.0
    %2331 = vmatpush1.msra.mxu0 0.0
    %2332 = vmatprep.subr.mxu0 0.0
    %2333 = vmatpush1.msra.mxu0 0.0
    %2334 = vmatprep.subr.mxu0 0.0
    %2335 = vmatpush1.msra.mxu0 0.0
    %2336 = vmatprep.subr.mxu0 0.0
    %2337 = vmatpush1.msra.mxu0 0.0
    %2338 = vmatprep.subr.mxu0 0.0
    %2339 = vmatpush1.msra.mxu0 0.0
    %2340 = vmatprep.subr.mxu0 0.0
    %2341 = vmatpush1.msra.mxu0 0.0
    %2342 = vmatprep.subr.mxu0 0.0
    %2343 = vmatpush1.msra.mxu0 0.0
    %2344 = vmatprep.subr.mxu0 0.0
    %2345 = vmatpush1.msra.mxu0 0.0
    %2346 = vmatprep.mubr.f32.mxu0 0.0
    %2347 = vmatmul.mubr.f32.gmra.mrb[0].mxu0 %v2280
    %v2348 = vpop.f32.mrb[0].mxu0
    %v2349 = vadd.f32 0.0, %v2348
    %v2350 = vpop.f32.mrb[0].mxu0
    %2351 = vdwg.mxu0
    %2352 = vrot.lane.b32.xlu0 %v2178, 112
    %v2353 = vpop.permute.xlu0 %2352
    %2354 = vrot.lane.b32.xlu0 %v2178, 80
    %v2355 = vpop.permute.xlu0 %2354
    %v2356 = vsel %vm465, %v2353, 0
    %v2358 = vsel %vm465, %v2355, 0
    %2360 = vmatprep.subr.mxu0 0.0
    %2361 = vmatpush1.xpose.msra.mxu0 %v2358
    %2362 = vmatprep.subr.mxu0 0.0
    %2363 = vmatpush1.xpose.msra.mxu0 0.0
    %2364 = vmatprep.subr.mxu0 0.0
    %2365 = vmatpush1.xpose.msra.mxu0 0.0
    %2366 = vmatprep.subr.mxu0 0.0
    %2367 = vmatpush1.xpose.msra.mxu0 0.0
    %2368 = vmatprep.subr.mxu0 0.0
    %2369 = vmatpush1.xpose.msra.mxu0 0.0
    %2370 = vmatprep.subr.mxu0 0.0
    %2371 = vmatpush1.xpose.msra.mxu0 0.0
    %2372 = vmatprep.subr.mxu0 0.0
    %2373 = vmatpush1.xpose.msra.mxu0 0.0
    %2374 = vmatprep.subr.mxu0 0.0
    %2375 = vmatpush1.xpose.msra.mxu0 0.0
    %2376 = vmatprep.subr.mxu0 0.0
    %2377 = vmatpush1.xpose.msra.mxu0 0.0
    %2378 = vmatprep.subr.mxu0 0.0
    %2379 = vmatpush1.xpose.msra.mxu0 0.0
    %2380 = vmatprep.subr.mxu0 0.0
    %2381 = vmatpush1.xpose.msra.mxu0 0.0
    %2382 = vmatprep.subr.mxu0 0.0
    %2383 = vmatpush1.xpose.msra.mxu0 0.0
    %2384 = vmatprep.subr.mxu0 0.0
    %2385 = vmatpush1.xpose.msra.mxu0 0.0
    %2386 = vmatprep.subr.mxu0 0.0
    %2387 = vmatpush1.xpose.msra.mxu0 0.0
    %2388 = vmatprep.subr.mxu0 0.0
    %2389 = vmatpush1.xpose.msra.mxu0 0.0
    %2390 = vmatprep.subr.mxu0 0.0
    %2391 = vmatpush1.xpose.msra.mxu0 0.0
    %2392 = vmatprep.subr.mxu0 0.0
    %2393 = vmatpush1.xpose.msra.mxu0 0.0
    %2394 = vmatprep.subr.mxu0 0.0
    %2395 = vmatpush1.xpose.msra.mxu0 0.0
    %2396 = vmatprep.subr.mxu0 0.0
    %2397 = vmatpush1.xpose.msra.mxu0 0.0
    %2398 = vmatprep.subr.mxu0 0.0
    %2399 = vmatpush1.xpose.msra.mxu0 0.0
    %2400 = vmatprep.subr.mxu0 0.0
    %2401 = vmatpush1.xpose.msra.mxu0 0.0
    %2402 = vmatprep.subr.mxu0 0.0
    %2403 = vmatpush1.xpose.msra.mxu0 0.0
    %2404 = vmatprep.subr.mxu0 0.0
    %2405 = vmatpush1.xpose.msra.mxu0 0.0
    %2406 = vmatprep.subr.mxu0 0.0
    %2407 = vmatpush1.xpose.msra.mxu0 0.0
    %2408 = vmatprep.subr.mxu0 0.0
    %2409 = vmatpush1.xpose.msra.mxu0 0.0
    %2410 = vmatprep.subr.mxu0 0.0
    %2411 = vmatpush1.xpose.msra.mxu0 0.0
    %2412 = vmatprep.subr.mxu0 0.0
    %2413 = vmatpush1.xpose.msra.mxu0 0.0
    %2414 = vmatprep.subr.mxu0 0.0
    %2415 = vmatpush1.xpose.msra.mxu0 0.0
    %2416 = vmatprep.subr.mxu0 0.0
    %2417 = vmatpush1.xpose.msra.mxu0 0.0
    %2418 = vmatprep.subr.mxu0 0.0
    %2419 = vmatpush1.xpose.msra.mxu0 0.0
    %2420 = vmatprep.subr.mxu0 0.0
    %2421 = vmatpush1.xpose.msra.mxu0 0.0
    %2422 = vmatprep.subr.mxu0 0.0
    %2423 = vmatpush1.xpose.msra.mxu0 0.0
    %2424 = vmatprep.mubr.f32.mxu0 0.0
    %2425 = vmatmul.mubr.f32.gmra.mrb[0].mxu0 %v2356
    %v2426 = vpop.f32.mrb[0].mxu0
    %v2427 = vadd.f32 0.0, %v2426
    %v2428 = vpop.f32.mrb[0].mxu0
    %2429 = vdwg.mxu0
    %v2430 = vmul.f32 %v2427, 0.25
    %v2431 = vadd.f32 %v2430, %v544
    %v2432 = vsel %vm546, %v2431, -inf
    %2433 = vmax.xlane.f32.xlu0 %v2432
    %v2434 = vpop.xlane.xlu0 %2433
    %v2435 = vsub.f32 %v2431, %v2434
    %v2436 = vmul.f32 %v2435, 1.442695
    %v2437 = vpow.pop %v2436
    %v2438 = vsel %vm546, %v2437, 0.0
    %2439 = vadd.xlane.f32.xlu0 %v2438
    %v2440 = vpop.xlane.xlu0 %2439
    %v2441 = vrcp.pop %v2440
    %v2442 = vmul.f32 %v2437, %v2441
    %2443 = vrot.lane.b32.xlu0 %v2178, 48
    %v2444 = vpop.permute.xlu0 %2443
    %v2447 = vsel %vm546, %v2442, 0
    %2449 = vmatprep.subr.mxu0 0.0
    %2450 = vmatpush1.msra.mxu0 %v2444
    %2451 = vmatprep.subr.mxu0 0.0
    %2452 = vmatpush1.msra.mxu0 0.0
    %2453 = vmatprep.subr.mxu0 0.0
    %2454 = vmatpush1.msra.mxu0 0.0
    %2455 = vmatprep.subr.mxu0 0.0
    %2456 = vmatpush1.msra.mxu0 0.0
    %2457 = vmatprep.subr.mxu0 0.0
    %2458 = vmatpush1.msra.mxu0 0.0
    %2459 = vmatprep.subr.mxu0 0.0
    %2460 = vmatpush1.msra.mxu0 0.0
    %2461 = vmatprep.subr.mxu0 0.0
    %2462 = vmatpush1.msra.mxu0 0.0
    %2463 = vmatprep.subr.mxu0 0.0
    %2464 = vmatpush1.msra.mxu0 0.0
    %2465 = vmatprep.subr.mxu0 0.0
    %2466 = vmatpush1.msra.mxu0 0.0
    %2467 = vmatprep.subr.mxu0 0.0
    %2468 = vmatpush1.msra.mxu0 0.0
    %2469 = vmatprep.subr.mxu0 0.0
    %2470 = vmatpush1.msra.mxu0 0.0
    %2471 = vmatprep.subr.mxu0 0.0
    %2472 = vmatpush1.msra.mxu0 0.0
    %2473 = vmatprep.subr.mxu0 0.0
    %2474 = vmatpush1.msra.mxu0 0.0
    %2475 = vmatprep.subr.mxu0 0.0
    %2476 = vmatpush1.msra.mxu0 0.0
    %2477 = vmatprep.subr.mxu0 0.0
    %2478 = vmatpush1.msra.mxu0 0.0
    %2479 = vmatprep.subr.mxu0 0.0
    %2480 = vmatpush1.msra.mxu0 0.0
    %2481 = vmatprep.subr.mxu0 0.0
    %2482 = vmatpush1.msra.mxu0 0.0
    %2483 = vmatprep.subr.mxu0 0.0
    %2484 = vmatpush1.msra.mxu0 0.0
    %2485 = vmatprep.subr.mxu0 0.0
    %2486 = vmatpush1.msra.mxu0 0.0
    %2487 = vmatprep.subr.mxu0 0.0
    %2488 = vmatpush1.msra.mxu0 0.0
    %2489 = vmatprep.subr.mxu0 0.0
    %2490 = vmatpush1.msra.mxu0 0.0
    %2491 = vmatprep.subr.mxu0 0.0
    %2492 = vmatpush1.msra.mxu0 0.0
    %2493 = vmatprep.subr.mxu0 0.0
    %2494 = vmatpush1.msra.mxu0 0.0
    %2495 = vmatprep.subr.mxu0 0.0
    %2496 = vmatpush1.msra.mxu0 0.0
    %2497 = vmatprep.subr.mxu0 0.0
    %2498 = vmatpush1.msra.mxu0 0.0
    %2499 = vmatprep.subr.mxu0 0.0
    %2500 = vmatpush1.msra.mxu0 0.0
    %2501 = vmatprep.subr.mxu0 0.0
    %2502 = vmatpush1.msra.mxu0 0.0
    %2503 = vmatprep.subr.mxu0 0.0
    %2504 = vmatpush1.msra.mxu0 0.0
    %2505 = vmatprep.subr.mxu0 0.0
    %2506 = vmatpush1.msra.mxu0 0.0
    %2507 = vmatprep.subr.mxu0 0.0
    %2508 = vmatpush1.msra.mxu0 0.0
    %2509 = vmatprep.subr.mxu0 0.0
    %2510 = vmatpush1.msra.mxu0 0.0
    %2511 = vmatprep.subr.mxu0 0.0
    %2512 = vmatpush1.msra.mxu0 0.0
    %2513 = vmatprep.mubr.f32.mxu0 0.0
    %2514 = vmatmul.mubr.f32.gmra.mrb[0].mxu0 %v2447
    %v2515 = vpop.f32.mrb[0].mxu0
    %v2516 = vadd.f32 0.0, %v2515
    %v2517 = vpop.f32.mrb[0].mxu0
    %2518 = vdwg.mxu0
    %2520 = vrot.lane.b32.xlu0 %v2516, 16
    %v2521 = vpop.permute.xlu0 %2520
    %v2523 = vsel %vm465, %v2349, %v2521
    %2525 = vrot.lane.b32.xlu0 %v2183, 96
    %v2526 = vpop.permute.xlu0 %2525
    %v2527 = vsel %vm465, %v2183, 0
    %v2529 = vsel %vm465, %v2526, 0
    %2531 = vmatprep.subr.mxu0 0.0
    %2532 = vmatpush1.xpose.msra.mxu0 %v2529
    %2533 = vmatprep.subr.mxu0 0.0
    %2534 = vmatpush1.xpose.msra.mxu0 0.0
    %2535 = vmatprep.subr.mxu0 0.0
    %2536 = vmatpush1.xpose.msra.mxu0 0.0
    %2537 = vmatprep.subr.mxu0 0.0
    %2538 = vmatpush1.xpose.msra.mxu0 0.0
    %2539 = vmatprep.subr.mxu0 0.0
    %2540 = vmatpush1.xpose.msra.mxu0 0.0
    %2541 = vmatprep.subr.mxu0 0.0
    %2542 = vmatpush1.xpose.msra.mxu0 0.0
    %2543 = vmatprep.subr.mxu0 0.0
    %2544 = vmatpush1.xpose.msra.mxu0 0.0
    %2545 = vmatprep.subr.mxu0 0.0
    %2546 = vmatpush1.xpose.msra.mxu0 0.0
    %2547 = vmatprep.subr.mxu0 0.0
    %2548 = vmatpush1.xpose.msra.mxu0 0.0
    %2549 = vmatprep.subr.mxu0 0.0
    %2550 = vmatpush1.xpose.msra.mxu0 0.0
    %2551 = vmatprep.subr.mxu0 0.0
    %2552 = vmatpush1.xpose.msra.mxu0 0.0
    %2553 = vmatprep.subr.mxu0 0.0
    %2554 = vmatpush1.xpose.msra.mxu0 0.0
    %2555 = vmatprep.subr.mxu0 0.0
    %2556 = vmatpush1.xpose.msra.mxu0 0.0
    %2557 = vmatprep.subr.mxu0 0.0
    %2558 = vmatpush1.xpose.msra.mxu0 0.0
    %2559 = vmatprep.subr.mxu0 0.0
    %2560 = vmatpush1.xpose.msra.mxu0 0.0
    %2561 = vmatprep.subr.mxu0 0.0
    %2562 = vmatpush1.xpose.msra.mxu0 0.0
    %2563 = vmatprep.subr.mxu0 0.0
    %2564 = vmatpush1.xpose.msra.mxu0 0.0
    %2565 = vmatprep.subr.mxu0 0.0
    %2566 = vmatpush1.xpose.msra.mxu0 0.0
    %2567 = vmatprep.subr.mxu0 0.0
    %2568 = vmatpush1.xpose.msra.mxu0 0.0
    %2569 = vmatprep.subr.mxu0 0.0
    %2570 = vmatpush1.xpose.msra.mxu0 0.0
    %2571 = vmatprep.subr.mxu0 0.0
    %2572 = vmatpush1.xpose.msra.mxu0 0.0
    %2573 = vmatprep.subr.mxu0 0.0
    %2574 = vmatpush1.xpose.msra.mxu0 0.0
    %2575 = vmatprep.subr.mxu0 0.0
    %2576 = vmatpush1.xpose.msra.mxu0 0.0
    %2577 = vmatprep.subr.mxu0 0.0
    %2578 = vmatpush1.xpose.msra.mxu0 0.0
    %2579 = vmatprep.subr.mxu0 0.0
    %2580 = vmatpush1.xpose.msra.mxu0 0.0
    %2581 = vmatprep.subr.mxu0 0.0
    %2582 = vmatpush1.xpose.msra.mxu0 0.0
    %2583 = vmatprep.subr.mxu0 0.0
    %2584 = vmatpush1.xpose.msra.mxu0 0.0
    %2585 = vmatprep.subr.mxu0 0.0
    %2586 = vmatpush1.xpose.msra.mxu0 0.0
    %2587 = vmatprep.subr.mxu0 0.0
    %2588 = vmatpush1.xpose.msra.mxu0 0.0
    %2589 = vmatprep.subr.mxu0 0.0
    %2590 = vmatpush1.xpose.msra.mxu0 0.0
    %2591 = vmatprep.subr.mxu0 0.0
    %2592 = vmatpush1.xpose.msra.mxu0 0.0
    %2593 = vmatprep.subr.mxu0 0.0
    %2594 = vmatpush1.xpose.msra.mxu0 0.0
    %2595 = vmatprep.mubr.f32.mxu0 0.0
    %2596 = vmatmul.mubr.f32.gmra.mrb[0].mxu0 %v2527
    %v2597 = vpop.f32.mrb[0].mxu0
    %v2598 = vadd.f32 0.0, %v2597
    %v2599 = vpop.f32.mrb[0].mxu0
    %2600 = vdwg.mxu0
    %v2601 = vmul.f32 %v2598, 0.25
    %v2602 = vadd.f32 %v2601, %v887
    %v2603 = vsel %vm546, %v2602, -inf
    %2604 = vmax.xlane.f32.xlu0 %v2603
    %v2605 = vpop.xlane.xlu0 %2604
    %v2606 = vsub.f32 %v2602, %v2605
    %v2607 = vmul.f32 %v2606, 1.442695
    %v2608 = vpow.pop %v2607
    %v2609 = vsel %vm546, %v2608, 0.0
    %2610 = vadd.xlane.f32.xlu0 %v2609
    %v2611 = vpop.xlane.xlu0 %2610
    %v2612 = vrcp.pop %v2611
    %v2613 = vmul.f32 %v2608, %v2612
    %2614 = vrot.lane.b32.xlu0 %v2183, 64
    %v2615 = vpop.permute.xlu0 %2614
    %v2618 = vsel %vm546, %v2613, 0
    %2620 = vmatprep.subr.mxu0 0.0
    %2621 = vmatpush1.msra.mxu0 %v2615
    %2622 = vmatprep.subr.mxu0 0.0
    %2623 = vmatpush1.msra.mxu0 0.0
    %2624 = vmatprep.subr.mxu0 0.0
    %2625 = vmatpush1.msra.mxu0 0.0
    %2626 = vmatprep.subr.mxu0 0.0
    %2627 = vmatpush1.msra.mxu0 0.0
    %2628 = vmatprep.subr.mxu0 0.0
    %2629 = vmatpush1.msra.mxu0 0.0
    %2630 = vmatprep.subr.mxu0 0.0
    %2631 = vmatpush1.msra.mxu0 0.0
    %2632 = vmatprep.subr.mxu0 0.0
    %2633 = vmatpush1.msra.mxu0 0.0
    %2634 = vmatprep.subr.mxu0 0.0
    %2635 = vmatpush1.msra.mxu0 0.0
    %2636 = vmatprep.subr.mxu0 0.0
    %2637 = vmatpush1.msra.mxu0 0.0
    %2638 = vmatprep.subr.mxu0 0.0
    %2639 = vmatpush1.msra.mxu0 0.0
    %2640 = vmatprep.subr.mxu0 0.0
    %2641 = vmatpush1.msra.mxu0 0.0
    %2642 = vmatprep.subr.mxu0 0.0
    %2643 = vmatpush1.msra.mxu0 0.0
    %2644 = vmatprep.subr.mxu0 0.0
    %2645 = vmatpush1.msra.mxu0 0.0
    %2646 = vmatprep.subr.mxu0 0.0
    %2647 = vmatpush1.msra.mxu0 0.0
    %2648 = vmatprep.subr.mxu0 0.0
    %2649 = vmatpush1.msra.mxu0 0.0
    %2650 = vmatprep.subr.mxu0 0.0
    %2651 = vmatpush1.msra.mxu0 0.0
    %2652 = vmatprep.subr.mxu0 0.0
    %2653 = vmatpush1.msra.mxu0 0.0
    %2654 = vmatprep.subr.mxu0 0.0
    %2655 = vmatpush1.msra.mxu0 0.0
    %2656 = vmatprep.subr.mxu0 0.0
    %2657 = vmatpush1.msra.mxu0 0.0
    %2658 = vmatprep.subr.mxu0 0.0
    %2659 = vmatpush1.msra.mxu0 0.0
    %2660 = vmatprep.subr.mxu0 0.0
    %2661 = vmatpush1.msra.mxu0 0.0
    %2662 = vmatprep.subr.mxu0 0.0
    %2663 = vmatpush1.msra.mxu0 0.0
    %2664 = vmatprep.subr.mxu0 0.0
    %2665 = vmatpush1.msra.mxu0 0.0
    %2666 = vmatprep.subr.mxu0 0.0
    %2667 = vmatpush1.msra.mxu0 0.0
    %2668 = vmatprep.subr.mxu0 0.0
    %2669 = vmatpush1.msra.mxu0 0.0
    %2670 = vmatprep.subr.mxu0 0.0
    %2671 = vmatpush1.msra.mxu0 0.0
    %2672 = vmatprep.subr.mxu0 0.0
    %2673 = vmatpush1.msra.mxu0 0.0
    %2674 = vmatprep.subr.mxu0 0.0
    %2675 = vmatpush1.msra.mxu0 0.0
    %2676 = vmatprep.subr.mxu0 0.0
    %2677 = vmatpush1.msra.mxu0 0.0
    %2678 = vmatprep.subr.mxu0 0.0
    %2679 = vmatpush1.msra.mxu0 0.0
    %2680 = vmatprep.subr.mxu0 0.0
    %2681 = vmatpush1.msra.mxu0 0.0
    %2682 = vmatprep.subr.mxu0 0.0
    %2683 = vmatpush1.msra.mxu0 0.0
    %2684 = vmatprep.mubr.f32.mxu0 0.0
    %2685 = vmatmul.mubr.f32.gmra.mrb[0].mxu0 %v2618
    %v2686 = vpop.f32.mrb[0].mxu0
    %v2687 = vadd.f32 0.0, %v2686
    %v2688 = vpop.f32.mrb[0].mxu0
    %2689 = vdwg.mxu0
    %2690 = vrot.lane.b32.xlu0 %v2183, 112
    %v2691 = vpop.permute.xlu0 %2690
    %2692 = vrot.lane.b32.xlu0 %v2183, 80
    %v2693 = vpop.permute.xlu0 %2692
    %v2694 = vsel %vm465, %v2691, 0
    %v2696 = vsel %vm465, %v2693, 0
    %2698 = vmatprep.subr.mxu0 0.0
    %2699 = vmatpush1.xpose.msra.mxu0 %v2696
    %2700 = vmatprep.subr.mxu0 0.0
    %2701 = vmatpush1.xpose.msra.mxu0 0.0
    %2702 = vmatprep.subr.mxu0 0.0
    %2703 = vmatpush1.xpose.msra.mxu0 0.0
    %2704 = vmatprep.subr.mxu0 0.0
    %2705 = vmatpush1.xpose.msra.mxu0 0.0
    %2706 = vmatprep.subr.mxu0 0.0
    %2707 = vmatpush1.xpose.msra.mxu0 0.0
    %2708 = vmatprep.subr.mxu0 0.0
    %2709 = vmatpush1.xpose.msra.mxu0 0.0
    %2710 = vmatprep.subr.mxu0 0.0
    %2711 = vmatpush1.xpose.msra.mxu0 0.0
    %2712 = vmatprep.subr.mxu0 0.0
    %2713 = vmatpush1.xpose.msra.mxu0 0.0
    %2714 = vmatprep.subr.mxu0 0.0
    %2715 = vmatpush1.xpose.msra.mxu0 0.0
    %2716 = vmatprep.subr.mxu0 0.0
    %2717 = vmatpush1.xpose.msra.mxu0 0.0
    %2718 = vmatprep.subr.mxu0 0.0
    %2719 = vmatpush1.xpose.msra.mxu0 0.0
    %2720 = vmatprep.subr.mxu0 0.0
    %2721 = vmatpush1.xpose.msra.mxu0 0.0
    %2722 = vmatprep.subr.mxu0 0.0
    %2723 = vmatpush1.xpose.msra.mxu0 0.0
    %2724 = vmatprep.subr.mxu0 0.0
    %2725 = vmatpush1.xpose.msra.mxu0 0.0
    %2726 = vmatprep.subr.mxu0 0.0
    %2727 = vmatpush1.xpose.msra.mxu0 0.0
    %2728 = vmatprep.subr.mxu0 0.0
    %2729 = vmatpush1.xpose.msra.mxu0 0.0
    %2730 = vmatprep.subr.mxu0 0.0
    %2731 = vmatpush1.xpose.msra.mxu0 0.0
    %2732 = vmatprep.subr.mxu0 0.0
    %2733 = vmatpush1.xpose.msra.mxu0 0.0
    %2734 = vmatprep.subr.mxu0 0.0
    %2735 = vmatpush1.xpose.msra.mxu0 0.0
    %2736 = vmatprep.subr.mxu0 0.0
    %2737 = vmatpush1.xpose.msra.mxu0 0.0
    %2738 = vmatprep.subr.mxu0 0.0
    %2739 = vmatpush1.xpose.msra.mxu0 0.0
    %2740 = vmatprep.subr.mxu0 0.0
    %2741 = vmatpush1.xpose.msra.mxu0 0.0
    %2742 = vmatprep.subr.mxu0 0.0
    %2743 = vmatpush1.xpose.msra.mxu0 0.0
    %2744 = vmatprep.subr.mxu0 0.0
    %2745 = vmatpush1.xpose.msra.mxu0 0.0
    %2746 = vmatprep.subr.mxu0 0.0
    %2747 = vmatpush1.xpose.msra.mxu0 0.0
    %2748 = vmatprep.subr.mxu0 0.0
    %2749 = vmatpush1.xpose.msra.mxu0 0.0
    %2750 = vmatprep.subr.mxu0 0.0
    %2751 = vmatpush1.xpose.msra.mxu0 0.0
    %2752 = vmatprep.subr.mxu0 0.0
    %2753 = vmatpush1.xpose.msra.mxu0 0.0
    %2754 = vmatprep.subr.mxu0 0.0
    %2755 = vmatpush1.xpose.msra.mxu0 0.0
    %2756 = vmatprep.subr.mxu0 0.0
    %2757 = vmatpush1.xpose.msra.mxu0 0.0
    %2758 = vmatprep.subr.mxu0 0.0
    %2759 = vmatpush1.xpose.msra.mxu0 0.0
    %2760 = vmatprep.subr.mxu0 0.0
    %2761 = vmatpush1.xpose.msra.mxu0 0.0
    %2762 = vmatprep.mubr.f32.mxu0 0.0
    %2763 = vmatmul.mubr.f32.gmra.mrb[0].mxu0 %v2694
    %v2764 = vpop.f32.mrb[0].mxu0
    %v2765 = vadd.f32 0.0, %v2764
    %v2766 = vpop.f32.mrb[0].mxu0
    %2767 = vdwg.mxu0
    %v2768 = vmul.f32 %v2765, 0.25
    %v2769 = vadd.f32 %v2768, %v887
    %v2770 = vsel %vm546, %v2769, -inf
    %2771 = vmax.xlane.f32.xlu0 %v2770
    %v2772 = vpop.xlane.xlu0 %2771
    %v2773 = vsub.f32 %v2769, %v2772
    %v2774 = vmul.f32 %v2773, 1.442695
    %v2775 = vpow.pop %v2774
    %v2776 = vsel %vm546, %v2775, 0.0
    %2777 = vadd.xlane.f32.xlu0 %v2776
    %v2778 = vpop.xlane.xlu0 %2777
    %v2779 = vrcp.pop %v2778
    %v2780 = vmul.f32 %v2775, %v2779
    %2781 = vrot.lane.b32.xlu0 %v2183, 48
    %v2782 = vpop.permute.xlu0 %2781
    %v2785 = vsel %vm546, %v2780, 0
    %2787 = vmatprep.subr.mxu0 0.0
    %2788 = vmatpush1.msra.mxu0 %v2782
    %2789 = vmatprep.subr.mxu0 0.0
    %2790 = vmatpush1.msra.mxu0 0.0
    %2791 = vmatprep.subr.mxu0 0.0
    %2792 = vmatpush1.msra.mxu0 0.0
    %2793 = vmatprep.subr.mxu0 0.0
    %2794 = vmatpush1.msra.mxu0 0.0
    %2795 = vmatprep.subr.mxu0 0.0
    %2796 = vmatpush1.msra.mxu0 0.0
    %2797 = vmatprep.subr.mxu0 0.0
    %2798 = vmatpush1.msra.mxu0 0.0
    %2799 = vmatprep.subr.mxu0 0.0
    %2800 = vmatpush1.msra.mxu0 0.0
    %2801 = vmatprep.subr.mxu0 0.0
    %2802 = vmatpush1.msra.mxu0 0.0
    %2803 = vmatprep.subr.mxu0 0.0
    %2804 = vmatpush1.msra.mxu0 0.0
    %2805 = vmatprep.subr.mxu0 0.0
    %2806 = vmatpush1.msra.mxu0 0.0
    %2807 = vmatprep.subr.mxu0 0.0
    %2808 = vmatpush1.msra.mxu0 0.0
    %2809 = vmatprep.subr.mxu0 0.0
    %2810 = vmatpush1.msra.mxu0 0.0
    %2811 = vmatprep.subr.mxu0 0.0
    %2812 = vmatpush1.msra.mxu0 0.0
    %2813 = vmatprep.subr.mxu0 0.0
    %2814 = vmatpush1.msra.mxu0 0.0
    %2815 = vmatprep.subr.mxu0 0.0
    %2816 = vmatpush1.msra.mxu0 0.0
    %2817 = vmatprep.subr.mxu0 0.0
    %2818 = vmatpush1.msra.mxu0 0.0
    %2819 = vmatprep.subr.mxu0 0.0
    %2820 = vmatpush1.msra.mxu0 0.0
    %2821 = vmatprep.subr.mxu0 0.0
    %2822 = vmatpush1.msra.mxu0 0.0
    %2823 = vmatprep.subr.mxu0 0.0
    %2824 = vmatpush1.msra.mxu0 0.0
    %2825 = vmatprep.subr.mxu0 0.0
    %2826 = vmatpush1.msra.mxu0 0.0
    %2827 = vmatprep.subr.mxu0 0.0
    %2828 = vmatpush1.msra.mxu0 0.0
    %2829 = vmatprep.subr.mxu0 0.0
    %2830 = vmatpush1.msra.mxu0 0.0
    %2831 = vmatprep.subr.mxu0 0.0
    %2832 = vmatpush1.msra.mxu0 0.0
    %2833 = vmatprep.subr.mxu0 0.0
    %2834 = vmatpush1.msra.mxu0 0.0
    %2835 = vmatprep.subr.mxu0 0.0
    %2836 = vmatpush1.msra.mxu0 0.0
    %2837 = vmatprep.subr.mxu0 0.0
    %2838 = vmatpush1.msra.mxu0 0.0
    %2839 = vmatprep.subr.mxu0 0.0
    %2840 = vmatpush1.msra.mxu0 0.0
    %2841 = vmatprep.subr.mxu0 0.0
    %2842 = vmatpush1.msra.mxu0 0.0
    %2843 = vmatprep.subr.mxu0 0.0
    %2844 = vmatpush1.msra.mxu0 0.0
    %2845 = vmatprep.subr.mxu0 0.0
    %2846 = vmatpush1.msra.mxu0 0.0
    %2847 = vmatprep.subr.mxu0 0.0
    %2848 = vmatpush1.msra.mxu0 0.0
    %2849 = vmatprep.subr.mxu0 0.0
    %2850 = vmatpush1.msra.mxu0 0.0
    %2851 = vmatprep.mubr.f32.mxu0 0.0
    %2852 = vmatmul.mubr.f32.gmra.mrb[0].mxu0 %v2785
    %v2853 = vpop.f32.mrb[0].mxu0
    %v2854 = vadd.f32 0.0, %v2853
    %v2855 = vpop.f32.mrb[0].mxu0
    %2856 = vdwg.mxu0
    %2858 = vrot.lane.b32.xlu0 %v2854, 16
    %v2859 = vpop.permute.xlu0 %2858
    %v2861 = vsel %vm465, %v2687, %v2859
    %s2862 = scalar_lea.vmem %s7, 32
    %v2863 = vld [vmem:[%s2862] sm:$0xff]
    %v2864 = vld [vmem:[%s2862 + $0x8] sm:$0xff]
    %v2865 = vld [vmem:[%s2862 + $0x10] sm:$0xff]
    %v2866 = vld [vmem:[%s2862 + $0x18] sm:$0xff]
    %s2867 = scalar_lea.vmem [#allocation7], 1
    %v2868 = vld [vmem:[%s2867] sm:$0x1]
    %v2870 = vlaneseq
    %v2871 = vshrl.u32 %v2870, 7
    %v2872 = vsub.s32 0, %v2871
    %v2873 = vrot.slane %v2868, %v2872
    %v2876 = vsel %vm337, %v2523, 0
    %v2879 = vsel %vm337, %v2861, 0
    %2881 = vmatprep.subr.mxu0 0.0
    %2882 = vmatpush1.msra.mxu0 %v2863
    %2883 = vmatprep.subr.mxu0 0.0
    %2884 = vmatpush1.msra.mxu0 %v2864
    %2885 = vmatprep.subr.mxu0 0.0
    %2886 = vmatpush1.msra.mxu0 %v2865
    %2887 = vmatprep.subr.mxu0 0.0
    %2888 = vmatpush1.msra.mxu0 %v2866
    %2889 = vmatprep.subr.mxu0 0.0
    %2890 = vmatpush1.msra.mxu0 0.0
    %2891 = vmatprep.subr.mxu0 0.0
    %2892 = vmatpush1.msra.mxu0 0.0
    %2893 = vmatprep.subr.mxu0 0.0
    %2894 = vmatpush1.msra.mxu0 0.0
    %2895 = vmatprep.subr.mxu0 0.0
    %2896 = vmatpush1.msra.mxu0 0.0
    %2897 = vmatprep.subr.mxu0 0.0
    %2898 = vmatpush1.msra.mxu0 0.0
    %2899 = vmatprep.subr.mxu0 0.0
    %2900 = vmatpush1.msra.mxu0 0.0
    %2901 = vmatprep.subr.mxu0 0.0
    %2902 = vmatpush1.msra.mxu0 0.0
    %2903 = vmatprep.subr.mxu0 0.0
    %2904 = vmatpush1.msra.mxu0 0.0
    %2905 = vmatprep.subr.mxu0 0.0
    %2906 = vmatpush1.msra.mxu0 0.0
    %2907 = vmatprep.subr.mxu0 0.0
    %2908 = vmatpush1.msra.mxu0 0.0
    %2909 = vmatprep.subr.mxu0 0.0
    %2910 = vmatpush1.msra.mxu0 0.0
    %2911 = vmatprep.subr.mxu0 0.0
    %2912 = vmatpush1.msra.mxu0 0.0
    %2913 = vmatprep.subr.mxu0 0.0
    %2914 = vmatpush1.msra.mxu0 0.0
    %2915 = vmatprep.subr.mxu0 0.0
    %2916 = vmatpush1.msra.mxu0 0.0
    %2917 = vmatprep.subr.mxu0 0.0
    %2918 = vmatpush1.msra.mxu0 0.0
    %2919 = vmatprep.subr.mxu0 0.0
    %2920 = vmatpush1.msra.mxu0 0.0
    %2921 = vmatprep.subr.mxu0 0.0
    %2922 = vmatpush1.msra.mxu0 0.0
    %2923 = vmatprep.subr.mxu0 0.0
    %2924 = vmatpush1.msra.mxu0 0.0
    %2925 = vmatprep.subr.mxu0 0.0
    %2926 = vmatpush1.msra.mxu0 0.0
    %2927 = vmatprep.subr.mxu0 0.0
    %2928 = vmatpush1.msra.mxu0 0.0
    %2929 = vmatprep.subr.mxu0 0.0
    %2930 = vmatpush1.msra.mxu0 0.0
    %2931 = vmatprep.subr.mxu0 0.0
    %2932 = vmatpush1.msra.mxu0 0.0
    %2933 = vmatprep.subr.mxu0 0.0
    %2934 = vmatpush1.msra.mxu0 0.0
    %2935 = vmatprep.subr.mxu0 0.0
    %2936 = vmatpush1.msra.mxu0 0.0
    %2937 = vmatprep.subr.mxu0 0.0
    %2938 = vmatpush1.msra.mxu0 0.0
    %2939 = vmatprep.subr.mxu0 0.0
    %2940 = vmatpush1.msra.mxu0 0.0
    %2941 = vmatprep.subr.mxu0 0.0
    %2942 = vmatpush1.msra.mxu0 0.0
    %2943 = vmatprep.subr.mxu0 0.0
    %2944 = vmatpush1.msra.mxu0 0.0
    %2945 = vmatprep.mubr.f32.mxu0 0.0
    %2946 = vmatmul.mubr.f32.gmra.mrb[0].mxu0 %v2876
    %v2947 = vpop.f32.mrb[0].mxu0
    %v2948 = vadd.f32 %v2873, %v2947
    %v2949 = vpop.f32.mrb[0].mxu0
    %2950 = vmatprep.mubr.f32.mxu0 0.0
    %2951 = vmatmul.mubr.f32.gmra.mrb[0].mxu0 %v2879
    %v2952 = vpop.f32.mrb[0].mxu0
    %v2953 = vadd.f32 %v2873, %v2952
    %v2954 = vpop.f32.mrb[0].mxu0
    %2955 = vdwg.mxu0
    %v2956 = vmax.f32 %v2948, 0.0
    %v2957 = vmax.f32 %v2953, 0.0
    %s2958 = scalar_lea.vmem [#allocation10], 32
    %v2959 = vld [vmem:[%s2958] sm:$0xff]
    %v2960 = vld [vmem:[%s2958 + $0x8] sm:$0xff]
    %v2961 = vld [vmem:[%s2958 + $0x10] sm:$0xff]
    %v2962 = vld [vmem:[%s2958 + $0x18] sm:$0xff]
    %s2963 = scalar_lea.vmem [#allocation11], 32
    %v2964 = vld [vmem:[%s2963] sm:$0xff]
    %v2965 = vld [vmem:[%s2963 + $0x8] sm:$0xff]
    %v2966 = vld [vmem:[%s2963 + $0x10] sm:$0xff]
    %v2967 = vld [vmem:[%s2963 + $0x18] sm:$0xff]
    %s2968 = scalar_lea.vmem [#allocation13], 32
    %v2969 = vld [vmem:[%s2968] sm:$0xff]
    %v2970 = vld [vmem:[%s2968 + $0x8] sm:$0xff]
    %v2971 = vld [vmem:[%s2968 + $0x10] sm:$0xff]
    %v2972 = vld [vmem:[%s2968 + $0x18] sm:$0xff]
    %v2974 = vsel %vm337, %v2956, 0
    %v2977 = vsel %vm337, %v2957, 0
    %2979 = vmatprep.subr.mxu0 0.0
    %2980 = vmatpush1.msra.mxu0 %v2959
    %2981 = vmatprep.subr.mxu0 0.0
    %2982 = vmatpush1.msra.mxu0 %v2960
    %2983 = vmatprep.subr.mxu0 0.0
    %2984 = vmatpush1.msra.mxu0 %v2961
    %2985 = vmatprep.subr.mxu0 0.0
    %2986 = vmatpush1.msra.mxu0 %v2962
    %2987 = vmatprep.subr.mxu0 0.0
    %2988 = vmatpush1.msra.mxu0 0.0
    %2989 = vmatprep.subr.mxu0 0.0
    %2990 = vmatpush1.msra.mxu0 0.0
    %2991 = vmatprep.subr.mxu0 0.0
    %2992 = vmatpush1.msra.mxu0 0.0
    %2993 = vmatprep.subr.mxu0 0.0
    %2994 = vmatpush1.msra.mxu0 0.0
    %2995 = vmatprep.subr.mxu0 0.0
    %2996 = vmatpush1.msra.mxu0 0.0
    %2997 = vmatprep.subr.mxu0 0.0
    %2998 = vmatpush1.msra.mxu0 0.0
    %2999 = vmatprep.subr.mxu0 0.0
    %3000 = vmatpush1.msra.mxu0 0.0
    %3001 = vmatprep.subr.mxu0 0.0
    %3002 = vmatpush1.msra.mxu0 0.0
    %3003 = vmatprep.subr.mxu0 0.0
    %3004 = vmatpush1.msra.mxu0 0.0
    %3005 = vmatprep.subr.mxu0 0.0
    %3006 = vmatpush1.msra.mxu0 0.0
    %3007 = vmatprep.subr.mxu0 0.0
    %3008 = vmatpush1.msra.mxu0 0.0
    %3009 = vmatprep.subr.mxu0 0.0
    %3010 = vmatpush1.msra.mxu0 0.0
    %3011 = vmatprep.subr.mxu0 0.0
    %3012 = vmatpush1.msra.mxu0 0.0
    %3013 = vmatprep.subr.mxu0 0.0
    %3014 = vmatpush1.msra.mxu0 0.0
    %3015 = vmatprep.subr.mxu0 0.0
    %3016 = vmatpush1.msra.mxu0 0.0
    %3017 = vmatprep.subr.mxu0 0.0
    %3018 = vmatpush1.msra.mxu0 0.0
    %3019 = vmatprep.subr.mxu0 0.0
    %3020 = vmatpush1.msra.mxu0 0.0
    %3021 = vmatprep.subr.mxu0 0.0
    %3022 = vmatpush1.msra.mxu0 0.0
    %3023 = vmatprep.subr.mxu0 0.0
    %3024 = vmatpush1.msra.mxu0 0.0
    %3025 = vmatprep.subr.mxu0 0.0
    %3026 = vmatpush1.msra.mxu0 0.0
    %3027 = vmatprep.subr.mxu0 0.0
    %3028 = vmatpush1.msra.mxu0 0.0
    %3029 = vmatprep.subr.mxu0 0.0
    %3030 = vmatpush1.msra.mxu0 0.0
    %3031 = vmatprep.subr.mxu0 0.0
    %3032 = vmatpush1.msra.mxu0 0.0
    %3033 = vmatprep.subr.mxu0 0.0
    %3034 = vmatpush1.msra.mxu0 0.0
    %3035 = vmatprep.subr.mxu0 0.0
    %3036 = vmatpush1.msra.mxu0 0.0
    %3037 = vmatprep.subr.mxu0 0.0
    %3038 = vmatpush1.msra.mxu0 0.0
    %3039 = vmatprep.subr.mxu0 0.0
    %3040 = vmatpush1.msra.mxu0 0.0
    %3041 = vmatprep.subr.mxu0 0.0
    %3042 = vmatpush1.msra.mxu0 0.0
    %3043 = vmatprep.mubr.f32.mxu0 0.0
    %3044 = vmatmul.mubr.f32.gmra.mrb[0].mxu0 %v2974
    %v3045 = vpop.f32.mrb[0].mxu0
    %v3046 = vadd.f32 0.0, %v3045
    %v3047 = vpop.f32.mrb[0].mxu0
    %3048 = vmatprep.mubr.f32.mxu0 0.0
    %3049 = vmatmul.mubr.f32.gmra.mrb[0].mxu0 %v2977
    %v3050 = vpop.f32.mrb[0].mxu0
    %v3051 = vadd.f32 0.0, %v3050
    %v3052 = vpop.f32.mrb[0].mxu0
    %3053 = vdwg.mxu0
    %v3054 = vsel %vm337, %v2037, 0
    %v3056 = vsel %vm337, %v2039, 0
    %3058 = vmatprep.subr.mxu0 0.0
    %3059 = vmatpush1.msra.mxu0 %v2964
    %3060 = vmatprep.subr.mxu0 0.0
    %3061 = vmatpush1.msra.mxu0 %v2965
    %3062 = vmatprep.subr.mxu0 0.0
    %3063 = vmatpush1.msra.mxu0 %v2966
    %3064 = vmatprep.subr.mxu0 0.0
    %3065 = vmatpush1.msra.mxu0 %v2967
    %3066 = vmatprep.subr.mxu0 0.0
    %3067 = vmatpush1.msra.mxu0 0.0
    %3068 = vmatprep.subr.mxu0 0.0
    %3069 = vmatpush1.msra.mxu0 0.0
    %3070 = vmatprep.subr.mxu0 0.0
    %3071 = vmatpush1.msra.mxu0 0.0
    %3072 = vmatprep.subr.mxu0 0.0
    %3073 = vmatpush1.msra.mxu0 0.0
    %3074 = vmatprep.subr.mxu0 0.0
    %3075 = vmatpush1.msra.mxu0 0.0
    %3076 = vmatprep.subr.mxu0 0.0
    %3077 = vmatpush1.msra.mxu0 0.0
    %3078 = vmatprep.subr.mxu0 0.0
    %3079 = vmatpush1.msra.mxu0 0.0
    %3080 = vmatprep.subr.mxu0 0.0
    %3081 = vmatpush1.msra.mxu0 0.0
    %3082 = vmatprep.subr.mxu0 0.0
    %3083 = vmatpush1.msra.mxu0 0.0
    %3084 = vmatprep.subr.mxu0 0.0
    %3085 = vmatpush1.msra.mxu0 0.0
    %3086 = vmatprep.subr.mxu0 0.0
    %3087 = vmatpush1.msra.mxu0 0.0
    %3088 = vmatprep.subr.mxu0 0.0
    %3089 = vmatpush1.msra.mxu0 0.0
    %3090 = vmatprep.subr.mxu0 0.0
    %3091 = vmatpush1.msra.mxu0 0.0
    %3092 = vmatprep.subr.mxu0 0.0
    %3093 = vmatpush1.msra.mxu0 0.0
    %3094 = vmatprep.subr.mxu0 0.0
    %3095 = vmatpush1.msra.mxu0 0.0
    %3096 = vmatprep.subr.mxu0 0.0
    %3097 = vmatpush1.msra.mxu0 0.0
    %3098 = vmatprep.subr.mxu0 0.0
    %3099 = vmatpush1.msra.mxu0 0.0
    %3100 = vmatprep.subr.mxu0 0.0
    %3101 = vmatpush1.msra.mxu0 0.0
    %3102 = vmatprep.subr.mxu0 0.0
    %3103 = vmatpush1.msra.mxu0 0.0
    %3104 = vmatprep.subr.mxu0 0.0
    %3105 = vmatpush1.msra.mxu0 0.0
    %3106 = vmatprep.subr.mxu0 0.0
    %3107 = vmatpush1.msra.mxu0 0.0
    %3108 = vmatprep.subr.mxu0 0.0
    %3109 = vmatpush1.msra.mxu0 0.0
    %3110 = vmatprep.subr.mxu0 0.0
    %3111 = vmatpush1.msra.mxu0 0.0
    %3112 = vmatprep.subr.mxu0 0.0
    %3113 = vmatpush1.msra.mxu0 0.0
    %3114 = vmatprep.subr.mxu0 0.0
    %3115 = vmatpush1.msra.mxu0 0.0
    %3116 = vmatprep.subr.mxu0 0.0
    %3117 = vmatpush1.msra.mxu0 0.0
    %3118 = vmatprep.subr.mxu0 0.0
    %3119 = vmatpush1.msra.mxu0 0.0
    %3120 = vmatprep.subr.mxu0 0.0
    %3121 = vmatpush1.msra.mxu0 0.0
    %3122 = vmatprep.mubr.f32.mxu0 0.0
    %3123 = vmatmul.mubr.f32.gmra.mrb[0].mxu0 %v3054
    %v3124 = vpop.f32.mrb[0].mxu0
    %v3125 = vadd.f32 0.0, %v3124
    %v3126 = vpop.f32.mrb[0].mxu0
    %3127 = vmatprep.mubr.f32.mxu0 0.0
    %3128 = vmatmul.mubr.f32.gmra.mrb[0].mxu0 %v3056
    %v3129 = vpop.f32.mrb[0].mxu0
    %v3130 = vadd.f32 0.0, %v3129
    %v3131 = vpop.f32.mrb[0].mxu0
    %3132 = vdwg.mxu0
    %v3133 = vadd.f32 %v3046, %v3125
    %v3134 = vadd.f32 %v3051, %v3130
    %v3135 = vxor.u32 %v3133, 2147483648
    %v3136 = vxor.u32 %v3134, 2147483648
    %v3137 = vmul.f32 %v3135, 1.442695
    %v3138 = vpow.pop %v3137
    %v3139 = vmul.f32 %v3136, 1.442695
    %v3140 = vpow.pop %v3139
    %v3141 = vadd.f32 %v3138, 1.0
    %v3142 = vadd.f32 %v3140, 1.0
    %v3143 = vrcp.pop %v3141
    %v3144 = vmul.f32 1.0, %v3143
    %v3145 = vrcp.pop %v3142
    %v3146 = vmul.f32 1.0, %v3145
    %v3147 = vsub.f32 %v3133, 2.0
    %v3148 = vsub.f32 %v3134, 2.0
    %v3149 = vxor.u32 %v3147, 2147483648
    %v3150 = vxor.u32 %v3148, 2147483648
    %v3151 = vmul.f32 %v3149, 1.442695
    %v3152 = vpow.pop %v3151
    %v3153 = vmul.f32 %v3150, 1.442695
    %v3154 = vpow.pop %v3153
    %v3155 = vadd.f32 %v3152, 1.0
    %v3156 = vadd.f32 %v3154, 1.0
    %v3157 = vrcp.pop %v3155
    %v3158 = vmul.f32 1.0, %v3157
    %v3159 = vrcp.pop %v3156
    %v3160 = vmul.f32 1.0, %v3159
    %v3161 = vmul.f32 %v3144, %v2037
    %v3162 = vmul.f32 %v3146, %v2039
    %v3164 = vsel %vm337, %v3161, 0
    %v3167 = vsel %vm337, %v3162, 0
    %3169 = vmatprep.subr.mxu0 0.0
    %3170 = vmatpush1.msra.mxu0 %v2969
    %3171 = vmatprep.subr.mxu0 0.0
    %3172 = vmatpush1.msra.mxu0 %v2970
    %3173 = vmatprep.subr.mxu0 0.0
    %3174 = vmatpush1.msra.mxu0 %v2971
    %3175 = vmatprep.subr.mxu0 0.0
    %3176 = vmatpush1.msra.mxu0 %v2972
    %3177 = vmatprep.subr.mxu0 0.0
    %3178 = vmatpush1.msra.mxu0 0.0
    %3179 = vmatprep.subr.mxu0 0.0
    %3180 = vmatpush1.msra.mxu0 0.0
    %3181 = vmatprep.subr.mxu0 0.0
    %3182 = vmatpush1.msra.mxu0 0.0
    %3183 = vmatprep.subr.mxu0 0.0
    %3184 = vmatpush1.msra.mxu0 0.0
    %3185 = vmatprep.subr.mxu0 0.0
    %3186 = vmatpush1.msra.mxu0 0.0
    %3187 = vmatprep.subr.mxu0 0.0
    %3188 = vmatpush1.msra.mxu0 0.0
    %3189 = vmatprep.subr.mxu0 0.0
    %3190 = vmatpush1.msra.mxu0 0.0
    %3191 = vmatprep.subr.mxu0 0.0
    %3192 = vmatpush1.msra.mxu0 0.0
    %3193 = vmatprep.subr.mxu0 0.0
    %3194 = vmatpush1.msra.mxu0 0.0
    %3195 = vmatprep.subr.mxu0 0.0
    %3196 = vmatpush1.msra.mxu0 0.0
    %3197 = vmatprep.subr.mxu0 0.0
    %3198 = vmatpush1.msra.mxu0 0.0
    %3199 = vmatprep.subr.mxu0 0.0
    %3200 = vmatpush1.msra.mxu0 0.0
    %3201 = vmatprep.subr.mxu0 0.0
    %3202 = vmatpush1.msra.mxu0 0.0
    %3203 = vmatprep.subr.mxu0 0.0
    %3204 = vmatpush1.msra.mxu0 0.0
    %3205 = vmatprep.subr.mxu0 0.0
    %3206 = vmatpush1.msra.mxu0 0.0
    %3207 = vmatprep.subr.mxu0 0.0
    %3208 = vmatpush1.msra.mxu0 0.0
    %3209 = vmatprep.subr.mxu0 0.0
    %3210 = vmatpush1.msra.mxu0 0.0
    %3211 = vmatprep.subr.mxu0 0.0
    %3212 = vmatpush1.msra.mxu0 0.0
    %3213 = vmatprep.subr.mxu0 0.0
    %3214 = vmatpush1.msra.mxu0 0.0
    %3215 = vmatprep.subr.mxu0 0.0
    %3216 = vmatpush1.msra.mxu0 0.0
    %3217 = vmatprep.subr.mxu0 0.0
    %3218 = vmatpush1.msra.mxu0 0.0
    %3219 = vmatprep.subr.mxu0 0.0
    %3220 = vmatpush1.msra.mxu0 0.0
    %3221 = vmatprep.subr.mxu0 0.0
    %3222 = vmatpush1.msra.mxu0 0.0
    %3223 = vmatprep.subr.mxu0 0.0
    %3224 = vmatpush1.msra.mxu0 0.0
    %3225 = vmatprep.subr.mxu0 0.0
    %3226 = vmatpush1.msra.mxu0 0.0
    %3227 = vmatprep.subr.mxu0 0.0
    %3228 = vmatpush1.msra.mxu0 0.0
    %3229 = vmatprep.subr.mxu0 0.0
    %3230 = vmatpush1.msra.mxu0 0.0
    %3231 = vmatprep.subr.mxu0 0.0
    %3232 = vmatpush1.msra.mxu0 0.0
    %3233 = vmatprep.mubr.f32.mxu0 0.0
    %3234 = vmatmul.mubr.f32.gmra.mrb[0].mxu0 %v3164
    %v3235 = vpop.f32.mrb[0].mxu0
    %v3236 = vadd.f32 0.0, %v3235
    %v3237 = vpop.f32.mrb[0].mxu0
    %3238 = vmatprep.mubr.f32.mxu0 0.0
    %3239 = vmatmul.mubr.f32.gmra.mrb[0].mxu0 %v3167
    %v3240 = vpop.f32.mrb[0].mxu0
    %v3241 = vadd.f32 0.0, %v3240
    %v3242 = vpop.f32.mrb[0].mxu0
    %3243 = vdwg.mxu0
    %3246 = vrot.lane.b32.xlu0 %v3236, 64
    %v3247 = vpop.permute.xlu0 %3246
    %3248 = vrot.lane.b32.xlu0 %v3241, 64
    %v3249 = vpop.permute.xlu0 %3248
    %v3252 = vadd.f32 %v3046, %v3247
    %v3253 = vadd.f32 %v3051, %v3249
    %v3254 = vtanh.pop %v3252
    %v3255 = vtanh.pop %v3253
    %v3256 = vsub.f32 1.0, %v3158
    %v3257 = vsub.f32 1.0, %v3160
    %v3258 = vmul.f32 %v3256, %v2030
    %v3259 = vmul.f32 %v3257, %v2031
    %3262 = vrot.lane.b32.xlu0 %v3254, 96
    %v3263 = vpop.permute.xlu0 %3262
    %3264 = vrot.lane.b32.xlu0 %v3255, 96
    %v3265 = vpop.permute.xlu0 %3264
    %v3268 = vmul.f32 %v3158, %v3263
    %v3269 = vmul.f32 %v3160, %v3265
    %v3270 = vadd.f32 %v3258, %v3268
    %v3271 = vadd.f32 %v3259, %v3269
    %3274 = vrot.lane.b32.xlu0 %v3270, 96
    %v3275 = vpop.permute.xlu0 %3274
    %3276 = vrot.lane.b32.xlu0 %v3271, 96
    %v3277 = vpop.permute.xlu0 %3276
    %v3280 = vsel %vm337, %v3275, 0.0
    %3281 = vadd.xlane.f32.xlu0 %v3280
    %v3282 = vpop.xlane.xlu0 %3281
    %v3283 = vsel %vm337, %v3277, 0.0
    %3284 = vadd.xlane.f32.xlu0 %v3283
    %v3285 = vpop.xlane.xlu0 %3284
    %v3286 = vmul.f32 %v3282, %v344
    %v3287 = vmul.f32 %v3285, %v344
    %v3288 = vsub.f32 %v3270, %v3286
    %v3289 = vsub.f32 %v3271, %v3287
    %v3290 = vmul.f32 %v3288, %v3288
    %v3291 = vmul.f32 %v3289, %v3289
    %3294 = vrot.lane.b32.xlu0 %v3290, 96
    %v3295 = vpop.permute.xlu0 %3294
    %3296 = vrot.lane.b32.xlu0 %v3291, 96
    %v3297 = vpop.permute.xlu0 %3296
    %v3300 = vsel %vm337, %v3295, 0.0
    %3301 = vadd.xlane.f32.xlu0 %v3300
    %v3302 = vpop.xlane.xlu0 %3301
    %v3303 = vsel %vm337, %v3297, 0.0
    %3304 = vadd.xlane.f32.xlu0 %v3303
    %v3305 = vpop.xlane.xlu0 %3304
    %v3306 = vmul.f32 %v3302, %v344
    %v3307 = vmul.f32 %v3305, %v344
    %v3308 = vadd.f32 %v3306, 1e-05
    %v3309 = vadd.f32 %v3307, 1e-05
    %v3310 = vrsqrt.pop %v3308
    %v3311 = vrsqrt.pop %v3309
    %v3312 = vmul.f32 %v3288, %v3310
    %v3313 = vmul.f32 %v3289, %v3311
    %v3314 = vlaneseq
    %v3315 = vshrl.u32 %v3314, 7
    %v3316 = vsub.s32 2, %v3315
    %v3317 = vrot.slane %v2033, %v3316
    %3319 = vrot.lane.b32.xlu0 %v3317, 32
    %v3320 = vpop.permute.xlu0 %3319
    %v3322 = vmul.f32 %v3312, %v3320
    %v3323 = vmul.f32 %v3313, %v3320
    %v3324 = vlaneseq
    %v3325 = vshrl.u32 %v3324, 7
    %v3326 = vsub.s32 3, %v3325
    %v3327 = vrot.slane %v2033, %v3326
    %3329 = vrot.lane.b32.xlu0 %v3327, 32
    %v3330 = vpop.permute.xlu0 %3329
    %v3332 = vadd.f32 %v3322, %v3330
    %v3333 = vadd.f32 %v3323, %v3330
    %s3334 = scalar_lea.vmem %s9, 32
    %v3335 = vld [vmem:[%s3334] sm:$0xff]
    %v3336 = vld [vmem:[%s3334 + $0x8] sm:$0xff]
    %v3337 = vld [vmem:[%s3334 + $0x10] sm:$0xff]
    %v3338 = vld [vmem:[%s3334 + $0x18] sm:$0xff]
    %s3339 = scalar_lea.vmem [#allocation8], 1
    %v3340 = vld [vmem:[%s3339] sm:$0x1]
    %v3342 = vlaneseq
    %v3343 = vshrl.u32 %v3342, 7
    %v3344 = vsub.s32 0, %v3343
    %v3345 = vrot.slane %v3340, %v3344
    %3349 = vrot.lane.b32.xlu0 %v3332, 96
    %v3350 = vpop.permute.xlu0 %3349
    %3351 = vrot.lane.b32.xlu0 %v3333, 96
    %v3352 = vpop.permute.xlu0 %3351
    %v3353 = vsel %vm337, %v3350, 0
    %v3355 = vsel %vm337, %v3352, 0
    %3357 = vmatprep.subr.mxu0 0.0
    %3358 = vmatpush1.msra.mxu0 %v3335
    %3359 = vmatprep.subr.mxu0 0.0
    %3360 = vmatpush1.msra.mxu0 %v3336
    %3361 = vmatprep.subr.mxu0 0.0
    %3362 = vmatpush1.msra.mxu0 %v3337
    %3363 = vmatprep.subr.mxu0 0.0
    %3364 = vmatpush1.msra.mxu0 %v3338
    %3365 = vmatprep.subr.mxu0 0.0
    %3366 = vmatpush1.msra.mxu0 0.0
    %3367 = vmatprep.subr.mxu0 0.0
    %3368 = vmatpush1.msra.mxu0 0.0
    %3369 = vmatprep.subr.mxu0 0.0
    %3370 = vmatpush1.msra.mxu0 0.0
    %3371 = vmatprep.subr.mxu0 0.0
    %3372 = vmatpush1.msra.mxu0 0.0
    %3373 = vmatprep.subr.mxu0 0.0
    %3374 = vmatpush1.msra.mxu0 0.0
    %3375 = vmatprep.subr.mxu0 0.0
    %3376 = vmatpush1.msra.mxu0 0.0
    %3377 = vmatprep.subr.mxu0 0.0
    %3378 = vmatpush1.msra.mxu0 0.0
    %3379 = vmatprep.subr.mxu0 0.0
    %3380 = vmatpush1.msra.mxu0 0.0
    %3381 = vmatprep.subr.mxu0 0.0
    %3382 = vmatpush1.msra.mxu0 0.0
    %3383 = vmatprep.subr.mxu0 0.0
    %3384 = vmatpush1.msra.mxu0 0.0
    %3385 = vmatprep.subr.mxu0 0.0
    %3386 = vmatpush1.msra.mxu0 0.0
    %3387 = vmatprep.subr.mxu0 0.0
    %3388 = vmatpush1.msra.mxu0 0.0
    %3389 = vmatprep.subr.mxu0 0.0
    %3390 = vmatpush1.msra.mxu0 0.0
    %3391 = vmatprep.subr.mxu0 0.0
    %3392 = vmatpush1.msra.mxu0 0.0
    %3393 = vmatprep.subr.mxu0 0.0
    %3394 = vmatpush1.msra.mxu0 0.0
    %3395 = vmatprep.subr.mxu0 0.0
    %3396 = vmatpush1.msra.mxu0 0.0
    %3397 = vmatprep.subr.mxu0 0.0
    %3398 = vmatpush1.msra.mxu0 0.0
    %3399 = vmatprep.subr.mxu0 0.0
    %3400 = vmatpush1.msra.mxu0 0.0
    %3401 = vmatprep.subr.mxu0 0.0
    %3402 = vmatpush1.msra.mxu0 0.0
    %3403 = vmatprep.subr.mxu0 0.0
    %3404 = vmatpush1.msra.mxu0 0.0
    %3405 = vmatprep.subr.mxu0 0.0
    %3406 = vmatpush1.msra.mxu0 0.0
    %3407 = vmatprep.subr.mxu0 0.0
    %3408 = vmatpush1.msra.mxu0 0.0
    %3409 = vmatprep.subr.mxu0 0.0
    %3410 = vmatpush1.msra.mxu0 0.0
    %3411 = vmatprep.subr.mxu0 0.0
    %3412 = vmatpush1.msra.mxu0 0.0
    %3413 = vmatprep.subr.mxu0 0.0
    %3414 = vmatpush1.msra.mxu0 0.0
    %3415 = vmatprep.subr.mxu0 0.0
    %3416 = vmatpush1.msra.mxu0 0.0
    %3417 = vmatprep.subr.mxu0 0.0
    %3418 = vmatpush1.msra.mxu0 0.0
    %3419 = vmatprep.subr.mxu0 0.0
    %3420 = vmatpush1.msra.mxu0 0.0
    %3421 = vmatprep.mubr.f32.mxu0 0.0
    %3422 = vmatmul.mubr.f32.gmra.mrb[0].mxu0 %v3353
    %v3423 = vpop.f32.mrb[0].mxu0
    %v3424 = vadd.f32 %v3345, %v3423
    %v3425 = vpop.f32.mrb[0].mxu0
    %3426 = vmatprep.mubr.f32.mxu0 0.0
    %3427 = vmatmul.mubr.f32.gmra.mrb[0].mxu0 %v3355
    %v3428 = vpop.f32.mrb[0].mxu0
    %v3429 = vadd.f32 %v3345, %v3428
    %v3430 = vpop.f32.mrb[0].mxu0
    %3431 = vdwg.mxu0
    %v3432 = vmax.f32 %v3424, 0.0
    %v3433 = vmax.f32 %v3429, 0.0
    %s3434 = scalar_lea.vmem %s14, 32
    %v3435 = vld [vmem:[%s3434] sm:$0xff]
    %v3436 = vld [vmem:[%s3434 + $0x8] sm:$0xff]
    %v3437 = vld [vmem:[%s3434 + $0x10] sm:$0xff]
    %v3438 = vld [vmem:[%s3434 + $0x18] sm:$0xff]
    %s3439 = scalar_lea.vmem [#allocation14], 32
    %v3440 = vld [vmem:[%s3439] sm:$0xff]
    %v3441 = vld [vmem:[%s3439 + $0x8] sm:$0xff]
    %v3442 = vld [vmem:[%s3439 + $0x10] sm:$0xff]
    %v3443 = vld [vmem:[%s3439 + $0x18] sm:$0xff]
    %s3444 = scalar_lea.vmem [#allocation16], 32
    %v3445 = vld [vmem:[%s3444] sm:$0xff]
    %v3446 = vld [vmem:[%s3444 + $0x8] sm:$0xff]
    %v3447 = vld [vmem:[%s3444 + $0x10] sm:$0xff]
    %v3448 = vld [vmem:[%s3444 + $0x18] sm:$0xff]
    %v3450 = vsel %vm337, %v3432, 0
    %v3453 = vsel %vm337, %v3433, 0
    %3455 = vmatprep.subr.mxu0 0.0
    %3456 = vmatpush1.msra.mxu0 %v3435
    %3457 = vmatprep.subr.mxu0 0.0
    %3458 = vmatpush1.msra.mxu0 %v3436
    %3459 = vmatprep.subr.mxu0 0.0
    %3460 = vmatpush1.msra.mxu0 %v3437
    %3461 = vmatprep.subr.mxu0 0.0
    %3462 = vmatpush1.msra.mxu0 %v3438
    %3463 = vmatprep.subr.mxu0 0.0
    %3464 = vmatpush1.msra.mxu0 0.0
    %3465 = vmatprep.subr.mxu0 0.0
    %3466 = vmatpush1.msra.mxu0 0.0
    %3467 = vmatprep.subr.mxu0 0.0
    %3468 = vmatpush1.msra.mxu0 0.0
    %3469 = vmatprep.subr.mxu0 0.0
    %3470 = vmatpush1.msra.mxu0 0.0
    %3471 = vmatprep.subr.mxu0 0.0
    %3472 = vmatpush1.msra.mxu0 0.0
    %3473 = vmatprep.subr.mxu0 0.0
    %3474 = vmatpush1.msra.mxu0 0.0
    %3475 = vmatprep.subr.mxu0 0.0
    %3476 = vmatpush1.msra.mxu0 0.0
    %3477 = vmatprep.subr.mxu0 0.0
    %3478 = vmatpush1.msra.mxu0 0.0
    %3479 = vmatprep.subr.mxu0 0.0
    %3480 = vmatpush1.msra.mxu0 0.0
    %3481 = vmatprep.subr.mxu0 0.0
    %3482 = vmatpush1.msra.mxu0 0.0
    %3483 = vmatprep.subr.mxu0 0.0
    %3484 = vmatpush1.msra.mxu0 0.0
    %3485 = vmatprep.subr.mxu0 0.0
    %3486 = vmatpush1.msra.mxu0 0.0
    %3487 = vmatprep.subr.mxu0 0.0
    %3488 = vmatpush1.msra.mxu0 0.0
    %3489 = vmatprep.subr.mxu0 0.0
    %3490 = vmatpush1.msra.mxu0 0.0
    %3491 = vmatprep.subr.mxu0 0.0
    %3492 = vmatpush1.msra.mxu0 0.0
    %3493 = vmatprep.subr.mxu0 0.0
    %3494 = vmatpush1.msra.mxu0 0.0
    %3495 = vmatprep.subr.mxu0 0.0
    %3496 = vmatpush1.msra.mxu0 0.0
    %3497 = vmatprep.subr.mxu0 0.0
    %3498 = vmatpush1.msra.mxu0 0.0
    %3499 = vmatprep.subr.mxu0 0.0
    %3500 = vmatpush1.msra.mxu0 0.0
    %3501 = vmatprep.subr.mxu0 0.0
    %3502 = vmatpush1.msra.mxu0 0.0
    %3503 = vmatprep.subr.mxu0 0.0
    %3504 = vmatpush1.msra.mxu0 0.0
    %3505 = vmatprep.subr.mxu0 0.0
    %3506 = vmatpush1.msra.mxu0 0.0
    %3507 = vmatprep.subr.mxu0 0.0
    %3508 = vmatpush1.msra.mxu0 0.0
    %3509 = vmatprep.subr.mxu0 0.0
    %3510 = vmatpush1.msra.mxu0 0.0
    %3511 = vmatprep.subr.mxu0 0.0
    %3512 = vmatpush1.msra.mxu0 0.0
    %3513 = vmatprep.subr.mxu0 0.0
    %3514 = vmatpush1.msra.mxu0 0.0
    %3515 = vmatprep.subr.mxu0 0.0
    %3516 = vmatpush1.msra.mxu0 0.0
    %3517 = vmatprep.subr.mxu0 0.0
    %3518 = vmatpush1.msra.mxu0 0.0
    %3519 = vmatprep.mubr.f32.mxu0 0.0
    %3520 = vmatmul.mubr.f32.gmra.mrb[0].mxu0 %v3450
    %v3521 = vpop.f32.mrb[0].mxu0
    %v3522 = vadd.f32 0.0, %v3521
    %v3523 = vpop.f32.mrb[0].mxu0
    %3524 = vmatprep.mubr.f32.mxu0 0.0
    %3525 = vmatmul.mubr.f32.gmra.mrb[0].mxu0 %v3453
    %v3526 = vpop.f32.mrb[0].mxu0
    %v3527 = vadd.f32 0.0, %v3526
    %v3528 = vpop.f32.mrb[0].mxu0
    %3529 = vdwg.mxu0
    %v3530 = vsel %vm337, %v3275, 0
    %v3532 = vsel %vm337, %v3277, 0
    %3534 = vmatprep.subr.mxu0 0.0
    %3535 = vmatpush1.msra.mxu0 %v3440
    %3536 = vmatprep.subr.mxu0 0.0
    %3537 = vmatpush1.msra.mxu0 %v3441
    %3538 = vmatprep.subr.mxu0 0.0
    %3539 = vmatpush1.msra.mxu0 %v3442
    %3540 = vmatprep.subr.mxu0 0.0
    %3541 = vmatpush1.msra.mxu0 %v3443
    %3542 = vmatprep.subr.mxu0 0.0
    %3543 = vmatpush1.msra.mxu0 0.0
    %3544 = vmatprep.subr.mxu0 0.0
    %3545 = vmatpush1.msra.mxu0 0.0
    %3546 = vmatprep.subr.mxu0 0.0
    %3547 = vmatpush1.msra.mxu0 0.0
    %3548 = vmatprep.subr.mxu0 0.0
    %3549 = vmatpush1.msra.mxu0 0.0
    %3550 = vmatprep.subr.mxu0 0.0
    %3551 = vmatpush1.msra.mxu0 0.0
    %3552 = vmatprep.subr.mxu0 0.0
    %3553 = vmatpush1.msra.mxu0 0.0
    %3554 = vmatprep.subr.mxu0 0.0
    %3555 = vmatpush1.msra.mxu0 0.0
    %3556 = vmatprep.subr.mxu0 0.0
    %3557 = vmatpush1.msra.mxu0 0.0
    %3558 = vmatprep.subr.mxu0 0.0
    %3559 = vmatpush1.msra.mxu0 0.0
    %3560 = vmatprep.subr.mxu0 0.0
    %3561 = vmatpush1.msra.mxu0 0.0
    %3562 = vmatprep.subr.mxu0 0.0
    %3563 = vmatpush1.msra.mxu0 0.0
    %3564 = vmatprep.subr.mxu0 0.0
    %3565 = vmatpush1.msra.mxu0 0.0
    %3566 = vmatprep.subr.mxu0 0.0
    %3567 = vmatpush1.msra.mxu0 0.0
    %3568 = vmatprep.subr.mxu0 0.0
    %3569 = vmatpush1.msra.mxu0 0.0
    %3570 = vmatprep.subr.mxu0 0.0
    %3571 = vmatpush1.msra.mxu0 0.0
    %3572 = vmatprep.subr.mxu0 0.0
    %3573 = vmatpush1.msra.mxu0 0.0
    %3574 = vmatprep.subr.mxu0 0.0
    %3575 = vmatpush1.msra.mxu0 0.0
    %3576 = vmatprep.subr.mxu0 0.0
    %3577 = vmatpush1.msra.mxu0 0.0
    %3578 = vmatprep.subr.mxu0 0.0
    %3579 = vmatpush1.msra.mxu0 0.0
    %3580 = vmatprep.subr.mxu0 0.0
    %3581 = vmatpush1.msra.mxu0 0.0
    %3582 = vmatprep.subr.mxu0 0.0
    %3583 = vmatpush1.msra.mxu0 0.0
    %3584 = vmatprep.subr.mxu0 0.0
    %3585 = vmatpush1.msra.mxu0 0.0
    %3586 = vmatprep.subr.mxu0 0.0
    %3587 = vmatpush1.msra.mxu0 0.0
    %3588 = vmatprep.subr.mxu0 0.0
    %3589 = vmatpush1.msra.mxu0 0.0
    %3590 = vmatprep.subr.mxu0 0.0
    %3591 = vmatpush1.msra.mxu0 0.0
    %3592 = vmatprep.subr.mxu0 0.0
    %3593 = vmatpush1.msra.mxu0 0.0
    %3594 = vmatprep.subr.mxu0 0.0
    %3595 = vmatpush1.msra.mxu0 0.0
    %3596 = vmatprep.subr.mxu0 0.0
    %3597 = vmatpush1.msra.mxu0 0.0
    %3598 = vmatprep.mubr.f32.mxu0 0.0
    %3599 = vmatmul.mubr.f32.gmra.mrb[0].mxu0 %v3530
    %v3600 = vpop.f32.mrb[0].mxu0
    %v3601 = vadd.f32 0.0, %v3600
    %v3602 = vpop.f32.mrb[0].mxu0
    %3603 = vmatprep.mubr.f32.mxu0 0.0
    %3604 = vmatmul.mubr.f32.gmra.mrb[0].mxu0 %v3532
    %v3605 = vpop.f32.mrb[0].mxu0
    %v3606 = vadd.f32 0.0, %v3605
    %v3607 = vpop.f32.mrb[0].mxu0
    %3608 = vdwg.mxu0
    %v3609 = vadd.f32 %v3522, %v3601
    %v3610 = vadd.f32 %v3527, %v3606
    %v3611 = vxor.u32 %v3609, 2147483648
    %v3612 = vxor.u32 %v3610, 2147483648
    %v3613 = vmul.f32 %v3611, 1.442695
    %v3614 = vpow.pop %v3613
    %v3615 = vmul.f32 %v3612, 1.442695
    %v3616 = vpow.pop %v3615
    %v3617 = vadd.f32 %v3614, 1.0
    %v3618 = vadd.f32 %v3616, 1.0
    %v3619 = vrcp.pop %v3617
    %v3620 = vmul.f32 1.0, %v3619
    %v3621 = vrcp.pop %v3618
    %v3622 = vmul.f32 1.0, %v3621
    %v3623 = vsub.f32 %v3609, 2.0
    %v3624 = vsub.f32 %v3610, 2.0
    %v3625 = vxor.u32 %v3623, 2147483648
    %v3626 = vxor.u32 %v3624, 2147483648
    %v3627 = vmul.f32 %v3625, 1.442695
    %v3628 = vpow.pop %v3627
    %v3629 = vmul.f32 %v3626, 1.442695
    %v3630 = vpow.pop %v3629
    %v3631 = vadd.f32 %v3628, 1.0
    %v3632 = vadd.f32 %v3630, 1.0
    %v3633 = vrcp.pop %v3631
    %v3634 = vmul.f32 1.0, %v3633
    %v3635 = vrcp.pop %v3632
    %v3636 = vmul.f32 1.0, %v3635
    %v3637 = vmul.f32 %v3620, %v3275
    %v3638 = vmul.f32 %v3622, %v3277
    %v3640 = vsel %vm337, %v3637, 0
    %v3643 = vsel %vm337, %v3638, 0
    %3645 = vmatprep.subr.mxu0 0.0
    %3646 = vmatpush1.msra.mxu0 %v3445
    %3647 = vmatprep.subr.mxu0 0.0
    %3648 = vmatpush1.msra.mxu0 %v3446
    %3649 = vmatprep.subr.mxu0 0.0
    %3650 = vmatpush1.msra.mxu0 %v3447
    %3651 = vmatprep.subr.mxu0 0.0
    %3652 = vmatpush1.msra.mxu0 %v3448
    %3653 = vmatprep.subr.mxu0 0.0
    %3654 = vmatpush1.msra.mxu0 0.0
    %3655 = vmatprep.subr.mxu0 0.0
    %3656 = vmatpush1.msra.mxu0 0.0
    %3657 = vmatprep.subr.mxu0 0.0
    %3658 = vmatpush1.msra.mxu0 0.0
    %3659 = vmatprep.subr.mxu0 0.0
    %3660 = vmatpush1.msra.mxu0 0.0
    %3661 = vmatprep.subr.mxu0 0.0
    %3662 = vmatpush1.msra.mxu0 0.0
    %3663 = vmatprep.subr.mxu0 0.0
    %3664 = vmatpush1.msra.mxu0 0.0
    %3665 = vmatprep.subr.mxu0 0.0
    %3666 = vmatpush1.msra.mxu0 0.0
    %3667 = vmatprep.subr.mxu0 0.0
    %3668 = vmatpush1.msra.mxu0 0.0
    %3669 = vmatprep.subr.mxu0 0.0
    %3670 = vmatpush1.msra.mxu0 0.0
    %3671 = vmatprep.subr.mxu0 0.0
    %3672 = vmatpush1.msra.mxu0 0.0
    %3673 = vmatprep.subr.mxu0 0.0
    %3674 = vmatpush1.msra.mxu0 0.0
    %3675 = vmatprep.subr.mxu0 0.0
    %3676 = vmatpush1.msra.mxu0 0.0
    %3677 = vmatprep.subr.mxu0 0.0
    %3678 = vmatpush1.msra.mxu0 0.0
    %3679 = vmatprep.subr.mxu0 0.0
    %3680 = vmatpush1.msra.mxu0 0.0
    %3681 = vmatprep.subr.mxu0 0.0
    %3682 = vmatpush1.msra.mxu0 0.0
    %3683 = vmatprep.subr.mxu0 0.0
    %3684 = vmatpush1.msra.mxu0 0.0
    %3685 = vmatprep.subr.mxu0 0.0
    %3686 = vmatpush1.msra.mxu0 0.0
    %3687 = vmatprep.subr.mxu0 0.0
    %3688 = vmatpush1.msra.mxu0 0.0
    %3689 = vmatprep.subr.mxu0 0.0
    %3690 = vmatpush1.msra.mxu0 0.0
    %3691 = vmatprep.subr.mxu0 0.0
    %3692 = vmatpush1.msra.mxu0 0.0
    %3693 = vmatprep.subr.mxu0 0.0
    %3694 = vmatpush1.msra.mxu0 0.0
    %3695 = vmatprep.subr.mxu0 0.0
    %3696 = vmatpush1.msra.mxu0 0.0
    %3697 = vmatprep.subr.mxu0 0.0
    %3698 = vmatpush1.msra.mxu0 0.0
    %3699 = vmatprep.subr.mxu0 0.0
    %3700 = vmatpush1.msra.mxu0 0.0
    %3701 = vmatprep.subr.mxu0 0.0
    %3702 = vmatpush1.msra.mxu0 0.0
    %3703 = vmatprep.subr.mxu0 0.0
    %3704 = vmatpush1.msra.mxu0 0.0
    %3705 = vmatprep.subr.mxu0 0.0
    %3706 = vmatpush1.msra.mxu0 0.0
    %3707 = vmatprep.subr.mxu0 0.0
    %3708 = vmatpush1.msra.mxu0 0.0
    %3709 = vmatprep.mubr.f32.mxu0 0.0
    %3710 = vmatmul.mubr.f32.gmra.mrb[0].mxu0 %v3640
    %v3711 = vpop.f32.mrb[0].mxu0
    %v3712 = vadd.f32 0.0, %v3711
    %v3713 = vpop.f32.mrb[0].mxu0
    %3714 = vmatprep.mubr.f32.mxu0 0.0
    %3715 = vmatmul.mubr.f32.gmra.mrb[0].mxu0 %v3643
    %v3716 = vpop.f32.mrb[0].mxu0
    %v3717 = vadd.f32 0.0, %v3716
    %v3718 = vpop.f32.mrb[0].mxu0
    %3719 = vdwg.mxu0
    %3722 = vrot.lane.b32.xlu0 %v3712, 64
    %v3723 = vpop.permute.xlu0 %3722
    %3724 = vrot.lane.b32.xlu0 %v3717, 64
    %v3725 = vpop.permute.xlu0 %3724
    %v3728 = vadd.f32 %v3522, %v3723
    %v3729 = vadd.f32 %v3527, %v3725
    %v3730 = vtanh.pop %v3728
    %v3731 = vtanh.pop %v3729
    %v3732 = vsub.f32 1.0, %v3634
    %v3733 = vsub.f32 1.0, %v3636
    %v3734 = vmul.f32 %v3732, %v3270
    %v3735 = vmul.f32 %v3733, %v3271
    %3738 = vrot.lane.b32.xlu0 %v3730, 96
    %v3739 = vpop.permute.xlu0 %3738
    %3740 = vrot.lane.b32.xlu0 %v3731, 96
    %v3741 = vpop.permute.xlu0 %3740
    %v3744 = vmul.f32 %v3634, %v3739
    %v3745 = vmul.f32 %v3636, %v3741
    %v3746 = vadd.f32 %v3734, %v3744
    %v3747 = vadd.f32 %v3735, %v3745
    %v3749 = vrot.slane %v3746, 7
    %v3752 = vrot.slane %v3747, 6
    %vm3754 = vcmask 1040384
    %v3755 = vsel %vm3754, %v3749, %v3752
    %v3756 = vtanh.pop %v3755
    %v3757 = vld [vmem:[#allocation17] sm:$0xff]
    %v3758 = vld [vmem:[#allocation17 + $0x8] sm:$0xff]
    %v3759 = vld [vmem:[#allocation17 + $0x10] sm:$0xff]
    %v3760 = vld [vmem:[#allocation17 + $0x18] sm:$0xff]
    %v3761 = vld [vmem:[#allocation19] sm:$0x1]
    %v3763 = vlaneseq
    %v3764 = vshrl.u32 %v3763, 7
    %v3765 = vsub.s32 0, %v3764
    %v3766 = vrot.slane %v3761, %v3765
    %3769 = vrot.lane.b32.xlu0 %v3756, 96
    %v3770 = vpop.permute.xlu0 %3769
    %v3771 = vsel %vm337, %v3770, 0
    %3773 = vmatprep.subr.mxu0 0.0
    %3774 = vmatpush1.msra.mxu0 %v3757
    %3775 = vmatprep.subr.mxu0 0.0
    %3776 = vmatpush1.msra.mxu0 %v3758
    %3777 = vmatprep.subr.mxu0 0.0
    %3778 = vmatpush1.msra.mxu0 %v3759
    %3779 = vmatprep.subr.mxu0 0.0
    %3780 = vmatpush1.msra.mxu0 %v3760
    %3781 = vmatprep.subr.mxu0 0.0
    %3782 = vmatpush1.msra.mxu0 0.0
    %3783 = vmatprep.subr.mxu0 0.0
    %3784 = vmatpush1.msra.mxu0 0.0
    %3785 = vmatprep.subr.mxu0 0.0
    %3786 = vmatpush1.msra.mxu0 0.0
    %3787 = vmatprep.subr.mxu0 0.0
    %3788 = vmatpush1.msra.mxu0 0.0
    %3789 = vmatprep.subr.mxu0 0.0
    %3790 = vmatpush1.msra.mxu0 0.0
    %3791 = vmatprep.subr.mxu0 0.0
    %3792 = vmatpush1.msra.mxu0 0.0
    %3793 = vmatprep.subr.mxu0 0.0
    %3794 = vmatpush1.msra.mxu0 0.0
    %3795 = vmatprep.subr.mxu0 0.0
    %3796 = vmatpush1.msra.mxu0 0.0
    %3797 = vmatprep.subr.mxu0 0.0
    %3798 = vmatpush1.msra.mxu0 0.0
    %3799 = vmatprep.subr.mxu0 0.0
    %3800 = vmatpush1.msra.mxu0 0.0
    %3801 = vmatprep.subr.mxu0 0.0
    %3802 = vmatpush1.msra.mxu0 0.0
    %3803 = vmatprep.subr.mxu0 0.0
    %3804 = vmatpush1.msra.mxu0 0.0
    %3805 = vmatprep.subr.mxu0 0.0
    %3806 = vmatpush1.msra.mxu0 0.0
    %3807 = vmatprep.subr.mxu0 0.0
    %3808 = vmatpush1.msra.mxu0 0.0
    %3809 = vmatprep.subr.mxu0 0.0
    %3810 = vmatpush1.msra.mxu0 0.0
    %3811 = vmatprep.subr.mxu0 0.0
    %3812 = vmatpush1.msra.mxu0 0.0
    %3813 = vmatprep.subr.mxu0 0.0
    %3814 = vmatpush1.msra.mxu0 0.0
    %3815 = vmatprep.subr.mxu0 0.0
    %3816 = vmatpush1.msra.mxu0 0.0
    %3817 = vmatprep.subr.mxu0 0.0
    %3818 = vmatpush1.msra.mxu0 0.0
    %3819 = vmatprep.subr.mxu0 0.0
    %3820 = vmatpush1.msra.mxu0 0.0
    %3821 = vmatprep.subr.mxu0 0.0
    %3822 = vmatpush1.msra.mxu0 0.0
    %3823 = vmatprep.subr.mxu0 0.0
    %3824 = vmatpush1.msra.mxu0 0.0
    %3825 = vmatprep.subr.mxu0 0.0
    %3826 = vmatpush1.msra.mxu0 0.0
    %3827 = vmatprep.subr.mxu0 0.0
    %3828 = vmatpush1.msra.mxu0 0.0
    %3829 = vmatprep.subr.mxu0 0.0
    %3830 = vmatpush1.msra.mxu0 0.0
    %3831 = vmatprep.subr.mxu0 0.0
    %3832 = vmatpush1.msra.mxu0 0.0
    %3833 = vmatprep.subr.mxu0 0.0
    %3834 = vmatpush1.msra.mxu0 0.0
    %3835 = vmatprep.subr.mxu0 0.0
    %3836 = vmatpush1.msra.mxu0 0.0
    %3837 = vmatprep.mubr.f32.mxu0 0.0
    %3838 = vmatmul.mubr.f32.gmra.mrb[0].mxu0 %v3771
    %v3839 = vpop.f32.mrb[0].mxu0
    %v3840 = vadd.f32 %v3766, %v3839
    %v3841 = vpop.f32.mrb[0].mxu0
    %3842 = vdwg.mxu0
    %v3843 = vtanh.pop %v3840
    %v3844 = vld [vmem:[%s19] sm:$0xff]
    %v3845 = vld [vmem:[%s19 + $0x8] sm:$0xff]
    %v3846 = vld [vmem:[%s19 + $0x10] sm:$0xff]
    %v3847 = vld [vmem:[%s19 + $0x18] sm:$0xff]
    %v3848 = vld [vmem:[#allocation20] sm:$0x1]
    %v3850 = vlaneseq
    %v3851 = vshrl.u32 %v3850, 7
    %v3852 = vsub.s32 0, %v3851
    %v3853 = vrot.slane %v3848, %v3852
    %v3856 = vsel %vm337, %v3843, 0
    %3858 = vmatprep.subr.mxu0 0.0
    %3859 = vmatpush1.msra.mxu0 %v3844
    %3860 = vmatprep.subr.mxu0 0.0
    %3861 = vmatpush1.msra.mxu0 %v3845
    %3862 = vmatprep.subr.mxu0 0.0
    %3863 = vmatpush1.msra.mxu0 %v3846
    %3864 = vmatprep.subr.mxu0 0.0
    %3865 = vmatpush1.msra.mxu0 %v3847
    %3866 = vmatprep.subr.mxu0 0.0
    %3867 = vmatpush1.msra.mxu0 0.0
    %3868 = vmatprep.subr.mxu0 0.0
    %3869 = vmatpush1.msra.mxu0 0.0
    %3870 = vmatprep.subr.mxu0 0.0
    %3871 = vmatpush1.msra.mxu0 0.0
    %3872 = vmatprep.subr.mxu0 0.0
    %3873 = vmatpush1.msra.mxu0 0.0
    %3874 = vmatprep.subr.mxu0 0.0
    %3875 = vmatpush1.msra.mxu0 0.0
    %3876 = vmatprep.subr.mxu0 0.0
    %3877 = vmatpush1.msra.mxu0 0.0
    %3878 = vmatprep.subr.mxu0 0.0
    %3879 = vmatpush1.msra.mxu0 0.0
    %3880 = vmatprep.subr.mxu0 0.0
    %3881 = vmatpush1.msra.mxu0 0.0
    %3882 = vmatprep.subr.mxu0 0.0
    %3883 = vmatpush1.msra.mxu0 0.0
    %3884 = vmatprep.subr.mxu0 0.0
    %3885 = vmatpush1.msra.mxu0 0.0
    %3886 = vmatprep.subr.mxu0 0.0
    %3887 = vmatpush1.msra.mxu0 0.0
    %3888 = vmatprep.subr.mxu0 0.0
    %3889 = vmatpush1.msra.mxu0 0.0
    %3890 = vmatprep.subr.mxu0 0.0
    %3891 = vmatpush1.msra.mxu0 0.0
    %3892 = vmatprep.subr.mxu0 0.0
    %3893 = vmatpush1.msra.mxu0 0.0
    %3894 = vmatprep.subr.mxu0 0.0
    %3895 = vmatpush1.msra.mxu0 0.0
    %3896 = vmatprep.subr.mxu0 0.0
    %3897 = vmatpush1.msra.mxu0 0.0
    %3898 = vmatprep.subr.mxu0 0.0
    %3899 = vmatpush1.msra.mxu0 0.0
    %3900 = vmatprep.subr.mxu0 0.0
    %3901 = vmatpush1.msra.mxu0 0.0
    %3902 = vmatprep.subr.mxu0 0.0
    %3903 = vmatpush1.msra.mxu0 0.0
    %3904 = vmatprep.subr.mxu0 0.0
    %3905 = vmatpush1.msra.mxu0 0.0
    %3906 = vmatprep.subr.mxu0 0.0
    %3907 = vmatpush1.msra.mxu0 0.0
    %3908 = vmatprep.subr.mxu0 0.0
    %3909 = vmatpush1.msra.mxu0 0.0
    %3910 = vmatprep.subr.mxu0 0.0
    %3911 = vmatpush1.msra.mxu0 0.0
    %3912 = vmatprep.subr.mxu0 0.0
    %3913 = vmatpush1.msra.mxu0 0.0
    %3914 = vmatprep.subr.mxu0 0.0
    %3915 = vmatpush1.msra.mxu0 0.0
    %3916 = vmatprep.subr.mxu0 0.0
    %3917 = vmatpush1.msra.mxu0 0.0
    %3918 = vmatprep.subr.mxu0 0.0
    %3919 = vmatpush1.msra.mxu0 0.0
    %3920 = vmatprep.subr.mxu0 0.0
    %3921 = vmatpush1.msra.mxu0 0.0
    %3922 = vmatprep.mubr.f32.mxu0 0.0
    %3923 = vmatmul.mubr.f32.gmra.mrb[0].mxu0 %v3856
    %v3924 = vpop.f32.mrb[0].mxu0
    %v3925 = vadd.f32 %v3853, %v3924
    %v3926 = vpop.f32.mrb[0].mxu0
    %3927 = vdwg.mxu0
    %vm3928 = vcmask 91136
    %3929 = vst.msk [vmem:[#allocation22] sm:$0x3] %vm3928, %v3925
    // Predicated region
    $region134: #{ppo_transformer_forward.1} parent=1 // pred_check
      _
    $region135: #{ppo_transformer_forward.1} parent=1 // pred_check_branch
      %3931 = sbr.rel (0) target = $region137
    $region136: #{ppo_transformer_forward.1} parent=1 // pred_region
      %s3933 = ssub.s32 32, 32
      %3934 = vsyncadd [#allocation4], %s3933
      %s3936 = sshll.u32 [#allocation22], 4
      %s3937 = int_to_ptr.vmem [resolvable:$true] %s3936
      %3939 = dma.vmem_to_hbm [thread:$0]  %s3937, 32, %s21, [#allocation4]
    $region137: #{ppo_transformer_forward.1} parent=1 // pred_fallthru
      _
    // Predicated region
    $region138: #{ppo_transformer_forward.1} parent=1 // pred_check
      _
    $region139: #{ppo_transformer_forward.1} parent=1 // pred_check_branch
      %3941 = sbr.rel (0) target = $region141
    $region140: #{ppo_transformer_forward.1} parent=1 // pred_region
      %3942 = dma.done [#allocation4], 32
    $region141: #{ppo_transformer_forward.1} parent=1 // pred_fallthru
      _
    %3943 = vsyncpa [#allocation3], 1
    %3944 = vsyncpa [#allocation6], 1
    %3945 = vsyncpa [#allocation9], 1
    %3946 = vsyncpa [#allocation12], 1
    %3947 = vsyncpa [#allocation15], 1
    %3948 = vsyncpa [#allocation18], 1
    %3949 = vsyncpa [#allocation21], 1
    %3950 = vsyncpa [#allocation4], 1

</llo_original>
